<compile_context>
chip_gen: v6e
topology: v6e:2x2x1
jax: 0.10.0
libtpu: 0.0.40
codegen_flags: <defaults>
</compile_context>

<pallas_src>
import jax
import jax.numpy as jnp
from jax.experimental import pallas as pl
from jax.experimental.pallas import tpu as pltpu

DIM1 = 512
LATENT = 2
X_DIM = 784
Y_DIM = 10
OUT_PAD = 896            # 7 * 128: lane-dense padded decoder output width


def cvae_kernel(x_ref, y_ref, eps_ref,
                w1x_ref, w1y_ref, b1_ref,
                wms_ref, bms_ref,
                wd1z_ref, wd1y_ref, bd1_ref,
                wd2_ref, bd2_ref,
                zmean_ref, zstd_ref, out_ref):
    x = x_ref[...]          # (TB, 784) f32
    y = y_ref[...]          # (TB, 10)  f32
    eps = eps_ref[...]      # (TB, 2)   f32

    # ---------------- encoder ----------------
    # l1: relu(cat([x, y], 1) @ W1 + b1)  ==  relu(x @ W1x + y @ W1y + b1)
    # Big matmul on the MXU with a bf16 weight (f32 accumulate); the K=10
    # y-part is a handful of VPU broadcast-FMAs (an MXU matmul at depth 10
    # would be nearly empty).
    h = jnp.dot(x.astype(jnp.bfloat16), w1x_ref[...],
                preferred_element_type=jnp.float32)          # (TB, 512)
    w1y = w1y_ref[...]                                       # (10, 512) f32
    for r in range(Y_DIM):
        h = h + y[:, r:r + 1] * w1y[r:r + 1, :]
    h = jnp.maximum(h + b1_ref[...], 0.0)                    # (TB, 512)

    # Fused mean/std heads: one (512, 2*LATENT) matmul, slice in-register.
    heads = jnp.dot(h, wms_ref[...], preferred_element_type=jnp.float32)
    heads = jnp.maximum(heads + bms_ref[...], 0.0)           # (TB, 4)
    z_mean = heads[:, :LATENT]
    z_std = heads[:, LATENT:]

    # -------- reparameterization sampling --------
    # TODO(synk): utils_wsy.sampling is not provided; use the standard VAE
    # reparameterization z = mean + exp(std/2) * eps with eps passed in.
    z = z_mean + jnp.exp(0.5 * z_std) * eps                  # (TB, 2)

    # ---------------- decoder ----------------
    # l1: relu(cat([z, y], 1) @ Wd1 + bd1)  ==  relu(z @ Wd1z + y @ Wd1y + bd1)
    # K=2 and K=10 contractions -> pure VPU broadcast-FMA outer products.
    wd1z = wd1z_ref[...]                                     # (2, 512)  f32
    wd1y = wd1y_ref[...]                                     # (10, 512) f32
    h2 = z[:, 0:1] * wd1z[0:1, :]
    for r in range(1, LATENT):
        h2 = h2 + z[:, r:r + 1] * wd1z[r:r + 1, :]
    for r in range(Y_DIM):
        h2 = h2 + y[:, r:r + 1] * wd1y[r:r + 1, :]
    h2 = jnp.maximum(h2 + bd1_ref[...], 0.0)                 # (TB, 512)

    # out: sigmoid(h2 @ Wd2 + bd2), lane-dense 896-wide (zero-padded) output.
    logits = jnp.dot(h2.astype(jnp.bfloat16), wd2_ref[...],
                     preferred_element_type=jnp.float32) + bd2_ref[...]
    # EUP-routed sigmoid: exp + approximate reciprocal (separate VLIW slots).
    out = pl.reciprocal(1.0 + jnp.exp(-logits), approx=True)

    zmean_ref[...] = z_mean
    zstd_ref[...] = z_std
    out_ref[...] = out


def _pick_block_b(batch):
    # Largest MXU-friendly batch tile that evenly divides the batch.
    for tb in (256, 128, 64, 32, 16, 8):
        if batch % tb == 0:
            return tb
    return batch   # block == full batch extent is always legal


def cvae_forward(x, y, eps, params, *, block_b=None):
    B = x.shape[0]
    if block_b is None:
        block_b = _pick_block_b(B)
    block_b = min(block_b, B)
    assert B % block_b == 0, "batch must be divisible by the batch tile"
    grid = (B // block_b,)

    def batch_spec(n):
        return pl.BlockSpec((block_b, n), lambda i: (i, 0))

    def const_spec(arr):
        # Constant block index -> weight is DMA'd once and stays VMEM-resident.
        return pl.BlockSpec(arr.shape, lambda i: (0, 0))

    fn = pl.pallas_call(
        cvae_kernel,
        grid=grid,
        out_shape=(
            jax.ShapeDtypeStruct((B, LATENT), jnp.float32),    # z_mean
            jax.ShapeDtypeStruct((B, LATENT), jnp.float32),    # z_std
            jax.ShapeDtypeStruct((B, OUT_PAD), jnp.float32),   # padded recon
        ),
        in_specs=[batch_spec(X_DIM), batch_spec(Y_DIM), batch_spec(LATENT)]
                 + [const_spec(p) for p in params],
        out_specs=(batch_spec(LATENT), batch_spec(LATENT), batch_spec(OUT_PAD)),
        compiler_params=pltpu.CompilerParams(
            dimension_semantics=("parallel",)),
    )
    z_mean, z_std, out_pad = fn(x, y, eps, *params)
    return z_mean, z_std, out_pad[:, :X_DIM]


def init_params(key):
    """Deterministic init. Weights stored as (in_features, out_features)."""
    def lin(key, fan_in, fan_out):
        kw, kb = jax.random.split(key)
        bound = 1.0 / jnp.sqrt(fan_in)
        w = jax.random.uniform(kw, (fan_in, fan_out), jnp.float32, -bound, bound)
        b = jax.random.uniform(kb, (1, fan_out), jnp.float32, -bound, bound)
        return w, b

    keys = jax.random.split(key, 5)
    # encoder.l1: Linear(794, 512) -> split into x-part (784, bf16) and y-part (10)
    w1, b1 = lin(keys[0], X_DIM + Y_DIM, DIM1)
    w1x = w1[:X_DIM].astype(jnp.bfloat16)
    w1y = w1[X_DIM:]
    # encoder.mean / encoder.std: Linear(512, 2) each, fused into (512, 4)
    wm, bm = lin(keys[1], DIM1, LATENT)
    ws, bs = lin(keys[2], DIM1, LATENT)
    wms = jnp.concatenate([wm, ws], axis=1)
    bms = jnp.concatenate([bm, bs], axis=1)
    # decoder.l1: Linear(12, 512) -> split into z-part (2) and y-part (10)
    wd1, bd1 = lin(keys[3], LATENT + Y_DIM, DIM1)
    wd1z, wd1y = wd1[:LATENT], wd1[LATENT:]
    # decoder.out: Linear(512, 784) -> zero-pad columns to 896, weight in bf16
    wd2, bd2 = lin(keys[4], DIM1, X_DIM)
    wd2 = jnp.pad(wd2, ((0, 0), (0, OUT_PAD - X_DIM))).astype(jnp.bfloat16)
    bd2 = jnp.pad(bd2, ((0, 0), (0, OUT_PAD - X_DIM)))

    return (w1x, w1y, b1, wms, bms, wd1z, wd1y, bd1, wd2, bd2)


def cvae_reference(x, y, eps, params):
    """Pure-JAX reference using the same (bf16-weight) math as the kernel."""
    (w1x, w1y, b1, wms, bms, wd1z, wd1y, bd1, wd2, bd2) = params
    h = jnp.dot(x.astype(jnp.bfloat16), w1x, preferred_element_type=jnp.float32)
    h = h + jnp.dot(y, w1y)
    h = jnp.maximum(h + b1, 0.0)
    heads = jnp.maximum(jnp.dot(h, wms) + bms, 0.0)
    z_mean, z_std = heads[:, :LATENT], heads[:, LATENT:]
    z = z_mean + jnp.exp(0.5 * z_std) * eps
    h2 = jnp.maximum(jnp.dot(z, wd1z) + jnp.dot(y, wd1y) + bd1, 0.0)
    logits = jnp.dot(h2.astype(jnp.bfloat16), wd2,
                     preferred_element_type=jnp.float32) + bd2
    out = jax.nn.sigmoid(logits[:, :X_DIM])
    return z_mean, z_std, out


if __name__ == "__main__":
    B = 16          # small example batch; kernel tiles it as 2 grid steps of 8
    key = jax.random.PRNGKey(0)
    kx, ky, keps, kp = jax.random.split(key, 4)

    x = jax.random.uniform(kx, (B, X_DIM), jnp.float32)          # flattened image
    y_idx = jax.random.randint(ky, (B,), 0, Y_DIM)
    y = jax.nn.one_hot(y_idx, Y_DIM, dtype=jnp.float32)          # condition
    eps = jax.random.normal(keps, (B, LATENT), jnp.float32)      # sampling noise

    params = init_params(kp)

    z_mean, z_std, out = cvae_forward(x, y, eps, params, block_b=8)
    jax.block_until_ready((z_mean, z_std, out))

    assert z_mean.shape == (B, LATENT)
    assert z_std.shape == (B, LATENT)
    assert out.shape == (B, X_DIM)

    # Light numerical sanity check against a pure-JAX reference (same bf16
    # weight math; generous tolerance covers the approx-reciprocal sigmoid).
    zm_ref, zs_ref, out_ref = cvae_reference(x, y, eps, params)
    assert jnp.max(jnp.abs(z_mean - zm_ref)) < 1e-2
    assert jnp.max(jnp.abs(z_std - zs_ref)) < 1e-2
    assert jnp.max(jnp.abs(out - out_ref)) < 1e-2

    print("KERNEL_OK")
</pallas_src>

<mosaic_0001>
module attributes {stable_mosaic.version = 11 : i64} {
  func.func @cvae_kernel(%arg0: i32, %arg1: memref<8x784xf32, #tpu.memory_space<vmem>>, %arg2: memref<8x10xf32, #tpu.memory_space<vmem>>, %arg3: memref<8x2xf32, #tpu.memory_space<vmem>>, %arg4: memref<784x512xbf16, #tpu.memory_space<vmem>>, %arg5: memref<10x512xf32, #tpu.memory_space<vmem>>, %arg6: memref<1x512xf32, #tpu.memory_space<vmem>>, %arg7: memref<512x4xf32, #tpu.memory_space<vmem>>, %arg8: memref<1x4xf32, #tpu.memory_space<vmem>>, %arg9: memref<2x512xf32, #tpu.memory_space<vmem>>, %arg10: memref<10x512xf32, #tpu.memory_space<vmem>>, %arg11: memref<1x512xf32, #tpu.memory_space<vmem>>, %arg12: memref<512x896xbf16, #tpu.memory_space<vmem>>, %arg13: memref<1x896xf32, #tpu.memory_space<vmem>>, %arg14: memref<8x2xf32, #tpu.memory_space<vmem>>, %arg15: memref<8x2xf32, #tpu.memory_space<vmem>>, %arg16: memref<8x896xf32, #tpu.memory_space<vmem>>) attributes {dimension_semantics = [#tpu.dimension_semantics<parallel>], iteration_bounds = array<i64: 2>, scalar_prefetch = 0 : i64, scratch_operands = 0 : i64, tpu.core_type = #tpu.core_type<tc>, window_params = [{transform_indices = @transform_0, window_bounds = array<i64: 8, 784>}, {transform_indices = @transform_1, window_bounds = array<i64: 8, 10>}, {transform_indices = @transform_2, window_bounds = array<i64: 8, 2>}, {pipeline_mode = #tpu.pipeline_mode<synchronous>, transform_indices = @transform_3, window_bounds = array<i64: 784, 512>}, {pipeline_mode = #tpu.pipeline_mode<synchronous>, transform_indices = @transform_4, window_bounds = array<i64: 10, 512>}, {pipeline_mode = #tpu.pipeline_mode<synchronous>, transform_indices = @transform_5, window_bounds = array<i64: 1, 512>}, {pipeline_mode = #tpu.pipeline_mode<synchronous>, transform_indices = @transform_6, window_bounds = array<i64: 512, 4>}, {pipeline_mode = #tpu.pipeline_mode<synchronous>, transform_indices = @transform_7, window_bounds = array<i64: 1, 4>}, {pipeline_mode = #tpu.pipeline_mode<synchronous>, transform_indices = @transform_8, window_bounds = array<i64: 2, 512>}, {pipeline_mode = #tpu.pipeline_mode<synchronous>, transform_indices = @transform_9, window_bounds = array<i64: 10, 512>}, {pipeline_mode = #tpu.pipeline_mode<synchronous>, transform_indices = @transform_10, window_bounds = array<i64: 1, 512>}, {pipeline_mode = #tpu.pipeline_mode<synchronous>, transform_indices = @transform_11, window_bounds = array<i64: 512, 896>}, {pipeline_mode = #tpu.pipeline_mode<synchronous>, transform_indices = @transform_12, window_bounds = array<i64: 1, 896>}, {transform_indices = @transform_13, window_bounds = array<i64: 8, 2>}, {transform_indices = @transform_14, window_bounds = array<i64: 8, 2>}, {transform_indices = @transform_15, window_bounds = array<i64: 8, 896>}]} {
    %c0 = arith.constant 0 : index
    %c0_0 = arith.constant 0 : index
    %0 = vector.load %arg1[%c0, %c0_0] : memref<8x784xf32, #tpu.memory_space<vmem>>, vector<8x784xf32>
    %c0_1 = arith.constant 0 : index
    %c0_2 = arith.constant 0 : index
    %1 = vector.load %arg2[%c0_1, %c0_2] : memref<8x10xf32, #tpu.memory_space<vmem>>, vector<8x10xf32>
    %c0_3 = arith.constant 0 : index
    %c0_4 = arith.constant 0 : index
    %2 = vector.load %arg3[%c0_3, %c0_4] : memref<8x2xf32, #tpu.memory_space<vmem>>, vector<8x2xf32>
    %3 = arith.truncf %0 : vector<8x784xf32> to vector<8x784xbf16>
    %c0_5 = arith.constant 0 : index
    %c0_6 = arith.constant 0 : index
    %4 = vector.load %arg4[%c0_5, %c0_6] : memref<784x512xbf16, #tpu.memory_space<vmem>>, vector<784x512xbf16>
    %cst = arith.constant dense<0.000000e+00> : vector<8x512xf32>
    %5 = tpu.matmul %3, %4, %cst {dimension_numbers = #tpu.dot_dimension_numbers<[1], [0], [0], [1], [0, 0, 1, 1], [], []>} : vector<8x784xbf16>, vector<784x512xbf16>, vector<8x512xf32> -> vector<8x512xf32>
    %c0_7 = arith.constant 0 : index
    %c0_8 = arith.constant 0 : index
    %6 = vector.load %arg5[%c0_7, %c0_8] : memref<10x512xf32, #tpu.memory_space<vmem>>, vector<10x512xf32>
    %7 = vector.extract_strided_slice %1 {offsets = [0, 0], sizes = [8, 1], strides = [1, 1]} : vector<8x10xf32> to vector<8x1xf32>
    %8 = vector.extract_strided_slice %6 {offsets = [0, 0], sizes = [1, 512], strides = [1, 1]} : vector<10x512xf32> to vector<1x512xf32>
    %9 = vector.broadcast %7 : vector<8x1xf32> to vector<8x512xf32>
    %10 = vector.broadcast %8 : vector<1x512xf32> to vector<8x512xf32>
    %11 = arith.mulf %9, %10 : vector<8x512xf32>
    %12 = arith.addf %5, %11 : vector<8x512xf32>
    %13 = vector.extract_strided_slice %1 {offsets = [0, 1], sizes = [8, 1], strides = [1, 1]} : vector<8x10xf32> to vector<8x1xf32>
    %14 = vector.extract_strided_slice %6 {offsets = [1, 0], sizes = [1, 512], strides = [1, 1]} : vector<10x512xf32> to vector<1x512xf32>
    %15 = vector.broadcast %13 : vector<8x1xf32> to vector<8x512xf32>
    %16 = vector.broadcast %14 : vector<1x512xf32> to vector<8x512xf32>
    %17 = arith.mulf %15, %16 : vector<8x512xf32>
    %18 = arith.addf %12, %17 : vector<8x512xf32>
    %19 = vector.extract_strided_slice %1 {offsets = [0, 2], sizes = [8, 1], strides = [1, 1]} : vector<8x10xf32> to vector<8x1xf32>
    %20 = vector.extract_strided_slice %6 {offsets = [2, 0], sizes = [1, 512], strides = [1, 1]} : vector<10x512xf32> to vector<1x512xf32>
    %21 = vector.broadcast %19 : vector<8x1xf32> to vector<8x512xf32>
    %22 = vector.broadcast %20 : vector<1x512xf32> to vector<8x512xf32>
    %23 = arith.mulf %21, %22 : vector<8x512xf32>
    %24 = arith.addf %18, %23 : vector<8x512xf32>
    %25 = vector.extract_strided_slice %1 {offsets = [0, 3], sizes = [8, 1], strides = [1, 1]} : vector<8x10xf32> to vector<8x1xf32>
    %26 = vector.extract_strided_slice %6 {offsets = [3, 0], sizes = [1, 512], strides = [1, 1]} : vector<10x512xf32> to vector<1x512xf32>
    %27 = vector.broadcast %25 : vector<8x1xf32> to vector<8x512xf32>
    %28 = vector.broadcast %26 : vector<1x512xf32> to vector<8x512xf32>
    %29 = arith.mulf %27, %28 : vector<8x512xf32>
    %30 = arith.addf %24, %29 : vector<8x512xf32>
    %31 = vector.extract_strided_slice %1 {offsets = [0, 4], sizes = [8, 1], strides = [1, 1]} : vector<8x10xf32> to vector<8x1xf32>
    %32 = vector.extract_strided_slice %6 {offsets = [4, 0], sizes = [1, 512], strides = [1, 1]} : vector<10x512xf32> to vector<1x512xf32>
    %33 = vector.broadcast %31 : vector<8x1xf32> to vector<8x512xf32>
    %34 = vector.broadcast %32 : vector<1x512xf32> to vector<8x512xf32>
    %35 = arith.mulf %33, %34 : vector<8x512xf32>
    %36 = arith.addf %30, %35 : vector<8x512xf32>
    %37 = vector.extract_strided_slice %1 {offsets = [0, 5], sizes = [8, 1], strides = [1, 1]} : vector<8x10xf32> to vector<8x1xf32>
    %38 = vector.extract_strided_slice %6 {offsets = [5, 0], sizes = [1, 512], strides = [1, 1]} : vector<10x512xf32> to vector<1x512xf32>
    %39 = vector.broadcast %37 : vector<8x1xf32> to vector<8x512xf32>
    %40 = vector.broadcast %38 : vector<1x512xf32> to vector<8x512xf32>
    %41 = arith.mulf %39, %40 : vector<8x512xf32>
    %42 = arith.addf %36, %41 : vector<8x512xf32>
    %43 = vector.extract_strided_slice %1 {offsets = [0, 6], sizes = [8, 1], strides = [1, 1]} : vector<8x10xf32> to vector<8x1xf32>
    %44 = vector.extract_strided_slice %6 {offsets = [6, 0], sizes = [1, 512], strides = [1, 1]} : vector<10x512xf32> to vector<1x512xf32>
    %45 = vector.broadcast %43 : vector<8x1xf32> to vector<8x512xf32>
    %46 = vector.broadcast %44 : vector<1x512xf32> to vector<8x512xf32>
    %47 = arith.mulf %45, %46 : vector<8x512xf32>
    %48 = arith.addf %42, %47 : vector<8x512xf32>
    %49 = vector.extract_strided_slice %1 {offsets = [0, 7], sizes = [8, 1], strides = [1, 1]} : vector<8x10xf32> to vector<8x1xf32>
    %50 = vector.extract_strided_slice %6 {offsets = [7, 0], sizes = [1, 512], strides = [1, 1]} : vector<10x512xf32> to vector<1x512xf32>
    %51 = vector.broadcast %49 : vector<8x1xf32> to vector<8x512xf32>
    %52 = vector.broadcast %50 : vector<1x512xf32> to vector<8x512xf32>
    %53 = arith.mulf %51, %52 : vector<8x512xf32>
    %54 = arith.addf %48, %53 : vector<8x512xf32>
    %55 = vector.extract_strided_slice %1 {offsets = [0, 8], sizes = [8, 1], strides = [1, 1]} : vector<8x10xf32> to vector<8x1xf32>
    %56 = vector.extract_strided_slice %6 {offsets = [8, 0], sizes = [1, 512], strides = [1, 1]} : vector<10x512xf32> to vector<1x512xf32>
    %57 = vector.broadcast %55 : vector<8x1xf32> to vector<8x512xf32>
    %58 = vector.broadcast %56 : vector<1x512xf32> to vector<8x512xf32>
    %59 = arith.mulf %57, %58 : vector<8x512xf32>
    %60 = arith.addf %54, %59 : vector<8x512xf32>
    %61 = vector.extract_strided_slice %1 {offsets = [0, 9], sizes = [8, 1], strides = [1, 1]} : vector<8x10xf32> to vector<8x1xf32>
    %62 = vector.extract_strided_slice %6 {offsets = [9, 0], sizes = [1, 512], strides = [1, 1]} : vector<10x512xf32> to vector<1x512xf32>
    %63 = vector.broadcast %61 : vector<8x1xf32> to vector<8x512xf32>
    %64 = vector.broadcast %62 : vector<1x512xf32> to vector<8x512xf32>
    %65 = arith.mulf %63, %64 : vector<8x512xf32>
    %66 = arith.addf %60, %65 : vector<8x512xf32>
    %c0_9 = arith.constant 0 : index
    %c0_10 = arith.constant 0 : index
    %67 = vector.load %arg6[%c0_9, %c0_10] : memref<1x512xf32, #tpu.memory_space<vmem>>, vector<1x512xf32>
    %68 = vector.broadcast %67 : vector<1x512xf32> to vector<8x512xf32>
    %69 = arith.addf %66, %68 : vector<8x512xf32>
    %cst_11 = arith.constant 0.000000e+00 : f32
    %70 = vector.broadcast %cst_11 : f32 to vector<8x512xf32>
    %71 = arith.maximumf %69, %70 : vector<8x512xf32>
    %c0_12 = arith.constant 0 : index
    %c0_13 = arith.constant 0 : index
    %72 = vector.load %arg7[%c0_12, %c0_13] : memref<512x4xf32, #tpu.memory_space<vmem>>, vector<512x4xf32>
    %cst_14 = arith.constant dense<0.000000e+00> : vector<8x4xf32>
    %73 = tpu.matmul %71, %72, %cst_14 {dimension_numbers = #tpu.dot_dimension_numbers<[1], [0], [0], [1], [0, 0, 1, 1], [], []>} : vector<8x512xf32>, vector<512x4xf32>, vector<8x4xf32> -> vector<8x4xf32>
    %c0_15 = arith.constant 0 : index
    %c0_16 = arith.constant 0 : index
    %74 = vector.load %arg8[%c0_15, %c0_16] : memref<1x4xf32, #tpu.memory_space<vmem>>, vector<1x4xf32>
    %75 = vector.broadcast %74 : vector<1x4xf32> to vector<8x4xf32>
    %76 = arith.addf %73, %75 : vector<8x4xf32>
    %cst_17 = arith.constant 0.000000e+00 : f32
    %77 = vector.broadcast %cst_17 : f32 to vector<8x4xf32>
    %78 = arith.maximumf %76, %77 : vector<8x4xf32>
    %79 = vector.extract_strided_slice %78 {offsets = [0, 0], sizes = [8, 2], strides = [1, 1]} : vector<8x4xf32> to vector<8x2xf32>
    %80 = vector.extract_strided_slice %78 {offsets = [0, 2], sizes = [8, 2], strides = [1, 1]} : vector<8x4xf32> to vector<8x2xf32>
    %cst_18 = arith.constant 5.000000e-01 : f32
    %81 = vector.broadcast %cst_18 : f32 to vector<8x2xf32>
    %82 = arith.mulf %81, %80 : vector<8x2xf32>
    %83 = math.exp %82 : vector<8x2xf32>
    %84 = arith.mulf %83, %2 : vector<8x2xf32>
    %85 = arith.addf %79, %84 : vector<8x2xf32>
    %c0_19 = arith.constant 0 : index
    %c0_20 = arith.constant 0 : index
    %86 = vector.load %arg9[%c0_19, %c0_20] : memref<2x512xf32, #tpu.memory_space<vmem>>, vector<2x512xf32>
    %c0_21 = arith.constant 0 : index
    %c0_22 = arith.constant 0 : index
    %87 = vector.load %arg10[%c0_21, %c0_22] : memref<10x512xf32, #tpu.memory_space<vmem>>, vector<10x512xf32>
    %88 = vector.extract_strided_slice %85 {offsets = [0, 0], sizes = [8, 1], strides = [1, 1]} : vector<8x2xf32> to vector<8x1xf32>
    %89 = vector.extract_strided_slice %86 {offsets = [0, 0], sizes = [1, 512], strides = [1, 1]} : vector<2x512xf32> to vector<1x512xf32>
    %90 = vector.broadcast %88 : vector<8x1xf32> to vector<8x512xf32>
    %91 = vector.broadcast %89 : vector<1x512xf32> to vector<8x512xf32>
    %92 = arith.mulf %90, %91 : vector<8x512xf32>
    %93 = vector.extract_strided_slice %85 {offsets = [0, 1], sizes = [8, 1], strides = [1, 1]} : vector<8x2xf32> to vector<8x1xf32>
    %94 = vector.extract_strided_slice %86 {offsets = [1, 0], sizes = [1, 512], strides = [1, 1]} : vector<2x512xf32> to vector<1x512xf32>
    %95 = vector.broadcast %93 : vector<8x1xf32> to vector<8x512xf32>
    %96 = vector.broadcast %94 : vector<1x512xf32> to vector<8x512xf32>
    %97 = arith.mulf %95, %96 : vector<8x512xf32>
    %98 = arith.addf %92, %97 : vector<8x512xf32>
    %99 = vector.extract_strided_slice %1 {offsets = [0, 0], sizes = [8, 1], strides = [1, 1]} : vector<8x10xf32> to vector<8x1xf32>
    %100 = vector.extract_strided_slice %87 {offsets = [0, 0], sizes = [1, 512], strides = [1, 1]} : vector<10x512xf32> to vector<1x512xf32>
    %101 = vector.broadcast %99 : vector<8x1xf32> to vector<8x512xf32>
    %102 = vector.broadcast %100 : vector<1x512xf32> to vector<8x512xf32>
    %103 = arith.mulf %101, %102 : vector<8x512xf32>
    %104 = arith.addf %98, %103 : vector<8x512xf32>
    %105 = vector.extract_strided_slice %1 {offsets = [0, 1], sizes = [8, 1], strides = [1, 1]} : vector<8x10xf32> to vector<8x1xf32>
    %106 = vector.extract_strided_slice %87 {offsets = [1, 0], sizes = [1, 512], strides = [1, 1]} : vector<10x512xf32> to vector<1x512xf32>
    %107 = vector.broadcast %105 : vector<8x1xf32> to vector<8x512xf32>
    %108 = vector.broadcast %106 : vector<1x512xf32> to vector<8x512xf32>
    %109 = arith.mulf %107, %108 : vector<8x512xf32>
    %110 = arith.addf %104, %109 : vector<8x512xf32>
    %111 = vector.extract_strided_slice %1 {offsets = [0, 2], sizes = [8, 1], strides = [1, 1]} : vector<8x10xf32> to vector<8x1xf32>
    %112 = vector.extract_strided_slice %87 {offsets = [2, 0], sizes = [1, 512], strides = [1, 1]} : vector<10x512xf32> to vector<1x512xf32>
    %113 = vector.broadcast %111 : vector<8x1xf32> to vector<8x512xf32>
    %114 = vector.broadcast %112 : vector<1x512xf32> to vector<8x512xf32>
    %115 = arith.mulf %113, %114 : vector<8x512xf32>
    %116 = arith.addf %110, %115 : vector<8x512xf32>
    %117 = vector.extract_strided_slice %1 {offsets = [0, 3], sizes = [8, 1], strides = [1, 1]} : vector<8x10xf32> to vector<8x1xf32>
    %118 = vector.extract_strided_slice %87 {offsets = [3, 0], sizes = [1, 512], strides = [1, 1]} : vector<10x512xf32> to vector<1x512xf32>
    %119 = vector.broadcast %117 : vector<8x1xf32> to vector<8x512xf32>
    %120 = vector.broadcast %118 : vector<1x512xf32> to vector<8x512xf32>
    %121 = arith.mulf %119, %120 : vector<8x512xf32>
    %122 = arith.addf %116, %121 : vector<8x512xf32>
    %123 = vector.extract_strided_slice %1 {offsets = [0, 4], sizes = [8, 1], strides = [1, 1]} : vector<8x10xf32> to vector<8x1xf32>
    %124 = vector.extract_strided_slice %87 {offsets = [4, 0], sizes = [1, 512], strides = [1, 1]} : vector<10x512xf32> to vector<1x512xf32>
    %125 = vector.broadcast %123 : vector<8x1xf32> to vector<8x512xf32>
    %126 = vector.broadcast %124 : vector<1x512xf32> to vector<8x512xf32>
    %127 = arith.mulf %125, %126 : vector<8x512xf32>
    %128 = arith.addf %122, %127 : vector<8x512xf32>
    %129 = vector.extract_strided_slice %1 {offsets = [0, 5], sizes = [8, 1], strides = [1, 1]} : vector<8x10xf32> to vector<8x1xf32>
    %130 = vector.extract_strided_slice %87 {offsets = [5, 0], sizes = [1, 512], strides = [1, 1]} : vector<10x512xf32> to vector<1x512xf32>
    %131 = vector.broadcast %129 : vector<8x1xf32> to vector<8x512xf32>
    %132 = vector.broadcast %130 : vector<1x512xf32> to vector<8x512xf32>
    %133 = arith.mulf %131, %132 : vector<8x512xf32>
    %134 = arith.addf %128, %133 : vector<8x512xf32>
    %135 = vector.extract_strided_slice %1 {offsets = [0, 6], sizes = [8, 1], strides = [1, 1]} : vector<8x10xf32> to vector<8x1xf32>
    %136 = vector.extract_strided_slice %87 {offsets = [6, 0], sizes = [1, 512], strides = [1, 1]} : vector<10x512xf32> to vector<1x512xf32>
    %137 = vector.broadcast %135 : vector<8x1xf32> to vector<8x512xf32>
    %138 = vector.broadcast %136 : vector<1x512xf32> to vector<8x512xf32>
    %139 = arith.mulf %137, %138 : vector<8x512xf32>
    %140 = arith.addf %134, %139 : vector<8x512xf32>
    %141 = vector.extract_strided_slice %1 {offsets = [0, 7], sizes = [8, 1], strides = [1, 1]} : vector<8x10xf32> to vector<8x1xf32>
    %142 = vector.extract_strided_slice %87 {offsets = [7, 0], sizes = [1, 512], strides = [1, 1]} : vector<10x512xf32> to vector<1x512xf32>
    %143 = vector.broadcast %141 : vector<8x1xf32> to vector<8x512xf32>
    %144 = vector.broadcast %142 : vector<1x512xf32> to vector<8x512xf32>
    %145 = arith.mulf %143, %144 : vector<8x512xf32>
    %146 = arith.addf %140, %145 : vector<8x512xf32>
    %147 = vector.extract_strided_slice %1 {offsets = [0, 8], sizes = [8, 1], strides = [1, 1]} : vector<8x10xf32> to vector<8x1xf32>
    %148 = vector.extract_strided_slice %87 {offsets = [8, 0], sizes = [1, 512], strides = [1, 1]} : vector<10x512xf32> to vector<1x512xf32>
    %149 = vector.broadcast %147 : vector<8x1xf32> to vector<8x512xf32>
    %150 = vector.broadcast %148 : vector<1x512xf32> to vector<8x512xf32>
    %151 = arith.mulf %149, %150 : vector<8x512xf32>
    %152 = arith.addf %146, %151 : vector<8x512xf32>
    %153 = vector.extract_strided_slice %1 {offsets = [0, 9], sizes = [8, 1], strides = [1, 1]} : vector<8x10xf32> to vector<8x1xf32>
    %154 = vector.extract_strided_slice %87 {offsets = [9, 0], sizes = [1, 512], strides = [1, 1]} : vector<10x512xf32> to vector<1x512xf32>
    %155 = vector.broadcast %153 : vector<8x1xf32> to vector<8x512xf32>
    %156 = vector.broadcast %154 : vector<1x512xf32> to vector<8x512xf32>
    %157 = arith.mulf %155, %156 : vector<8x512xf32>
    %158 = arith.addf %152, %157 : vector<8x512xf32>
    %c0_23 = arith.constant 0 : index
    %c0_24 = arith.constant 0 : index
    %159 = vector.load %arg11[%c0_23, %c0_24] : memref<1x512xf32, #tpu.memory_space<vmem>>, vector<1x512xf32>
    %160 = vector.broadcast %159 : vector<1x512xf32> to vector<8x512xf32>
    %161 = arith.addf %158, %160 : vector<8x512xf32>
    %cst_25 = arith.constant 0.000000e+00 : f32
    %162 = vector.broadcast %cst_25 : f32 to vector<8x512xf32>
    %163 = arith.maximumf %161, %162 : vector<8x512xf32>
    %164 = arith.truncf %163 : vector<8x512xf32> to vector<8x512xbf16>
    %c0_26 = arith.constant 0 : index
    %c0_27 = arith.constant 0 : index
    %165 = vector.load %arg12[%c0_26, %c0_27] : memref<512x896xbf16, #tpu.memory_space<vmem>>, vector<512x896xbf16>
    %cst_28 = arith.constant dense<0.000000e+00> : vector<8x896xf32>
    %166 = tpu.matmul %164, %165, %cst_28 {dimension_numbers = #tpu.dot_dimension_numbers<[1], [0], [0], [1], [0, 0, 1, 1], [], []>} : vector<8x512xbf16>, vector<512x896xbf16>, vector<8x896xf32> -> vector<8x896xf32>
    %c0_29 = arith.constant 0 : index
    %c0_30 = arith.constant 0 : index
    %167 = vector.load %arg13[%c0_29, %c0_30] : memref<1x896xf32, #tpu.memory_space<vmem>>, vector<1x896xf32>
    %168 = vector.broadcast %167 : vector<1x896xf32> to vector<8x896xf32>
    %169 = arith.addf %166, %168 : vector<8x896xf32>
    %cst_31 = arith.constant 0.000000e+00 : f32
    %170 = vector.broadcast %cst_31 : f32 to vector<8x896xf32>
    %171 = arith.subf %170, %169 : vector<8x896xf32>
    %172 = math.exp %171 : vector<8x896xf32>
    %cst_32 = arith.constant 1.000000e+00 : f32
    %173 = vector.broadcast %cst_32 : f32 to vector<8x896xf32>
    %174 = arith.addf %173, %172 : vector<8x896xf32>
    %175 = tpu.reciprocal %174 {approx = true} : vector<8x896xf32> -> vector<8x896xf32>
    %c0_33 = arith.constant 0 : index
    %c0_34 = arith.constant 0 : index
    %176 = vector.load %arg14[%c0_33, %c0_34] : memref<8x2xf32, #tpu.memory_space<vmem>>, vector<8x2xf32>
    tpu.vector_store %arg14[%c0_33, %c0_34], %79 {strides = array<i32>} : memref<8x2xf32, #tpu.memory_space<vmem>>, vector<8x2xf32>,
    %c0_35 = arith.constant 0 : index
    %c0_36 = arith.constant 0 : index
    %177 = vector.load %arg15[%c0_35, %c0_36] : memref<8x2xf32, #tpu.memory_space<vmem>>, vector<8x2xf32>
    tpu.vector_store %arg15[%c0_35, %c0_36], %80 {strides = array<i32>} : memref<8x2xf32, #tpu.memory_space<vmem>>, vector<8x2xf32>,
    %c0_37 = arith.constant 0 : index
    %c0_38 = arith.constant 0 : index
    %178 = vector.load %arg16[%c0_37, %c0_38] : memref<8x896xf32, #tpu.memory_space<vmem>>, vector<8x896xf32>
    tpu.vector_store %arg16[%c0_37, %c0_38], %175 {strides = array<i32>} : memref<8x896xf32, #tpu.memory_space<vmem>>, vector<8x896xf32>,
    return
  }
  func.func @transform_0(%arg0: i32) -> (i32, i32) {
    %c0_i32 = arith.constant 0 : i32
    %c0_i32_0 = arith.constant 0 : i32
    return %arg0, %c0_i32 : i32, i32
  }
  func.func @transform_1(%arg0: i32) -> (i32, i32) {
    %c0_i32 = arith.constant 0 : i32
    %c0_i32_0 = arith.constant 0 : i32
    return %arg0, %c0_i32 : i32, i32
  }
  func.func @transform_2(%arg0: i32) -> (i32, i32) {
    %c0_i32 = arith.constant 0 : i32
    %c0_i32_0 = arith.constant 0 : i32
    return %arg0, %c0_i32 : i32, i32
  }
  func.func @transform_3(%arg0: i32) -> (i32, i32) {
    %c0_i32 = arith.constant 0 : i32
    %c0_i32_0 = arith.constant 0 : i32
    %c0_i32_1 = arith.constant 0 : i32
    return %c0_i32, %c0_i32_0 : i32, i32
  }
  func.func @transform_4(%arg0: i32) -> (i32, i32) {
    %c0_i32 = arith.constant 0 : i32
    %c0_i32_0 = arith.constant 0 : i32
    %c0_i32_1 = arith.constant 0 : i32
    return %c0_i32, %c0_i32_0 : i32, i32
  }
  func.func @transform_5(%arg0: i32) -> (i32, i32) {
    %c0_i32 = arith.constant 0 : i32
    %c0_i32_0 = arith.constant 0 : i32
    %c0_i32_1 = arith.constant 0 : i32
    return %c0_i32, %c0_i32_0 : i32, i32
  }
  func.func @transform_6(%arg0: i32) -> (i32, i32) {
    %c0_i32 = arith.constant 0 : i32
    %c0_i32_0 = arith.constant 0 : i32
    %c0_i32_1 = arith.constant 0 : i32
    return %c0_i32, %c0_i32_0 : i32, i32
  }
  func.func @transform_7(%arg0: i32) -> (i32, i32) {
    %c0_i32 = arith.constant 0 : i32
    %c0_i32_0 = arith.constant 0 : i32
    %c0_i32_1 = arith.constant 0 : i32
    return %c0_i32, %c0_i32_0 : i32, i32
  }
  func.func @transform_8(%arg0: i32) -> (i32, i32) {
    %c0_i32 = arith.constant 0 : i32
    %c0_i32_0 = arith.constant 0 : i32
    %c0_i32_1 = arith.constant 0 : i32
    return %c0_i32, %c0_i32_0 : i32, i32
  }
  func.func @transform_9(%arg0: i32) -> (i32, i32) {
    %c0_i32 = arith.constant 0 : i32
    %c0_i32_0 = arith.constant 0 : i32
    %c0_i32_1 = arith.constant 0 : i32
    return %c0_i32, %c0_i32_0 : i32, i32
  }
  func.func @transform_10(%arg0: i32) -> (i32, i32) {
    %c0_i32 = arith.constant 0 : i32
    %c0_i32_0 = arith.constant 0 : i32
    %c0_i32_1 = arith.constant 0 : i32
    return %c0_i32, %c0_i32_0 : i32, i32
  }
  func.func @transform_11(%arg0: i32) -> (i32, i32) {
    %c0_i32 = arith.constant 0 : i32
    %c0_i32_0 = arith.constant 0 : i32
    %c0_i32_1 = arith.constant 0 : i32
    return %c0_i32, %c0_i32_0 : i32, i32
  }
  func.func @transform_12(%arg0: i32) -> (i32, i32) {
    %c0_i32 = arith.constant 0 : i32
    %c0_i32_0 = arith.constant 0 : i32
    %c0_i32_1 = arith.constant 0 : i32
    return %c0_i32, %c0_i32_0 : i32, i32
  }
  func.func @transform_13(%arg0: i32) -> (i32, i32) {
    %c0_i32 = arith.constant 0 : i32
    %c0_i32_0 = arith.constant 0 : i32
    return %arg0, %c0_i32 : i32, i32
  }
  func.func @transform_14(%arg0: i32) -> (i32, i32) {
    %c0_i32 = arith.constant 0 : i32
    %c0_i32_0 = arith.constant 0 : i32
    return %arg0, %c0_i32 : i32, i32
  }
  func.func @transform_15(%arg0: i32) -> (i32, i32) {
    %c0_i32 = arith.constant 0 : i32
    %c0_i32_0 = arith.constant 0 : i32
    return %arg0, %c0_i32 : i32, i32
  }
}

</mosaic_0001>

<llo_original>
// kernel: tpu_custom_call.1
$region0: #{tpu_custom_call.1}
  #allocation0 [shape = 'u32[]', space=smem, size = 0x4, offset = 0x4, fixed_abs, tag = 'smem constant byte address 0x4 - core index']
  #allocation1 [shape = 'u32[144,128]{1,0:T(1,128)}', space=vmem, size = 0x12000, scoped, tag = 'internal scratch']
  %s0 = inlined_call_operand.vmem [shape: f32[16,784], index: 0, kind: input, shape index: {}]
  %s1 = inlined_call_operand.vmem [shape: f32[16,10], index: 1, kind: input, shape index: {}]
  %s2 = inlined_call_operand.vmem [shape: f32[16,2], index: 2, kind: input, shape index: {}]
  %s3 = inlined_call_operand.hbm [shape: bf16[784,512], index: 3, kind: input, shape index: {}]
  %s4 = inlined_call_operand.vmem [shape: f32[10,512], index: 4, kind: input, shape index: {}]
  %s5 = inlined_call_operand.vmem [shape: f32[1,512], index: 5, kind: input, shape index: {}]
  %s6 = inlined_call_operand.vmem [shape: f32[512,4], index: 6, kind: input, shape index: {}]
  %s7 = inlined_call_operand.vmem [shape: f32[1,4], index: 7, kind: input, shape index: {}]
  %s8 = inlined_call_operand.vmem [shape: f32[2,512], index: 8, kind: input, shape index: {}]
  %s9 = inlined_call_operand.vmem [shape: f32[10,512], index: 9, kind: input, shape index: {}]
  %s10 = inlined_call_operand.vmem [shape: f32[1,512], index: 10, kind: input, shape index: {}]
  %s11 = inlined_call_operand.hbm [shape: bf16[512,896], index: 11, kind: input, shape index: {}]
  %s12 = inlined_call_operand.vmem [shape: f32[1,896], index: 12, kind: input, shape index: {}]
  %s13 = inlined_call_operand.vmem [shape: f32[16,2], index: 13, kind: output, shape index: {0}]
  %s14 = inlined_call_operand.vmem [shape: f32[16,2], index: 14, kind: output, shape index: {1}]
  %s15 = inlined_call_operand.hbm [shape: f32[16,896], index: 15, kind: output, shape index: {2}]
  %16 = xla_tuple %s13, %s14, %s15
  %s17 = sld [smem:[#allocation0]]
  $region109: #{tpu_custom_call.1} parent=0
    _
  %s19 = ssub.s32 1, %s17
  %s20 = scalar_select 0, %s19, %s17
  $region1: #{tpu_custom_call.1} parent=0
    #allocation2 [shape = 'u8[802816]{0}', space=vmem, size = 0xc4000, scoped, tag = 'input window, operand 3, single buffered']
    #allocation3 [shape = 's32[2]{0}', space=sflag, size = 0x8, scoped, tag = 'scoped memory for tpu_custom_call.1']
    #allocation4 [shape = 's32[2]{0}', space=sflag, size = 0x8, scoped, tag = 'scoped memory for tpu_custom_call.1']
    #allocation5 [shape = 'u8[917504]{0}', space=vmem, size = 0xe0000, scoped, tag = 'input window, operand 11, single buffered']
    #allocation6 [shape = 's32[1]{0}', space=sflag, size = 0x4, scoped, tag = 'scoped memory for tpu_custom_call.1']
    #allocation7 [shape = 'u8[57344]{0}', space=vmem, size = 0xe000, scoped, tag = 'output window, operand 2']
    %21 = vsyncpa [#allocation3], 0
    %22 = vsyncpa [#allocation6], 0
    %23 = vsyncpa [#allocation4], 0
    %s24 = scalar_lea.sflag [#allocation4], 1
    %25 = vsyncpa %s24, 0
    loop: start=0, step=1, limit=4
    $region2: #{tpu_custom_call.1} parent=1 // loop_pre_header
      _
    $region3: #{tpu_custom_call.1} parent=1 // loop_header
      %s27 = sphi 0, %s31
      %p28 = scmp.ge.s32.totalorder %s27, 4
      %s37 = sphi 0, %s39
      %s40 = sphi 0, %s37
      %s41 = sphi 0, %s40
      %s57 = sphi 0, %s41
      %s63 = sphi 0, %s65
      %s66 = sphi 0, %s63
      %s67 = sphi 0, %s66
      %s83 = sphi 0, %s67
      %s89 = sphi 0, %s91
      %s92 = sphi 0, %s89
      %s93 = sphi 0, %s92
      %s109 = sphi 0, %s93
      %s113 = sphi 0, %s113
      %s115 = sphi 0, %s113
      %s116 = sphi 0, %s115
      %s130 = sphi 0, %s116
      %s134 = sphi 0, %s134
      %s136 = sphi 0, %s134
      %s137 = sphi 0, %s136
      %s151 = sphi 0, %s137
      %s155 = sphi 0, %s155
      %s157 = sphi 0, %s155
      %s158 = sphi 0, %s157
      %s172 = sphi 0, %s158
      %s176 = sphi 0, %s176
      %s178 = sphi 0, %s176
      %s179 = sphi 0, %s178
      %s193 = sphi 0, %s179
      %s197 = sphi 0, %s197
      %s199 = sphi 0, %s197
      %s200 = sphi 0, %s199
      %s214 = sphi 0, %s200
      %s218 = sphi 0, %s218
      %s220 = sphi 0, %s218
      %s221 = sphi 0, %s220
      %s235 = sphi 0, %s221
      %s239 = sphi 0, %s239
      %s241 = sphi 0, %s239
      %s242 = sphi 0, %s241
      %s256 = sphi 0, %s242
      %s260 = sphi 0, %s260
      %s262 = sphi 0, %s260
      %s263 = sphi 0, %s262
      %s277 = sphi 0, %s263
      %s281 = sphi 0, %s281
      %s283 = sphi 0, %s281
      %s284 = sphi 0, %s283
      %s298 = sphi 0, %s284
      %s302 = sphi 0, %s302
      %s304 = sphi 0, %s302
      %s305 = sphi 0, %s304
      %s319 = sphi 0, %s305
      %s325 = sphi 0, %s327
      %s328 = sphi 0, %s325
      %s329 = sphi 0, %s328
      %s345 = sphi 0, %s329
      %s351 = sphi 0, %s353
      %s354 = sphi 0, %s351
      %s355 = sphi 0, %s354
      %s371 = sphi 0, %s355
      %s377 = sphi 0, %s379
      %s380 = sphi 0, %s377
      %s381 = sphi 0, %s380
      %s397 = sphi 0, %s381
    $region4: #{tpu_custom_call.1} parent=1 // loop_header_branch
      %30 = sbr.rel (%p28) target = $region8
    $region5: #{tpu_custom_call.1} parent=1 // loop_body
      %s32 = ssub.s32 %s27, 1
      %s33 = ssub.s32 %s27, 2
      %s34 = sadd.s32 %s27, 1
      %s35 = ssub.s32 %s27, %s34
      %p36 = scmp.eq.s32.totalorder %s35, 0
      %s38 = sadd.s32 %s37, 1
      %s39 = scalar_select %p36, %s37, %s38
      %p42 = pneg %p36
      %p43 = scmp.eq.s32.totalorder %s27, 1
      %p44 = por %p42, %p43
      %p45 = scmp.ne.s32.totalorder %s37, %s40
      %p46 = scmp.eq.s32.totalorder %s27, 0
      %p47 = por %p45, %p46
      %p48 = scmp.ne.s32.totalorder %s37, %s40
      %p49 = scmp.eq.s32.totalorder %s32, 1
      %p50 = por %p48, %p49
      %p51 = scmp.ne.s32.totalorder %s40, %s41
      %p52 = scmp.eq.s32.totalorder %s32, 0
      %p53 = por %p51, %p52
      %p54 = scmp.ne.s32.totalorder %s40, %s41
      %p55 = scmp.eq.s32.totalorder %s33, 1
      %p56 = por %p54, %p55
      %p58 = scmp.ne.s32.totalorder %s41, %s57
      %p59 = scmp.eq.s32.totalorder %s33, 0
      %p60 = por %p58, %p59
      %s61 = ssub.s32 %s27, %s34
      %p62 = scmp.eq.s32.totalorder %s61, 0
      %s64 = sadd.s32 %s63, 1
      %s65 = scalar_select %p62, %s63, %s64
      %p68 = pneg %p62
      %p69 = scmp.eq.s32.totalorder %s27, 1
      %p70 = por %p68, %p69
      %p71 = scmp.ne.s32.totalorder %s63, %s66
      %p72 = scmp.eq.s32.totalorder %s27, 0
      %p73 = por %p71, %p72
      %p74 = scmp.ne.s32.totalorder %s63, %s66
      %p75 = scmp.eq.s32.totalorder %s32, 1
      %p76 = por %p74, %p75
      %p77 = scmp.ne.s32.totalorder %s66, %s67
      %p78 = scmp.eq.s32.totalorder %s32, 0
      %p79 = por %p77, %p78
      %p80 = scmp.ne.s32.totalorder %s66, %s67
      %p81 = scmp.eq.s32.totalorder %s33, 1
      %p82 = por %p80, %p81
      %p84 = scmp.ne.s32.totalorder %s67, %s83
      %p85 = scmp.eq.s32.totalorder %s33, 0
      %p86 = por %p84, %p85
      %s87 = ssub.s32 %s27, %s34
      %p88 = scmp.eq.s32.totalorder %s87, 0
      %s90 = sadd.s32 %s89, 1
      %s91 = scalar_select %p88, %s89, %s90
      %p94 = pneg %p88
      %p95 = scmp.eq.s32.totalorder %s27, 1
      %p96 = por %p94, %p95
      %p97 = scmp.ne.s32.totalorder %s89, %s92
      %p98 = scmp.eq.s32.totalorder %s27, 0
      %p99 = por %p97, %p98
      %p100 = scmp.ne.s32.totalorder %s89, %s92
      %p101 = scmp.eq.s32.totalorder %s32, 1
      %p102 = por %p100, %p101
      %p103 = scmp.ne.s32.totalorder %s92, %s93
      %p104 = scmp.eq.s32.totalorder %s32, 0
      %p105 = por %p103, %p104
      %p106 = scmp.ne.s32.totalorder %s92, %s93
      %p107 = scmp.eq.s32.totalorder %s33, 1
      %p108 = por %p106, %p107
      %p110 = scmp.ne.s32.totalorder %s93, %s109
      %p111 = scmp.eq.s32.totalorder %s33, 0
      %p112 = por %p110, %p111
      %s114 = sadd.s32 %s113, 1
      %p117 = scmp.eq.s32.totalorder %s27, 1
      %p118 = scmp.ne.s32.totalorder %s113, %s115
      %p119 = scmp.eq.s32.totalorder %s27, 0
      %p120 = por %p118, %p119
      %p121 = scmp.ne.s32.totalorder %s113, %s115
      %p122 = scmp.eq.s32.totalorder %s32, 1
      %p123 = por %p121, %p122
      %p124 = scmp.ne.s32.totalorder %s115, %s116
      %p125 = scmp.eq.s32.totalorder %s32, 0
      %p126 = por %p124, %p125
      %p127 = scmp.ne.s32.totalorder %s115, %s116
      %p128 = scmp.eq.s32.totalorder %s33, 1
      %p129 = por %p127, %p128
      %p131 = scmp.ne.s32.totalorder %s116, %s130
      %p132 = scmp.eq.s32.totalorder %s33, 0
      %p133 = por %p131, %p132
      %s135 = sadd.s32 %s134, 1
      %p138 = scmp.eq.s32.totalorder %s27, 1
      %p139 = scmp.ne.s32.totalorder %s134, %s136
      %p140 = scmp.eq.s32.totalorder %s27, 0
      %p141 = por %p139, %p140
      %p142 = scmp.ne.s32.totalorder %s134, %s136
      %p143 = scmp.eq.s32.totalorder %s32, 1
      %p144 = por %p142, %p143
      %p145 = scmp.ne.s32.totalorder %s136, %s137
      %p146 = scmp.eq.s32.totalorder %s32, 0
      %p147 = por %p145, %p146
      %p148 = scmp.ne.s32.totalorder %s136, %s137
      %p149 = scmp.eq.s32.totalorder %s33, 1
      %p150 = por %p148, %p149
      %p152 = scmp.ne.s32.totalorder %s137, %s151
      %p153 = scmp.eq.s32.totalorder %s33, 0
      %p154 = por %p152, %p153
      %s156 = sadd.s32 %s155, 1
      %p159 = scmp.eq.s32.totalorder %s27, 1
      %p160 = scmp.ne.s32.totalorder %s155, %s157
      %p161 = scmp.eq.s32.totalorder %s27, 0
      %p162 = por %p160, %p161
      %p163 = scmp.ne.s32.totalorder %s155, %s157
      %p164 = scmp.eq.s32.totalorder %s32, 1
      %p165 = por %p163, %p164
      %p166 = scmp.ne.s32.totalorder %s157, %s158
      %p167 = scmp.eq.s32.totalorder %s32, 0
      %p168 = por %p166, %p167
      %p169 = scmp.ne.s32.totalorder %s157, %s158
      %p170 = scmp.eq.s32.totalorder %s33, 1
      %p171 = por %p169, %p170
      %p173 = scmp.ne.s32.totalorder %s158, %s172
      %p174 = scmp.eq.s32.totalorder %s33, 0
      %p175 = por %p173, %p174
      %s177 = sadd.s32 %s176, 1
      %p180 = scmp.eq.s32.totalorder %s27, 1
      %p181 = scmp.ne.s32.totalorder %s176, %s178
      %p182 = scmp.eq.s32.totalorder %s27, 0
      %p183 = por %p181, %p182
      %p184 = scmp.ne.s32.totalorder %s176, %s178
      %p185 = scmp.eq.s32.totalorder %s32, 1
      %p186 = por %p184, %p185
      %p187 = scmp.ne.s32.totalorder %s178, %s179
      %p188 = scmp.eq.s32.totalorder %s32, 0
      %p189 = por %p187, %p188
      %p190 = scmp.ne.s32.totalorder %s178, %s179
      %p191 = scmp.eq.s32.totalorder %s33, 1
      %p192 = por %p190, %p191
      %p194 = scmp.ne.s32.totalorder %s179, %s193
      %p195 = scmp.eq.s32.totalorder %s33, 0
      %p196 = por %p194, %p195
      %s198 = sadd.s32 %s197, 1
      %p201 = scmp.eq.s32.totalorder %s27, 1
      %p202 = scmp.ne.s32.totalorder %s197, %s199
      %p203 = scmp.eq.s32.totalorder %s27, 0
      %p204 = por %p202, %p203
      %p205 = scmp.ne.s32.totalorder %s197, %s199
      %p206 = scmp.eq.s32.totalorder %s32, 1
      %p207 = por %p205, %p206
      %p208 = scmp.ne.s32.totalorder %s199, %s200
      %p209 = scmp.eq.s32.totalorder %s32, 0
      %p210 = por %p208, %p209
      %p211 = scmp.ne.s32.totalorder %s199, %s200
      %p212 = scmp.eq.s32.totalorder %s33, 1
      %p213 = por %p211, %p212
      %p215 = scmp.ne.s32.totalorder %s200, %s214
      %p216 = scmp.eq.s32.totalorder %s33, 0
      %p217 = por %p215, %p216
      %s219 = sadd.s32 %s218, 1
      %p222 = scmp.eq.s32.totalorder %s27, 1
      %p223 = scmp.ne.s32.totalorder %s218, %s220
      %p224 = scmp.eq.s32.totalorder %s27, 0
      %p225 = por %p223, %p224
      %p226 = scmp.ne.s32.totalorder %s218, %s220
      %p227 = scmp.eq.s32.totalorder %s32, 1
      %p228 = por %p226, %p227
      %p229 = scmp.ne.s32.totalorder %s220, %s221
      %p230 = scmp.eq.s32.totalorder %s32, 0
      %p231 = por %p229, %p230
      %p232 = scmp.ne.s32.totalorder %s220, %s221
      %p233 = scmp.eq.s32.totalorder %s33, 1
      %p234 = por %p232, %p233
      %p236 = scmp.ne.s32.totalorder %s221, %s235
      %p237 = scmp.eq.s32.totalorder %s33, 0
      %p238 = por %p236, %p237
      %s240 = sadd.s32 %s239, 1
      %p243 = scmp.eq.s32.totalorder %s27, 1
      %p244 = scmp.ne.s32.totalorder %s239, %s241
      %p245 = scmp.eq.s32.totalorder %s27, 0
      %p246 = por %p244, %p245
      %p247 = scmp.ne.s32.totalorder %s239, %s241
      %p248 = scmp.eq.s32.totalorder %s32, 1
      %p249 = por %p247, %p248
      %p250 = scmp.ne.s32.totalorder %s241, %s242
      %p251 = scmp.eq.s32.totalorder %s32, 0
      %p252 = por %p250, %p251
      %p253 = scmp.ne.s32.totalorder %s241, %s242
      %p254 = scmp.eq.s32.totalorder %s33, 1
      %p255 = por %p253, %p254
      %p257 = scmp.ne.s32.totalorder %s242, %s256
      %p258 = scmp.eq.s32.totalorder %s33, 0
      %p259 = por %p257, %p258
      %s261 = sadd.s32 %s260, 1
      %p264 = scmp.eq.s32.totalorder %s27, 1
      %p265 = scmp.ne.s32.totalorder %s260, %s262
      %p266 = scmp.eq.s32.totalorder %s27, 0
      %p267 = por %p265, %p266
      %p268 = scmp.ne.s32.totalorder %s260, %s262
      %p269 = scmp.eq.s32.totalorder %s32, 1
      %p270 = por %p268, %p269
      %p271 = scmp.ne.s32.totalorder %s262, %s263
      %p272 = scmp.eq.s32.totalorder %s32, 0
      %p273 = por %p271, %p272
      %p274 = scmp.ne.s32.totalorder %s262, %s263
      %p275 = scmp.eq.s32.totalorder %s33, 1
      %p276 = por %p274, %p275
      %p278 = scmp.ne.s32.totalorder %s263, %s277
      %p279 = scmp.eq.s32.totalorder %s33, 0
      %p280 = por %p278, %p279
      %s282 = sadd.s32 %s281, 1
      %p285 = scmp.eq.s32.totalorder %s27, 1
      %p286 = scmp.ne.s32.totalorder %s281, %s283
      %p287 = scmp.eq.s32.totalorder %s27, 0
      %p288 = por %p286, %p287
      %p289 = scmp.ne.s32.totalorder %s281, %s283
      %p290 = scmp.eq.s32.totalorder %s32, 1
      %p291 = por %p289, %p290
      %p292 = scmp.ne.s32.totalorder %s283, %s284
      %p293 = scmp.eq.s32.totalorder %s32, 0
      %p294 = por %p292, %p293
      %p295 = scmp.ne.s32.totalorder %s283, %s284
      %p296 = scmp.eq.s32.totalorder %s33, 1
      %p297 = por %p295, %p296
      %p299 = scmp.ne.s32.totalorder %s284, %s298
      %p300 = scmp.eq.s32.totalorder %s33, 0
      %p301 = por %p299, %p300
      %s303 = sadd.s32 %s302, 1
      %p306 = scmp.eq.s32.totalorder %s27, 1
      %p307 = scmp.ne.s32.totalorder %s302, %s304
      %p308 = scmp.eq.s32.totalorder %s27, 0
      %p309 = por %p307, %p308
      %p310 = scmp.ne.s32.totalorder %s302, %s304
      %p311 = scmp.eq.s32.totalorder %s32, 1
      %p312 = por %p310, %p311
      %p313 = scmp.ne.s32.totalorder %s304, %s305
      %p314 = scmp.eq.s32.totalorder %s32, 0
      %p315 = por %p313, %p314
      %p316 = scmp.ne.s32.totalorder %s304, %s305
      %p317 = scmp.eq.s32.totalorder %s33, 1
      %p318 = por %p316, %p317
      %p320 = scmp.ne.s32.totalorder %s305, %s319
      %p321 = scmp.eq.s32.totalorder %s33, 0
      %p322 = por %p320, %p321
      %s323 = ssub.s32 %s27, %s34
      %p324 = scmp.eq.s32.totalorder %s323, 0
      %s326 = sadd.s32 %s325, 1
      %s327 = scalar_select %p324, %s325, %s326
      %p330 = pneg %p324
      %p331 = scmp.eq.s32.totalorder %s27, 1
      %p332 = por %p330, %p331
      %p333 = scmp.ne.s32.totalorder %s325, %s328
      %p334 = scmp.eq.s32.totalorder %s27, 0
      %p335 = por %p333, %p334
      %p336 = scmp.ne.s32.totalorder %s325, %s328
      %p337 = scmp.eq.s32.totalorder %s32, 1
      %p338 = por %p336, %p337
      %p339 = scmp.ne.s32.totalorder %s328, %s329
      %p340 = scmp.eq.s32.totalorder %s32, 0
      %p341 = por %p339, %p340
      %p342 = scmp.ne.s32.totalorder %s328, %s329
      %p343 = scmp.eq.s32.totalorder %s33, 1
      %p344 = por %p342, %p343
      %p346 = scmp.ne.s32.totalorder %s329, %s345
      %p347 = scmp.eq.s32.totalorder %s33, 0
      %p348 = por %p346, %p347
      %s349 = ssub.s32 %s27, %s34
      %p350 = scmp.eq.s32.totalorder %s349, 0
      %s352 = sadd.s32 %s351, 1
      %s353 = scalar_select %p350, %s351, %s352
      %p356 = pneg %p350
      %p357 = scmp.eq.s32.totalorder %s27, 1
      %p358 = por %p356, %p357
      %p359 = scmp.ne.s32.totalorder %s351, %s354
      %p360 = scmp.eq.s32.totalorder %s27, 0
      %p361 = por %p359, %p360
      %p362 = scmp.ne.s32.totalorder %s351, %s354
      %p363 = scmp.eq.s32.totalorder %s32, 1
      %p364 = por %p362, %p363
      %p365 = scmp.ne.s32.totalorder %s354, %s355
      %p366 = scmp.eq.s32.totalorder %s32, 0
      %p367 = por %p365, %p366
      %p368 = scmp.ne.s32.totalorder %s354, %s355
      %p369 = scmp.eq.s32.totalorder %s33, 1
      %p370 = por %p368, %p369
      %p372 = scmp.ne.s32.totalorder %s355, %s371
      %p373 = scmp.eq.s32.totalorder %s33, 0
      %p374 = por %p372, %p373
      %s375 = ssub.s32 %s27, %s34
      %p376 = scmp.eq.s32.totalorder %s375, 0
      %s378 = sadd.s32 %s377, 1
      %s379 = scalar_select %p376, %s377, %s378
      %p382 = pneg %p376
      %p383 = scmp.eq.s32.totalorder %s27, 1
      %p384 = por %p382, %p383
      %p385 = scmp.ne.s32.totalorder %s377, %s380
      %p386 = scmp.eq.s32.totalorder %s27, 0
      %p387 = por %p385, %p386
      %p388 = scmp.ne.s32.totalorder %s377, %s380
      %p389 = scmp.eq.s32.totalorder %s32, 1
      %p390 = por %p388, %p389
      %p391 = scmp.ne.s32.totalorder %s380, %s381
      %p392 = scmp.eq.s32.totalorder %s32, 0
      %p393 = por %p391, %p392
      %p394 = scmp.ne.s32.totalorder %s380, %s381
      %p395 = scmp.eq.s32.totalorder %s33, 1
      %p396 = por %p394, %p395
      %p398 = scmp.ne.s32.totalorder %s381, %s397
      %p399 = scmp.eq.s32.totalorder %s33, 0
      %p400 = por %p398, %p399
      %p401 = scmp.le.s32.totalorder 1, %s27
      %p402 = scmp.lt.s32.totalorder %s27, 3
      %p403 = pnand %p401, %p402
      %p404 = pneg %p403
      // Predicated region
      $region9: #{tpu_custom_call.1} parent=5 // pred_check
        _
      $region10: #{tpu_custom_call.1} parent=5 // pred_check_branch
        %406 = sbr.rel (%p403) target = $region12
      $region11: #{tpu_custom_call.1} parent=5 // pred_region
        %s407 = ssub.s32 %s27, 1
        // Predicated region
        $region13: #{tpu_custom_call.1} parent=11 // pred_check
          %p408 = pneg %p126
        $region14: #{tpu_custom_call.1} parent=11 // pred_check_branch
          %410 = sbr.rel (%p408) target = $region16
        $region15: #{tpu_custom_call.1} parent=11 // pred_region
          %s412 = ssub.s32 25088, 25088
          %413 = vsyncadd [#allocation3], %s412
          %s414 = sshll.u32 [#allocation2], 4
          %s415 = int_to_ptr.vmem [resolvable:$true] %s414
          %420 = dma.hbm_to_vmem [thread:$0]  %s3, 25088, %s415, [#allocation3], 256, 256, 16
        $region16: #{tpu_custom_call.1} parent=11 // pred_fallthru
          _
        // Predicated region
        $region17: #{tpu_custom_call.1} parent=11 // pred_check
          %p421 = pneg %p147
        $region18: #{tpu_custom_call.1} parent=11 // pred_check_branch
          %423 = sbr.rel (%p421) target = $region20
        $region19: #{tpu_custom_call.1} parent=11 // pred_region
          _
        $region20: #{tpu_custom_call.1} parent=11 // pred_fallthru
          _
        // Predicated region
        $region21: #{tpu_custom_call.1} parent=11 // pred_check
          %p424 = pneg %p168
        $region22: #{tpu_custom_call.1} parent=11 // pred_check_branch
          %426 = sbr.rel (%p424) target = $region24
        $region23: #{tpu_custom_call.1} parent=11 // pred_region
          _
        $region24: #{tpu_custom_call.1} parent=11 // pred_fallthru
          _
        // Predicated region
        $region25: #{tpu_custom_call.1} parent=11 // pred_check
          %p427 = pneg %p189
        $region26: #{tpu_custom_call.1} parent=11 // pred_check_branch
          %429 = sbr.rel (%p427) target = $region28
        $region27: #{tpu_custom_call.1} parent=11 // pred_region
          _
        $region28: #{tpu_custom_call.1} parent=11 // pred_fallthru
          _
        // Predicated region
        $region29: #{tpu_custom_call.1} parent=11 // pred_check
          %p430 = pneg %p210
        $region30: #{tpu_custom_call.1} parent=11 // pred_check_branch
          %432 = sbr.rel (%p430) target = $region32
        $region31: #{tpu_custom_call.1} parent=11 // pred_region
          _
        $region32: #{tpu_custom_call.1} parent=11 // pred_fallthru
          _
        // Predicated region
        $region33: #{tpu_custom_call.1} parent=11 // pred_check
          %p433 = pneg %p231
        $region34: #{tpu_custom_call.1} parent=11 // pred_check_branch
          %435 = sbr.rel (%p433) target = $region36
        $region35: #{tpu_custom_call.1} parent=11 // pred_region
          _
        $region36: #{tpu_custom_call.1} parent=11 // pred_fallthru
          _
        // Predicated region
        $region37: #{tpu_custom_call.1} parent=11 // pred_check
          %p436 = pneg %p252
        $region38: #{tpu_custom_call.1} parent=11 // pred_check_branch
          %438 = sbr.rel (%p436) target = $region40
        $region39: #{tpu_custom_call.1} parent=11 // pred_region
          _
        $region40: #{tpu_custom_call.1} parent=11 // pred_fallthru
          _
        // Predicated region
        $region41: #{tpu_custom_call.1} parent=11 // pred_check
          %p439 = pneg %p273
        $region42: #{tpu_custom_call.1} parent=11 // pred_check_branch
          %441 = sbr.rel (%p439) target = $region44
        $region43: #{tpu_custom_call.1} parent=11 // pred_region
          _
        $region44: #{tpu_custom_call.1} parent=11 // pred_fallthru
          _
        // Predicated region
        $region45: #{tpu_custom_call.1} parent=11 // pred_check
          %p442 = pneg %p294
        $region46: #{tpu_custom_call.1} parent=11 // pred_check_branch
          %444 = sbr.rel (%p442) target = $region48
        $region47: #{tpu_custom_call.1} parent=11 // pred_region
          %s446 = ssub.s32 28672, 28672
          %447 = vsyncadd [#allocation6], %s446
          %s448 = sshll.u32 [#allocation5], 4
          %s449 = int_to_ptr.vmem [resolvable:$true] %s448
          %454 = dma.hbm_to_vmem [thread:$0]  %s11, 28672, %s449, [#allocation6], 448, 448, 28
        $region48: #{tpu_custom_call.1} parent=11 // pred_fallthru
          _
        // Predicated region
        $region49: #{tpu_custom_call.1} parent=11 // pred_check
          %p455 = pneg %p315
        $region50: #{tpu_custom_call.1} parent=11 // pred_check_branch
          %457 = sbr.rel (%p455) target = $region52
        $region51: #{tpu_custom_call.1} parent=11 // pred_region
          _
        $region52: #{tpu_custom_call.1} parent=11 // pred_fallthru
          _
      $region12: #{tpu_custom_call.1} parent=5 // pred_fallthru
        _
      %p458 = scmp.lt.s32.totalorder %s27, 2
      // Predicated region
      $region53: #{tpu_custom_call.1} parent=5 // pred_check
        %p459 = pneg %p458
      $region54: #{tpu_custom_call.1} parent=5 // pred_check_branch
        %461 = sbr.rel (%p459) target = $region56
      $region55: #{tpu_custom_call.1} parent=5 // pred_region
        // Predicated region
        $region57: #{tpu_custom_call.1} parent=55 // pred_check
          %p462 = pneg %p47
        $region58: #{tpu_custom_call.1} parent=55 // pred_check_branch
          %464 = sbr.rel (%p462) target = $region60
        $region59: #{tpu_custom_call.1} parent=55 // pred_region
          %p465 = scmp.lt.s32.totalorder %s27, 1
          %s466 = scalar_select %p465, %s27, 1
          %s467 = smul.addr %s466, 7
          %s468 = smul.addr %s467, 8
          %s469 = scalar_lea.vmem %s0, %s468
        $region60: #{tpu_custom_call.1} parent=55 // pred_fallthru
          _
        // Predicated region
        $region61: #{tpu_custom_call.1} parent=55 // pred_check
          %p470 = pneg %p73
        $region62: #{tpu_custom_call.1} parent=55 // pred_check_branch
          %472 = sbr.rel (%p470) target = $region64
        $region63: #{tpu_custom_call.1} parent=55 // pred_region
          %p473 = scmp.lt.s32.totalorder %s27, 1
          %s474 = scalar_select %p473, %s27, 1
          %s475 = smul.addr %s474, 8
          %s476 = scalar_lea.vmem %s1, %s475
        $region64: #{tpu_custom_call.1} parent=55 // pred_fallthru
          _
        // Predicated region
        $region65: #{tpu_custom_call.1} parent=55 // pred_check
          %p477 = pneg %p99
        $region66: #{tpu_custom_call.1} parent=55 // pred_check_branch
          %479 = sbr.rel (%p477) target = $region68
        $region67: #{tpu_custom_call.1} parent=55 // pred_region
          %p480 = scmp.lt.s32.totalorder %s27, 1
          %s481 = scalar_select %p480, %s27, 1
          %s482 = smul.addr %s481, 8
          %s483 = scalar_lea.vmem %s2, %s482
        $region68: #{tpu_custom_call.1} parent=55 // pred_fallthru
          _
      $region56: #{tpu_custom_call.1} parent=5 // pred_fallthru
        _
      %p484 = scmp.le.s32.totalorder 1, %s27
      %p485 = scmp.lt.s32.totalorder %s27, 3
      %p486 = pnand %p484, %p485
      %p487 = pneg %p486
      // Predicated region
      $region69: #{tpu_custom_call.1} parent=5 // pred_check
        _
      $region70: #{tpu_custom_call.1} parent=5 // pred_check_branch
        %489 = sbr.rel (%p486) target = $region72
      $region71: #{tpu_custom_call.1} parent=5 // pred_region
        %s490 = ssub.s32 %s27, 1
        // Predicated region
        $region73: #{tpu_custom_call.1} parent=71 // pred_check
          %p491 = pneg %p126
        $region74: #{tpu_custom_call.1} parent=71 // pred_check_branch
          %493 = sbr.rel (%p491) target = $region76
        $region75: #{tpu_custom_call.1} parent=71 // pred_region
          %494 = dma.done [#allocation3], 25088
        $region76: #{tpu_custom_call.1} parent=71 // pred_fallthru
          _
        // Predicated region
        $region77: #{tpu_custom_call.1} parent=71 // pred_check
          %p495 = pneg %p294
        $region78: #{tpu_custom_call.1} parent=71 // pred_check_branch
          %497 = sbr.rel (%p495) target = $region80
        $region79: #{tpu_custom_call.1} parent=71 // pred_region
          %498 = dma.done [#allocation6], 28672
        $region80: #{tpu_custom_call.1} parent=71 // pred_fallthru
          _
        %p499 = scmp.lt.s32.totalorder %s32, 1
        %s500 = scalar_select %p499, %s32, 1
        %s501 = smul.addr %s500, 7
        %s502 = smul.addr %s501, 8
        %s503 = scalar_lea.vmem %s0, %s502
        %p504 = pneg %p53
        %p505 = pneg %p50
        %p506 = scmp.lt.s32.totalorder %s32, 1
        %s507 = scalar_select %p506, %s32, 1
        %s508 = smul.addr %s507, 8
        %s509 = scalar_lea.vmem %s1, %s508
        %p510 = pneg %p79
        %p511 = pneg %p76
        %p512 = scmp.lt.s32.totalorder %s32, 1
        %s513 = scalar_select %p512, %s32, 1
        %s514 = smul.addr %s513, 8
        %s515 = scalar_lea.vmem %s2, %s514
        %p516 = pneg %p105
        %p517 = pneg %p102
        %p518 = pneg %p126
        %p519 = pneg %p123
        %p520 = pneg %p147
        %p521 = pneg %p144
        %p522 = pneg %p168
        %p523 = pneg %p165
        %p524 = pneg %p189
        %p525 = pneg %p186
        %p526 = pneg %p210
        %p527 = pneg %p207
        %p528 = pneg %p231
        %p529 = pneg %p228
        %p530 = pneg %p252
        %p531 = pneg %p249
        %p532 = pneg %p273
        %p533 = pneg %p270
        %p534 = pneg %p294
        %p535 = pneg %p291
        %p536 = pneg %p315
        %p537 = pneg %p312
        %p538 = pneg %p341
        %p539 = pneg %p338
        %p540 = scmp.lt.s32.totalorder %s32, 1
        %s541 = scalar_select %p540, %s32, 1
        %s542 = smul.addr %s541, 8
        %s543 = scalar_lea.vmem %s13, %s542
        %p544 = pneg %p367
        %p545 = pneg %p364
        %p546 = scmp.lt.s32.totalorder %s32, 1
        %s547 = scalar_select %p546, %s32, 1
        %s548 = smul.addr %s547, 8
        %s549 = scalar_lea.vmem %s14, %s548
        %p550 = pneg %p393
        %p551 = pneg %p390
        %s552 = sand.u32 %s380, 1
        %s553 = scalar_lea.sflag [#allocation4], %s552
        %s554 = sand.u32 %s380, 1
        %s555 = smul.addr %s554, 56
        %s556 = scalar_lea.vmem [#allocation7], %s555
        %p557 = scmp.lt.s32.totalorder %s32, 1
        %s558 = scalar_select %p557, %s32, 1
        %s559 = smul.addr %s558, 7
        %s560 = smul.addr %s559, 8
        %s561 = scalar_lea.vmem %s0, %s560
        %p562 = scmp.lt.s32.totalorder %s32, 1
        %s563 = scalar_select %p562, %s32, 1
        %s564 = smul.addr %s563, 8
        %s565 = scalar_lea.vmem %s1, %s564
        %p566 = scmp.lt.s32.totalorder %s32, 1
        %s567 = scalar_select %p566, %s32, 1
        %s568 = smul.addr %s567, 8
        %s569 = scalar_lea.vmem %s2, %s568
        %p570 = scmp.lt.s32.totalorder %s32, 1
        %s571 = scalar_select %p570, %s32, 1
        %s572 = smul.addr %s571, 8
        %s573 = scalar_lea.vmem %s13, %s572
        %p574 = scmp.lt.s32.totalorder %s32, 1
        %s575 = scalar_select %p574, %s32, 1
        %s576 = smul.addr %s575, 8
        %s577 = scalar_lea.vmem %s14, %s576
        %v579 = vld [vmem:[%s561] sm:$0xff]
        %v580 = vld [vmem:[%s561 + $0x8] sm:$0xff]
        %v581 = vld [vmem:[%s561 + $0x10] sm:$0xff]
        %v582 = vld [vmem:[%s561 + $0x18] sm:$0xff]
        %v583 = vld [vmem:[%s561 + $0x20] sm:$0xff]
        %v584 = vld [vmem:[%s561 + $0x28] sm:$0xff]
        %v585 = vld [vmem:[%s561 + $0x30] sm:$0xff]
        %v586 = vld [vmem:[%s565] sm:$0xff]
        %v587 = vld [vmem:[%s569] sm:$0xff]
        %v588 = vpack.c.bf16 %v579, %v579
        %v589 = vpack.c.bf16 %v580, %v580
        %v590 = vpack.c.bf16 %v581, %v581
        %v591 = vpack.c.bf16 %v582, %v582
        %v592 = vpack.c.bf16 %v583, %v583
        %v593 = vpack.c.bf16 %v584, %v584
        %v594 = vpack.c.bf16 %v585, %v585
        %v595 = vld [vmem:[#allocation2] sm:$0xff]
        %v596 = vld [vmem:[#allocation2 + $0x8] sm:$0xff]
        %v597 = vld [vmem:[#allocation2 + $0x10] sm:$0xff]
        %v598 = vld [vmem:[#allocation2 + $0x18] sm:$0xff]
        %v599 = vld [vmem:[#allocation2 + $0x20] sm:$0xff]
        %v600 = vld [vmem:[#allocation2 + $0x28] sm:$0xff]
        %v601 = vld [vmem:[#allocation2 + $0x30] sm:$0xff]
        %v602 = vld [vmem:[#allocation2 + $0x38] sm:$0xff]
        %v603 = vld [vmem:[#allocation2 + $0x40] sm:$0xff]
        %v604 = vld [vmem:[#allocation2 + $0x48] sm:$0xff]
        %v605 = vld [vmem:[#allocation2 + $0x50] sm:$0xff]
        %v606 = vld [vmem:[#allocation2 + $0x58] sm:$0xff]
        %v607 = vld [vmem:[#allocation2 + $0x60] sm:$0xff]
        %v608 = vld [vmem:[#allocation2 + $0x68] sm:$0xff]
        %v609 = vld [vmem:[#allocation2 + $0x70] sm:$0xff]
        %v610 = vld [vmem:[#allocation2 + $0x78] sm:$0xff]
        %v611 = vld [vmem:[#allocation2 + $0x80] sm:$0xff]
        %v612 = vld [vmem:[#allocation2 + $0x88] sm:$0xff]
        %v613 = vld [vmem:[#allocation2 + $0x90] sm:$0xff]
        %v614 = vld [vmem:[#allocation2 + $0x98] sm:$0xff]
        %v615 = vld [vmem:[#allocation2 + $0xa0] sm:$0xff]
        %v616 = vld [vmem:[#allocation2 + $0xa8] sm:$0xff]
        %v617 = vld [vmem:[#allocation2 + $0xb0] sm:$0xff]
        %v618 = vld [vmem:[#allocation2 + $0xb8] sm:$0xff]
        %v619 = vld [vmem:[#allocation2 + $0xc0] sm:$0xff]
        %v620 = vld [vmem:[#allocation2 + $0xc8] sm:$0xff]
        %v621 = vld [vmem:[#allocation2 + $0xd0] sm:$0xff]
        %v622 = vld [vmem:[#allocation2 + $0xd8] sm:$0xff]
        %v623 = vld [vmem:[#allocation2 + $0xe0] sm:$0xff]
        %v624 = vld [vmem:[#allocation2 + $0xe8] sm:$0xff]
        %v625 = vld [vmem:[#allocation2 + $0xf0] sm:$0xff]
        %v626 = vld [vmem:[#allocation2 + $0xf8] sm:$0xff]
        %v627 = vld [vmem:[#allocation2 + $0x100] sm:$0xff]
        %v628 = vld [vmem:[#allocation2 + $0x108] sm:$0xff]
        %v629 = vld [vmem:[#allocation2 + $0x110] sm:$0xff]
        %v630 = vld [vmem:[#allocation2 + $0x118] sm:$0xff]
        %v631 = vld [vmem:[#allocation2 + $0x120] sm:$0xff]
        %v632 = vld [vmem:[#allocation2 + $0x128] sm:$0xff]
        %v633 = vld [vmem:[#allocation2 + $0x130] sm:$0xff]
        %v634 = vld [vmem:[#allocation2 + $0x138] sm:$0xff]
        %v635 = vld [vmem:[#allocation2 + $0x140] sm:$0xff]
        %v636 = vld [vmem:[#allocation2 + $0x148] sm:$0xff]
        %v637 = vld [vmem:[#allocation2 + $0x150] sm:$0xff]
        %v638 = vld [vmem:[#allocation2 + $0x158] sm:$0xff]
        %v639 = vld [vmem:[#allocation2 + $0x160] sm:$0xff]
        %v640 = vld [vmem:[#allocation2 + $0x168] sm:$0xff]
        %v641 = vld [vmem:[#allocation2 + $0x170] sm:$0xff]
        %v642 = vld [vmem:[#allocation2 + $0x178] sm:$0xff]
        %v643 = vld [vmem:[#allocation2 + $0x180] sm:$0xff]
        %v644 = vld [vmem:[#allocation2 + $0x188] sm:$0xff]
        %v645 = vld [vmem:[#allocation2 + $0x190] sm:$0xff]
        %v646 = vld [vmem:[#allocation2 + $0x198] sm:$0xff]
        %v647 = vld [vmem:[#allocation2 + $0x1a0] sm:$0xff]
        %v648 = vld [vmem:[#allocation2 + $0x1a8] sm:$0xff]
        %v649 = vld [vmem:[#allocation2 + $0x1b0] sm:$0xff]
        %v650 = vld [vmem:[#allocation2 + $0x1b8] sm:$0xff]
        %v651 = vld [vmem:[#allocation2 + $0x1c0] sm:$0xff]
        %v652 = vld [vmem:[#allocation2 + $0x1c8] sm:$0xff]
        %v653 = vld [vmem:[#allocation2 + $0x1d0] sm:$0xff]
        %v654 = vld [vmem:[#allocation2 + $0x1d8] sm:$0xff]
        %v655 = vld [vmem:[#allocation2 + $0x1e0] sm:$0xff]
        %v656 = vld [vmem:[#allocation2 + $0x1e8] sm:$0xff]
        %v657 = vld [vmem:[#allocation2 + $0x1f0] sm:$0xff]
        %v658 = vld [vmem:[#allocation2 + $0x1f8] sm:$0xff]
        %v659 = vld [vmem:[#allocation2 + $0x200] sm:$0xff]
        %v660 = vld [vmem:[#allocation2 + $0x208] sm:$0xff]
        %v661 = vld [vmem:[#allocation2 + $0x210] sm:$0xff]
        %v662 = vld [vmem:[#allocation2 + $0x218] sm:$0xff]
        %v663 = vld [vmem:[#allocation2 + $0x220] sm:$0xff]
        %v664 = vld [vmem:[#allocation2 + $0x228] sm:$0xff]
        %v665 = vld [vmem:[#allocation2 + $0x230] sm:$0xff]
        %v666 = vld [vmem:[#allocation2 + $0x238] sm:$0xff]
        %v667 = vld [vmem:[#allocation2 + $0x240] sm:$0xff]
        %v668 = vld [vmem:[#allocation2 + $0x248] sm:$0xff]
        %v669 = vld [vmem:[#allocation2 + $0x250] sm:$0xff]
        %v670 = vld [vmem:[#allocation2 + $0x258] sm:$0xff]
        %v671 = vld [vmem:[#allocation2 + $0x260] sm:$0xff]
        %v672 = vld [vmem:[#allocation2 + $0x268] sm:$0xff]
        %v673 = vld [vmem:[#allocation2 + $0x270] sm:$0xff]
        %v674 = vld [vmem:[#allocation2 + $0x278] sm:$0xff]
        %v675 = vld [vmem:[#allocation2 + $0x280] sm:$0xff]
        %v676 = vld [vmem:[#allocation2 + $0x288] sm:$0xff]
        %v677 = vld [vmem:[#allocation2 + $0x290] sm:$0xff]
        %v678 = vld [vmem:[#allocation2 + $0x298] sm:$0xff]
        %v679 = vld [vmem:[#allocation2 + $0x2a0] sm:$0xff]
        %v680 = vld [vmem:[#allocation2 + $0x2a8] sm:$0xff]
        %v681 = vld [vmem:[#allocation2 + $0x2b0] sm:$0xff]
        %v682 = vld [vmem:[#allocation2 + $0x2b8] sm:$0xff]
        %v683 = vld [vmem:[#allocation2 + $0x2c0] sm:$0xff]
        %v684 = vld [vmem:[#allocation2 + $0x2c8] sm:$0xff]
        %v685 = vld [vmem:[#allocation2 + $0x2d0] sm:$0xff]
        %v686 = vld [vmem:[#allocation2 + $0x2d8] sm:$0xff]
        %v687 = vld [vmem:[#allocation2 + $0x2e0] sm:$0xff]
        %v688 = vld [vmem:[#allocation2 + $0x2e8] sm:$0xff]
        %v689 = vld [vmem:[#allocation2 + $0x2f0] sm:$0xff]
        %v690 = vld [vmem:[#allocation2 + $0x2f8] sm:$0xff]
        %v691 = vld [vmem:[#allocation2 + $0x300] sm:$0xff]
        %v692 = vld [vmem:[#allocation2 + $0x308] sm:$0xff]
        %v693 = vld [vmem:[#allocation2 + $0x310] sm:$0xff]
        %v694 = vld [vmem:[#allocation2 + $0x318] sm:$0xff]
        %v695 = vld [vmem:[#allocation2 + $0x320] sm:$0xff]
        %v696 = vld [vmem:[#allocation2 + $0x328] sm:$0xff]
        %v697 = vld [vmem:[#allocation2 + $0x330] sm:$0xff]
        %v698 = vld [vmem:[#allocation2 + $0x338] sm:$0xff]
        %v699 = vld [vmem:[#allocation2 + $0x340] sm:$0xff]
        %v700 = vld [vmem:[#allocation2 + $0x348] sm:$0xff]
        %v701 = vld [vmem:[#allocation2 + $0x350] sm:$0xff]
        %v702 = vld [vmem:[#allocation2 + $0x358] sm:$0xff]
        %v703 = vld [vmem:[#allocation2 + $0x360] sm:$0xff]
        %v704 = vld [vmem:[#allocation2 + $0x368] sm:$0xff]
        %v705 = vld [vmem:[#allocation2 + $0x370] sm:$0xff]
        %v706 = vld [vmem:[#allocation2 + $0x378] sm:$0xff]
        %v707 = vld [vmem:[#allocation2 + $0x380] sm:$0xff]
        %v708 = vld [vmem:[#allocation2 + $0x388] sm:$0xff]
        %v709 = vld [vmem:[#allocation2 + $0x390] sm:$0xff]
        %v710 = vld [vmem:[#allocation2 + $0x398] sm:$0xff]
        %v711 = vld [vmem:[#allocation2 + $0x3a0] sm:$0xff]
        %v712 = vld [vmem:[#allocation2 + $0x3a8] sm:$0xff]
        %v713 = vld [vmem:[#allocation2 + $0x3b0] sm:$0xff]
        %v714 = vld [vmem:[#allocation2 + $0x3b8] sm:$0xff]
        %v715 = vld [vmem:[#allocation2 + $0x3c0] sm:$0xff]
        %v716 = vld [vmem:[#allocation2 + $0x3c8] sm:$0xff]
        %v717 = vld [vmem:[#allocation2 + $0x3d0] sm:$0xff]
        %v718 = vld [vmem:[#allocation2 + $0x3d8] sm:$0xff]
        %v719 = vld [vmem:[#allocation2 + $0x3e0] sm:$0xff]
        %v720 = vld [vmem:[#allocation2 + $0x3e8] sm:$0xff]
        %v721 = vld [vmem:[#allocation2 + $0x3f0] sm:$0xff]
        %v722 = vld [vmem:[#allocation2 + $0x3f8] sm:$0xff]
        %v723 = vld [vmem:[#allocation2 + $0x400] sm:$0xff]
        %v724 = vld [vmem:[#allocation2 + $0x408] sm:$0xff]
        %v725 = vld [vmem:[#allocation2 + $0x410] sm:$0xff]
        %v726 = vld [vmem:[#allocation2 + $0x418] sm:$0xff]
        %v727 = vld [vmem:[#allocation2 + $0x420] sm:$0xff]
        %v728 = vld [vmem:[#allocation2 + $0x428] sm:$0xff]
        %v729 = vld [vmem:[#allocation2 + $0x430] sm:$0xff]
        %v730 = vld [vmem:[#allocation2 + $0x438] sm:$0xff]
        %v731 = vld [vmem:[#allocation2 + $0x440] sm:$0xff]
        %v732 = vld [vmem:[#allocation2 + $0x448] sm:$0xff]
        %v733 = vld [vmem:[#allocation2 + $0x450] sm:$0xff]
        %v734 = vld [vmem:[#allocation2 + $0x458] sm:$0xff]
        %v735 = vld [vmem:[#allocation2 + $0x460] sm:$0xff]
        %v736 = vld [vmem:[#allocation2 + $0x468] sm:$0xff]
        %v737 = vld [vmem:[#allocation2 + $0x470] sm:$0xff]
        %v738 = vld [vmem:[#allocation2 + $0x478] sm:$0xff]
        %v739 = vld [vmem:[#allocation2 + $0x480] sm:$0xff]
        %v740 = vld [vmem:[#allocation2 + $0x488] sm:$0xff]
        %v741 = vld [vmem:[#allocation2 + $0x490] sm:$0xff]
        %v742 = vld [vmem:[#allocation2 + $0x498] sm:$0xff]
        %v743 = vld [vmem:[#allocation2 + $0x4a0] sm:$0xff]
        %v744 = vld [vmem:[#allocation2 + $0x4a8] sm:$0xff]
        %v745 = vld [vmem:[#allocation2 + $0x4b0] sm:$0xff]
        %v746 = vld [vmem:[#allocation2 + $0x4b8] sm:$0xff]
        %v747 = vld [vmem:[#allocation2 + $0x4c0] sm:$0xff]
        %v748 = vld [vmem:[#allocation2 + $0x4c8] sm:$0xff]
        %v749 = vld [vmem:[#allocation2 + $0x4d0] sm:$0xff]
        %v750 = vld [vmem:[#allocation2 + $0x4d8] sm:$0xff]
        %v751 = vld [vmem:[#allocation2 + $0x4e0] sm:$0xff]
        %v752 = vld [vmem:[#allocation2 + $0x4e8] sm:$0xff]
        %v753 = vld [vmem:[#allocation2 + $0x4f0] sm:$0xff]
        %v754 = vld [vmem:[#allocation2 + $0x4f8] sm:$0xff]
        %v755 = vld [vmem:[#allocation2 + $0x500] sm:$0xff]
        %v756 = vld [vmem:[#allocation2 + $0x508] sm:$0xff]
        %v757 = vld [vmem:[#allocation2 + $0x510] sm:$0xff]
        %v758 = vld [vmem:[#allocation2 + $0x518] sm:$0xff]
        %v759 = vld [vmem:[#allocation2 + $0x520] sm:$0xff]
        %v760 = vld [vmem:[#allocation2 + $0x528] sm:$0xff]
        %v761 = vld [vmem:[#allocation2 + $0x530] sm:$0xff]
        %v762 = vld [vmem:[#allocation2 + $0x538] sm:$0xff]
        %v763 = vld [vmem:[#allocation2 + $0x540] sm:$0xff]
        %v764 = vld [vmem:[#allocation2 + $0x548] sm:$0xff]
        %v765 = vld [vmem:[#allocation2 + $0x550] sm:$0xff]
        %v766 = vld [vmem:[#allocation2 + $0x558] sm:$0xff]
        %v767 = vld [vmem:[#allocation2 + $0x560] sm:$0xff]
        %v768 = vld [vmem:[#allocation2 + $0x568] sm:$0xff]
        %v769 = vld [vmem:[#allocation2 + $0x570] sm:$0xff]
        %v770 = vld [vmem:[#allocation2 + $0x578] sm:$0xff]
        %v771 = vld [vmem:[#allocation2 + $0x580] sm:$0xff]
        %v772 = vld [vmem:[#allocation2 + $0x588] sm:$0xff]
        %v773 = vld [vmem:[#allocation2 + $0x590] sm:$0xff]
        %v774 = vld [vmem:[#allocation2 + $0x598] sm:$0xff]
        %v775 = vld [vmem:[#allocation2 + $0x5a0] sm:$0xff]
        %v776 = vld [vmem:[#allocation2 + $0x5a8] sm:$0xff]
        %v777 = vld [vmem:[#allocation2 + $0x5b0] sm:$0xff]
        %v778 = vld [vmem:[#allocation2 + $0x5b8] sm:$0xff]
        %v779 = vld [vmem:[#allocation2 + $0x5c0] sm:$0xff]
        %v780 = vld [vmem:[#allocation2 + $0x5c8] sm:$0xff]
        %v781 = vld [vmem:[#allocation2 + $0x5d0] sm:$0xff]
        %v782 = vld [vmem:[#allocation2 + $0x5d8] sm:$0xff]
        %v783 = vld [vmem:[#allocation2 + $0x5e0] sm:$0xff]
        %v784 = vld [vmem:[#allocation2 + $0x5e8] sm:$0xff]
        %v785 = vld [vmem:[#allocation2 + $0x5f0] sm:$0xff]
        %v786 = vld [vmem:[#allocation2 + $0x5f8] sm:$0xff]
        %v787 = vld [vmem:[#allocation2 + $0x600] sm:$0xff]
        %v788 = vld [vmem:[#allocation2 + $0x608] sm:$0xff]
        %v789 = vld [vmem:[#allocation2 + $0x610] sm:$0xff]
        %v790 = vld [vmem:[#allocation2 + $0x618] sm:$0xff]
        %v791 = vld [vmem:[%s4] sm:$0xff]
        %v792 = vld [vmem:[%s4 + $0x8] sm:$0xff]
        %v793 = vld [vmem:[%s4 + $0x10] sm:$0xff]
        %v794 = vld [vmem:[%s4 + $0x18] sm:$0xff]
        %v795 = vld [vmem:[%s4 + $0x20] sm:$0x3]
        %v796 = vld [vmem:[%s4 + $0x28] sm:$0x3]
        %v797 = vld [vmem:[%s4 + $0x30] sm:$0x3]
        %v798 = vld [vmem:[%s4 + $0x38] sm:$0x3]
        %800 = vset.pattern.permute.xlu0 0
        %801 = vperm.xlu0 %800, %v586
        %v802 = vpop.permute.xlu0 %801
        %v804 = vlaneseq
        %v805 = vshrl.u32 %v804, 7
        %v806 = vsub.s32 0, %v805
        %v807 = vrot.slane %v791, %v806
        %v808 = vlaneseq
        %v809 = vshrl.u32 %v808, 7
        %v810 = vsub.s32 0, %v809
        %v811 = vrot.slane %v792, %v810
        %v812 = vlaneseq
        %v813 = vshrl.u32 %v812, 7
        %v814 = vsub.s32 0, %v813
        %v815 = vrot.slane %v793, %v814
        %v816 = vlaneseq
        %v817 = vshrl.u32 %v816, 7
        %v818 = vsub.s32 0, %v817
        %v819 = vrot.slane %v794, %v818
        %v820 = vmul.f32 %v802, %v807
        %v821 = vmul.f32 %v802, %v811
        %v822 = vmul.f32 %v802, %v815
        %v823 = vmul.f32 %v802, %v819
        %v1020 = vunpack.c.l.b16 %v595
        %v1021 = vunpack.c.h.b16 %v595
        %v1022 = vunpack.c.l.b16 %v596
        %v1023 = vunpack.c.h.b16 %v596
        %v1024 = vunpack.c.l.b16 %v597
        %v1025 = vunpack.c.h.b16 %v597
        %v1026 = vunpack.c.l.b16 %v598
        %v1027 = vunpack.c.h.b16 %v598
        %v1028 = vunpack.c.l.b16 %v599
        %v1029 = vunpack.c.h.b16 %v599
        %v1030 = vunpack.c.l.b16 %v600
        %v1031 = vunpack.c.h.b16 %v600
        %v1032 = vunpack.c.l.b16 %v601
        %v1033 = vunpack.c.h.b16 %v601
        %v1034 = vunpack.c.l.b16 %v602
        %v1035 = vunpack.c.h.b16 %v602
        %v1036 = vunpack.c.l.b16 %v603
        %v1037 = vunpack.c.h.b16 %v603
        %v1038 = vunpack.c.l.b16 %v604
        %v1039 = vunpack.c.h.b16 %v604
        %v1040 = vunpack.c.l.b16 %v605
        %v1041 = vunpack.c.h.b16 %v605
        %v1042 = vunpack.c.l.b16 %v606
        %v1043 = vunpack.c.h.b16 %v606
        %v1044 = vunpack.c.l.b16 %v607
        %v1045 = vunpack.c.h.b16 %v607
        %v1046 = vunpack.c.l.b16 %v608
        %v1047 = vunpack.c.h.b16 %v608
        %v1048 = vunpack.c.l.b16 %v609
        %v1049 = vunpack.c.h.b16 %v609
        %v1050 = vunpack.c.l.b16 %v610
        %v1051 = vunpack.c.h.b16 %v610
        %v1052 = vunpack.c.l.b16 %v611
        %v1053 = vunpack.c.h.b16 %v611
        %v1054 = vunpack.c.l.b16 %v612
        %v1055 = vunpack.c.h.b16 %v612
        %v1056 = vunpack.c.l.b16 %v613
        %v1057 = vunpack.c.h.b16 %v613
        %v1058 = vunpack.c.l.b16 %v614
        %v1059 = vunpack.c.h.b16 %v614
        %v1060 = vunpack.c.l.b16 %v615
        %v1061 = vunpack.c.h.b16 %v615
        %v1062 = vunpack.c.l.b16 %v616
        %v1063 = vunpack.c.h.b16 %v616
        %v1064 = vunpack.c.l.b16 %v617
        %v1065 = vunpack.c.h.b16 %v617
        %v1066 = vunpack.c.l.b16 %v618
        %v1067 = vunpack.c.h.b16 %v618
        %v1068 = vunpack.c.l.b16 %v619
        %v1069 = vunpack.c.h.b16 %v619
        %v1070 = vunpack.c.l.b16 %v620
        %v1071 = vunpack.c.h.b16 %v620
        %v1072 = vunpack.c.l.b16 %v621
        %v1073 = vunpack.c.h.b16 %v621
        %v1074 = vunpack.c.l.b16 %v622
        %v1075 = vunpack.c.h.b16 %v622
        %v1076 = vunpack.c.l.b16 %v623
        %v1077 = vunpack.c.h.b16 %v623
        %v1078 = vunpack.c.l.b16 %v624
        %v1079 = vunpack.c.h.b16 %v624
        %v1080 = vunpack.c.l.b16 %v625
        %v1081 = vunpack.c.h.b16 %v625
        %v1082 = vunpack.c.l.b16 %v626
        %v1083 = vunpack.c.h.b16 %v626
        %v1084 = vunpack.c.l.b16 %v627
        %v1085 = vunpack.c.h.b16 %v627
        %v1086 = vunpack.c.l.b16 %v628
        %v1087 = vunpack.c.h.b16 %v628
        %v1088 = vunpack.c.l.b16 %v629
        %v1089 = vunpack.c.h.b16 %v629
        %v1090 = vunpack.c.l.b16 %v630
        %v1091 = vunpack.c.h.b16 %v630
        %v1092 = vunpack.c.l.b16 %v631
        %v1093 = vunpack.c.h.b16 %v631
        %v1094 = vunpack.c.l.b16 %v632
        %v1095 = vunpack.c.h.b16 %v632
        %v1096 = vunpack.c.l.b16 %v633
        %v1097 = vunpack.c.h.b16 %v633
        %v1098 = vunpack.c.l.b16 %v634
        %v1099 = vunpack.c.h.b16 %v634
        %v1100 = vunpack.c.l.b16 %v635
        %v1101 = vunpack.c.h.b16 %v635
        %v1102 = vunpack.c.l.b16 %v636
        %v1103 = vunpack.c.h.b16 %v636
        %v1104 = vunpack.c.l.b16 %v637
        %v1105 = vunpack.c.h.b16 %v637
        %v1106 = vunpack.c.l.b16 %v638
        %v1107 = vunpack.c.h.b16 %v638
        %v1108 = vunpack.c.l.b16 %v639
        %v1109 = vunpack.c.h.b16 %v639
        %v1110 = vunpack.c.l.b16 %v640
        %v1111 = vunpack.c.h.b16 %v640
        %v1112 = vunpack.c.l.b16 %v641
        %v1113 = vunpack.c.h.b16 %v641
        %v1114 = vunpack.c.l.b16 %v642
        %v1115 = vunpack.c.h.b16 %v642
        %v1116 = vunpack.c.l.b16 %v643
        %v1117 = vunpack.c.h.b16 %v643
        %v1118 = vunpack.c.l.b16 %v644
        %v1119 = vunpack.c.h.b16 %v644
        %v1120 = vunpack.c.l.b16 %v645
        %v1121 = vunpack.c.h.b16 %v645
        %v1122 = vunpack.c.l.b16 %v646
        %v1123 = vunpack.c.h.b16 %v646
        %v1124 = vunpack.c.l.b16 %v647
        %v1125 = vunpack.c.h.b16 %v647
        %v1126 = vunpack.c.l.b16 %v648
        %v1127 = vunpack.c.h.b16 %v648
        %v1128 = vunpack.c.l.b16 %v649
        %v1129 = vunpack.c.h.b16 %v649
        %v1130 = vunpack.c.l.b16 %v650
        %v1131 = vunpack.c.h.b16 %v650
        %v1132 = vunpack.c.l.b16 %v651
        %v1133 = vunpack.c.h.b16 %v651
        %v1134 = vunpack.c.l.b16 %v652
        %v1135 = vunpack.c.h.b16 %v652
        %v1136 = vunpack.c.l.b16 %v653
        %v1137 = vunpack.c.h.b16 %v653
        %v1138 = vunpack.c.l.b16 %v654
        %v1139 = vunpack.c.h.b16 %v654
        %v1140 = vunpack.c.l.b16 %v655
        %v1141 = vunpack.c.h.b16 %v655
        %v1142 = vunpack.c.l.b16 %v656
        %v1143 = vunpack.c.h.b16 %v656
        %v1144 = vunpack.c.l.b16 %v657
        %v1145 = vunpack.c.h.b16 %v657
        %v1146 = vunpack.c.l.b16 %v658
        %v1147 = vunpack.c.h.b16 %v658
        %v1148 = vunpack.c.l.b16 %v659
        %v1149 = vunpack.c.h.b16 %v659
        %v1150 = vunpack.c.l.b16 %v660
        %v1151 = vunpack.c.h.b16 %v660
        %v1152 = vunpack.c.l.b16 %v661
        %v1153 = vunpack.c.h.b16 %v661
        %v1154 = vunpack.c.l.b16 %v662
        %v1155 = vunpack.c.h.b16 %v662
        %v1156 = vunpack.c.l.b16 %v663
        %v1157 = vunpack.c.h.b16 %v663
        %v1158 = vunpack.c.l.b16 %v664
        %v1159 = vunpack.c.h.b16 %v664
        %v1160 = vunpack.c.l.b16 %v665
        %v1161 = vunpack.c.h.b16 %v665
        %v1162 = vunpack.c.l.b16 %v666
        %v1163 = vunpack.c.h.b16 %v666
        %v1164 = vunpack.c.l.b16 %v667
        %v1165 = vunpack.c.h.b16 %v667
        %v1166 = vunpack.c.l.b16 %v668
        %v1167 = vunpack.c.h.b16 %v668
        %v1168 = vunpack.c.l.b16 %v669
        %v1169 = vunpack.c.h.b16 %v669
        %v1170 = vunpack.c.l.b16 %v670
        %v1171 = vunpack.c.h.b16 %v670
        %v1172 = vunpack.c.l.b16 %v671
        %v1173 = vunpack.c.h.b16 %v671
        %v1174 = vunpack.c.l.b16 %v672
        %v1175 = vunpack.c.h.b16 %v672
        %v1176 = vunpack.c.l.b16 %v673
        %v1177 = vunpack.c.h.b16 %v673
        %v1178 = vunpack.c.l.b16 %v674
        %v1179 = vunpack.c.h.b16 %v674
        %v1180 = vunpack.c.l.b16 %v675
        %v1181 = vunpack.c.h.b16 %v675
        %v1182 = vunpack.c.l.b16 %v676
        %v1183 = vunpack.c.h.b16 %v676
        %v1184 = vunpack.c.l.b16 %v677
        %v1185 = vunpack.c.h.b16 %v677
        %v1186 = vunpack.c.l.b16 %v678
        %v1187 = vunpack.c.h.b16 %v678
        %v1188 = vunpack.c.l.b16 %v679
        %v1189 = vunpack.c.h.b16 %v679
        %v1190 = vunpack.c.l.b16 %v680
        %v1191 = vunpack.c.h.b16 %v680
        %v1192 = vunpack.c.l.b16 %v681
        %v1193 = vunpack.c.h.b16 %v681
        %v1194 = vunpack.c.l.b16 %v682
        %v1195 = vunpack.c.h.b16 %v682
        %v1196 = vunpack.c.l.b16 %v683
        %v1197 = vunpack.c.h.b16 %v683
        %v1198 = vunpack.c.l.b16 %v684
        %v1199 = vunpack.c.h.b16 %v684
        %v1200 = vunpack.c.l.b16 %v685
        %v1201 = vunpack.c.h.b16 %v685
        %v1202 = vunpack.c.l.b16 %v686
        %v1203 = vunpack.c.h.b16 %v686
        %v1204 = vunpack.c.l.b16 %v687
        %v1205 = vunpack.c.h.b16 %v687
        %v1206 = vunpack.c.l.b16 %v688
        %v1207 = vunpack.c.h.b16 %v688
        %v1208 = vunpack.c.l.b16 %v689
        %v1209 = vunpack.c.h.b16 %v689
        %v1210 = vunpack.c.l.b16 %v690
        %v1211 = vunpack.c.h.b16 %v690
        %v1212 = vunpack.c.l.b16 %v691
        %v1213 = vunpack.c.h.b16 %v691
        %v1214 = vunpack.c.l.b16 %v692
        %v1215 = vunpack.c.h.b16 %v692
        %v1216 = vunpack.c.l.b16 %v693
        %v1217 = vunpack.c.h.b16 %v693
        %v1218 = vunpack.c.l.b16 %v694
        %v1219 = vunpack.c.h.b16 %v694
        %v1220 = vunpack.c.l.b16 %v695
        %v1221 = vunpack.c.h.b16 %v695
        %v1222 = vunpack.c.l.b16 %v696
        %v1223 = vunpack.c.h.b16 %v696
        %v1224 = vunpack.c.l.b16 %v697
        %v1225 = vunpack.c.h.b16 %v697
        %v1226 = vunpack.c.l.b16 %v698
        %v1227 = vunpack.c.h.b16 %v698
        %v1228 = vunpack.c.l.b16 %v699
        %v1229 = vunpack.c.h.b16 %v699
        %v1230 = vunpack.c.l.b16 %v700
        %v1231 = vunpack.c.h.b16 %v700
        %v1232 = vunpack.c.l.b16 %v701
        %v1233 = vunpack.c.h.b16 %v701
        %v1234 = vunpack.c.l.b16 %v702
        %v1235 = vunpack.c.h.b16 %v702
        %v1236 = vunpack.c.l.b16 %v703
        %v1237 = vunpack.c.h.b16 %v703
        %v1238 = vunpack.c.l.b16 %v704
        %v1239 = vunpack.c.h.b16 %v704
        %v1240 = vunpack.c.l.b16 %v705
        %v1241 = vunpack.c.h.b16 %v705
        %v1242 = vunpack.c.l.b16 %v706
        %v1243 = vunpack.c.h.b16 %v706
        %v1244 = vunpack.c.l.b16 %v707
        %v1245 = vunpack.c.h.b16 %v707
        %v1246 = vunpack.c.l.b16 %v708
        %v1247 = vunpack.c.h.b16 %v708
        %v1248 = vunpack.c.l.b16 %v709
        %v1249 = vunpack.c.h.b16 %v709
        %v1250 = vunpack.c.l.b16 %v710
        %v1251 = vunpack.c.h.b16 %v710
        %v1252 = vunpack.c.l.b16 %v711
        %v1253 = vunpack.c.h.b16 %v711
        %v1254 = vunpack.c.l.b16 %v712
        %v1255 = vunpack.c.h.b16 %v712
        %v1256 = vunpack.c.l.b16 %v713
        %v1257 = vunpack.c.h.b16 %v713
        %v1258 = vunpack.c.l.b16 %v714
        %v1259 = vunpack.c.h.b16 %v714
        %v1260 = vunpack.c.l.b16 %v715
        %v1261 = vunpack.c.h.b16 %v715
        %v1262 = vunpack.c.l.b16 %v716
        %v1263 = vunpack.c.h.b16 %v716
        %v1264 = vunpack.c.l.b16 %v717
        %v1265 = vunpack.c.h.b16 %v717
        %v1266 = vunpack.c.l.b16 %v718
        %v1267 = vunpack.c.h.b16 %v718
        %v1268 = vunpack.c.l.b16 %v719
        %v1269 = vunpack.c.h.b16 %v719
        %v1270 = vunpack.c.l.b16 %v720
        %v1271 = vunpack.c.h.b16 %v720
        %v1272 = vunpack.c.l.b16 %v721
        %v1273 = vunpack.c.h.b16 %v721
        %v1274 = vunpack.c.l.b16 %v722
        %v1275 = vunpack.c.h.b16 %v722
        %v1276 = vunpack.c.l.b16 %v723
        %v1277 = vunpack.c.h.b16 %v723
        %v1278 = vunpack.c.l.b16 %v724
        %v1279 = vunpack.c.h.b16 %v724
        %v1280 = vunpack.c.l.b16 %v725
        %v1281 = vunpack.c.h.b16 %v725
        %v1282 = vunpack.c.l.b16 %v726
        %v1283 = vunpack.c.h.b16 %v726
        %v1284 = vunpack.c.l.b16 %v727
        %v1285 = vunpack.c.h.b16 %v727
        %v1286 = vunpack.c.l.b16 %v728
        %v1287 = vunpack.c.h.b16 %v728
        %v1288 = vunpack.c.l.b16 %v729
        %v1289 = vunpack.c.h.b16 %v729
        %v1290 = vunpack.c.l.b16 %v730
        %v1291 = vunpack.c.h.b16 %v730
        %v1292 = vunpack.c.l.b16 %v731
        %v1293 = vunpack.c.h.b16 %v731
        %v1294 = vunpack.c.l.b16 %v732
        %v1295 = vunpack.c.h.b16 %v732
        %v1296 = vunpack.c.l.b16 %v733
        %v1297 = vunpack.c.h.b16 %v733
        %v1298 = vunpack.c.l.b16 %v734
        %v1299 = vunpack.c.h.b16 %v734
        %v1300 = vunpack.c.l.b16 %v735
        %v1301 = vunpack.c.h.b16 %v735
        %v1302 = vunpack.c.l.b16 %v736
        %v1303 = vunpack.c.h.b16 %v736
        %v1304 = vunpack.c.l.b16 %v737
        %v1305 = vunpack.c.h.b16 %v737
        %v1306 = vunpack.c.l.b16 %v738
        %v1307 = vunpack.c.h.b16 %v738
        %v1308 = vunpack.c.l.b16 %v739
        %v1309 = vunpack.c.h.b16 %v739
        %v1310 = vunpack.c.l.b16 %v740
        %v1311 = vunpack.c.h.b16 %v740
        %v1312 = vunpack.c.l.b16 %v741
        %v1313 = vunpack.c.h.b16 %v741
        %v1314 = vunpack.c.l.b16 %v742
        %v1315 = vunpack.c.h.b16 %v742
        %v1316 = vunpack.c.l.b16 %v743
        %v1317 = vunpack.c.h.b16 %v743
        %v1318 = vunpack.c.l.b16 %v744
        %v1319 = vunpack.c.h.b16 %v744
        %v1320 = vunpack.c.l.b16 %v745
        %v1321 = vunpack.c.h.b16 %v745
        %v1322 = vunpack.c.l.b16 %v746
        %v1323 = vunpack.c.h.b16 %v746
        %v1324 = vunpack.c.l.b16 %v747
        %v1325 = vunpack.c.h.b16 %v747
        %v1326 = vunpack.c.l.b16 %v748
        %v1327 = vunpack.c.h.b16 %v748
        %v1328 = vunpack.c.l.b16 %v749
        %v1329 = vunpack.c.h.b16 %v749
        %v1330 = vunpack.c.l.b16 %v750
        %v1331 = vunpack.c.h.b16 %v750
        %v1332 = vunpack.c.l.b16 %v751
        %v1333 = vunpack.c.h.b16 %v751
        %v1334 = vunpack.c.l.b16 %v752
        %v1335 = vunpack.c.h.b16 %v752
        %v1336 = vunpack.c.l.b16 %v753
        %v1337 = vunpack.c.h.b16 %v753
        %v1338 = vunpack.c.l.b16 %v754
        %v1339 = vunpack.c.h.b16 %v754
        %v1340 = vunpack.c.l.b16 %v755
        %v1341 = vunpack.c.h.b16 %v755
        %v1342 = vunpack.c.l.b16 %v756
        %v1343 = vunpack.c.h.b16 %v756
        %v1344 = vunpack.c.l.b16 %v757
        %v1345 = vunpack.c.h.b16 %v757
        %v1346 = vunpack.c.l.b16 %v758
        %v1347 = vunpack.c.h.b16 %v758
        %v1348 = vunpack.c.l.b16 %v759
        %v1349 = vunpack.c.h.b16 %v759
        %v1350 = vunpack.c.l.b16 %v760
        %v1351 = vunpack.c.h.b16 %v760
        %v1352 = vunpack.c.l.b16 %v761
        %v1353 = vunpack.c.h.b16 %v761
        %v1354 = vunpack.c.l.b16 %v762
        %v1355 = vunpack.c.h.b16 %v762
        %v1356 = vunpack.c.l.b16 %v763
        %v1357 = vunpack.c.h.b16 %v763
        %v1358 = vunpack.c.l.b16 %v764
        %v1359 = vunpack.c.h.b16 %v764
        %v1360 = vunpack.c.l.b16 %v765
        %v1361 = vunpack.c.h.b16 %v765
        %v1362 = vunpack.c.l.b16 %v766
        %v1363 = vunpack.c.h.b16 %v766
        %v1364 = vunpack.c.l.b16 %v767
        %v1365 = vunpack.c.h.b16 %v767
        %v1366 = vunpack.c.l.b16 %v768
        %v1367 = vunpack.c.h.b16 %v768
        %v1368 = vunpack.c.l.b16 %v769
        %v1369 = vunpack.c.h.b16 %v769
        %v1370 = vunpack.c.l.b16 %v770
        %v1371 = vunpack.c.h.b16 %v770
        %v1372 = vunpack.c.l.b16 %v771
        %v1373 = vunpack.c.h.b16 %v771
        %v1374 = vunpack.c.l.b16 %v772
        %v1375 = vunpack.c.h.b16 %v772
        %v1376 = vunpack.c.l.b16 %v773
        %v1377 = vunpack.c.h.b16 %v773
        %v1378 = vunpack.c.l.b16 %v774
        %v1379 = vunpack.c.h.b16 %v774
        %v1380 = vunpack.c.l.b16 %v775
        %v1381 = vunpack.c.h.b16 %v775
        %v1382 = vunpack.c.l.b16 %v776
        %v1383 = vunpack.c.h.b16 %v776
        %v1384 = vunpack.c.l.b16 %v777
        %v1385 = vunpack.c.h.b16 %v777
        %v1386 = vunpack.c.l.b16 %v778
        %v1387 = vunpack.c.h.b16 %v778
        %v1388 = vunpack.c.l.b16 %v779
        %v1389 = vunpack.c.h.b16 %v779
        %v1390 = vunpack.c.l.b16 %v780
        %v1391 = vunpack.c.h.b16 %v780
        %v1392 = vunpack.c.l.b16 %v781
        %v1393 = vunpack.c.h.b16 %v781
        %v1394 = vunpack.c.l.b16 %v782
        %v1395 = vunpack.c.h.b16 %v782
        %v1396 = vunpack.c.l.b16 %v783
        %v1397 = vunpack.c.h.b16 %v783
        %v1398 = vunpack.c.l.b16 %v784
        %v1399 = vunpack.c.h.b16 %v784
        %v1400 = vunpack.c.l.b16 %v785
        %v1401 = vunpack.c.h.b16 %v785
        %v1402 = vunpack.c.l.b16 %v786
        %v1403 = vunpack.c.h.b16 %v786
        %v1404 = vunpack.c.l.b16 %v787
        %v1405 = vunpack.c.h.b16 %v787
        %v1406 = vunpack.c.l.b16 %v788
        %v1407 = vunpack.c.h.b16 %v788
        %v1408 = vunpack.c.l.b16 %v789
        %v1409 = vunpack.c.h.b16 %v789
        %v1410 = vunpack.c.l.b16 %v790
        %v1411 = vunpack.c.h.b16 %v790
        %v1412 = vpack.c.b16 %v1024, %v1020
        %v1413 = vpack.c.b16 %v1025, %v1021
        %v1414 = vpack.c.b16 %v1026, %v1022
        %v1415 = vpack.c.b16 %v1027, %v1023
        %v1416 = vpack.c.b16 %v1032, %v1028
        %v1417 = vpack.c.b16 %v1033, %v1029
        %v1418 = vpack.c.b16 %v1034, %v1030
        %v1419 = vpack.c.b16 %v1035, %v1031
        %v1420 = vpack.c.b16 %v1040, %v1036
        %v1421 = vpack.c.b16 %v1041, %v1037
        %v1422 = vpack.c.b16 %v1042, %v1038
        %v1423 = vpack.c.b16 %v1043, %v1039
        %v1424 = vpack.c.b16 %v1048, %v1044
        %v1425 = vpack.c.b16 %v1049, %v1045
        %v1426 = vpack.c.b16 %v1050, %v1046
        %v1427 = vpack.c.b16 %v1051, %v1047
        %v1428 = vpack.c.b16 %v1056, %v1052
        %v1429 = vpack.c.b16 %v1057, %v1053
        %v1430 = vpack.c.b16 %v1058, %v1054
        %v1431 = vpack.c.b16 %v1059, %v1055
        %v1432 = vpack.c.b16 %v1064, %v1060
        %v1433 = vpack.c.b16 %v1065, %v1061
        %v1434 = vpack.c.b16 %v1066, %v1062
        %v1435 = vpack.c.b16 %v1067, %v1063
        %v1436 = vpack.c.b16 %v1072, %v1068
        %v1437 = vpack.c.b16 %v1073, %v1069
        %v1438 = vpack.c.b16 %v1074, %v1070
        %v1439 = vpack.c.b16 %v1075, %v1071
        %v1440 = vpack.c.b16 %v1080, %v1076
        %v1441 = vpack.c.b16 %v1081, %v1077
        %v1442 = vpack.c.b16 %v1082, %v1078
        %v1443 = vpack.c.b16 %v1083, %v1079
        %v1444 = vpack.c.b16 %v1088, %v1084
        %v1445 = vpack.c.b16 %v1089, %v1085
        %v1446 = vpack.c.b16 %v1090, %v1086
        %v1447 = vpack.c.b16 %v1091, %v1087
        %v1448 = vpack.c.b16 %v1096, %v1092
        %v1449 = vpack.c.b16 %v1097, %v1093
        %v1450 = vpack.c.b16 %v1098, %v1094
        %v1451 = vpack.c.b16 %v1099, %v1095
        %v1452 = vpack.c.b16 %v1104, %v1100
        %v1453 = vpack.c.b16 %v1105, %v1101
        %v1454 = vpack.c.b16 %v1106, %v1102
        %v1455 = vpack.c.b16 %v1107, %v1103
        %v1456 = vpack.c.b16 %v1112, %v1108
        %v1457 = vpack.c.b16 %v1113, %v1109
        %v1458 = vpack.c.b16 %v1114, %v1110
        %v1459 = vpack.c.b16 %v1115, %v1111
        %v1460 = vpack.c.b16 %v1120, %v1116
        %v1461 = vpack.c.b16 %v1121, %v1117
        %v1462 = vpack.c.b16 %v1122, %v1118
        %v1463 = vpack.c.b16 %v1123, %v1119
        %v1464 = vpack.c.b16 %v1128, %v1124
        %v1465 = vpack.c.b16 %v1129, %v1125
        %v1466 = vpack.c.b16 %v1130, %v1126
        %v1467 = vpack.c.b16 %v1131, %v1127
        %v1468 = vpack.c.b16 %v1136, %v1132
        %v1469 = vpack.c.b16 %v1137, %v1133
        %v1470 = vpack.c.b16 %v1138, %v1134
        %v1471 = vpack.c.b16 %v1139, %v1135
        %v1472 = vpack.c.b16 %v1144, %v1140
        %v1473 = vpack.c.b16 %v1145, %v1141
        %v1474 = vpack.c.b16 %v1146, %v1142
        %v1475 = vpack.c.b16 %v1147, %v1143
        %v1476 = vpack.c.b16 %v1152, %v1148
        %v1477 = vpack.c.b16 %v1153, %v1149
        %v1478 = vpack.c.b16 %v1154, %v1150
        %v1479 = vpack.c.b16 %v1155, %v1151
        %v1480 = vpack.c.b16 %v1160, %v1156
        %v1481 = vpack.c.b16 %v1161, %v1157
        %v1482 = vpack.c.b16 %v1162, %v1158
        %v1483 = vpack.c.b16 %v1163, %v1159
        %v1484 = vpack.c.b16 %v1168, %v1164
        %v1485 = vpack.c.b16 %v1169, %v1165
        %v1486 = vpack.c.b16 %v1170, %v1166
        %v1487 = vpack.c.b16 %v1171, %v1167
        %v1488 = vpack.c.b16 %v1176, %v1172
        %v1489 = vpack.c.b16 %v1177, %v1173
        %v1490 = vpack.c.b16 %v1178, %v1174
        %v1491 = vpack.c.b16 %v1179, %v1175
        %v1492 = vpack.c.b16 %v1184, %v1180
        %v1493 = vpack.c.b16 %v1185, %v1181
        %v1494 = vpack.c.b16 %v1186, %v1182
        %v1495 = vpack.c.b16 %v1187, %v1183
        %v1496 = vpack.c.b16 %v1192, %v1188
        %v1497 = vpack.c.b16 %v1193, %v1189
        %v1498 = vpack.c.b16 %v1194, %v1190
        %v1499 = vpack.c.b16 %v1195, %v1191
        %v1500 = vpack.c.b16 %v1200, %v1196
        %v1501 = vpack.c.b16 %v1201, %v1197
        %v1502 = vpack.c.b16 %v1202, %v1198
        %v1503 = vpack.c.b16 %v1203, %v1199
        %v1504 = vpack.c.b16 %v1208, %v1204
        %v1505 = vpack.c.b16 %v1209, %v1205
        %v1506 = vpack.c.b16 %v1210, %v1206
        %v1507 = vpack.c.b16 %v1211, %v1207
        %v1508 = vpack.c.b16 %v1216, %v1212
        %v1509 = vpack.c.b16 %v1217, %v1213
        %v1510 = vpack.c.b16 %v1218, %v1214
        %v1511 = vpack.c.b16 %v1219, %v1215
        %v1512 = vpack.c.b16 %v1224, %v1220
        %v1513 = vpack.c.b16 %v1225, %v1221
        %v1514 = vpack.c.b16 %v1226, %v1222
        %v1515 = vpack.c.b16 %v1227, %v1223
        %v1516 = vpack.c.b16 %v1232, %v1228
        %v1517 = vpack.c.b16 %v1233, %v1229
        %v1518 = vpack.c.b16 %v1234, %v1230
        %v1519 = vpack.c.b16 %v1235, %v1231
        %v1520 = vpack.c.b16 %v1240, %v1236
        %v1521 = vpack.c.b16 %v1241, %v1237
        %v1522 = vpack.c.b16 %v1242, %v1238
        %v1523 = vpack.c.b16 %v1243, %v1239
        %v1524 = vpack.c.b16 %v1248, %v1244
        %v1525 = vpack.c.b16 %v1249, %v1245
        %v1526 = vpack.c.b16 %v1250, %v1246
        %v1527 = vpack.c.b16 %v1251, %v1247
        %v1528 = vpack.c.b16 %v1256, %v1252
        %v1529 = vpack.c.b16 %v1257, %v1253
        %v1530 = vpack.c.b16 %v1258, %v1254
        %v1531 = vpack.c.b16 %v1259, %v1255
        %v1532 = vpack.c.b16 %v1264, %v1260
        %v1533 = vpack.c.b16 %v1265, %v1261
        %v1534 = vpack.c.b16 %v1266, %v1262
        %v1535 = vpack.c.b16 %v1267, %v1263
        %v1536 = vpack.c.b16 %v1272, %v1268
        %v1537 = vpack.c.b16 %v1273, %v1269
        %v1538 = vpack.c.b16 %v1274, %v1270
        %v1539 = vpack.c.b16 %v1275, %v1271
        %v1540 = vpack.c.b16 %v1280, %v1276
        %v1541 = vpack.c.b16 %v1281, %v1277
        %v1542 = vpack.c.b16 %v1282, %v1278
        %v1543 = vpack.c.b16 %v1283, %v1279
        %v1544 = vpack.c.b16 %v1288, %v1284
        %v1545 = vpack.c.b16 %v1289, %v1285
        %v1546 = vpack.c.b16 %v1290, %v1286
        %v1547 = vpack.c.b16 %v1291, %v1287
        %v1548 = vpack.c.b16 %v1296, %v1292
        %v1549 = vpack.c.b16 %v1297, %v1293
        %v1550 = vpack.c.b16 %v1298, %v1294
        %v1551 = vpack.c.b16 %v1299, %v1295
        %v1552 = vpack.c.b16 %v1304, %v1300
        %v1553 = vpack.c.b16 %v1305, %v1301
        %v1554 = vpack.c.b16 %v1306, %v1302
        %v1555 = vpack.c.b16 %v1307, %v1303
        %v1556 = vpack.c.b16 %v1312, %v1308
        %v1557 = vpack.c.b16 %v1313, %v1309
        %v1558 = vpack.c.b16 %v1314, %v1310
        %v1559 = vpack.c.b16 %v1315, %v1311
        %v1560 = vpack.c.b16 %v1320, %v1316
        %v1561 = vpack.c.b16 %v1321, %v1317
        %v1562 = vpack.c.b16 %v1322, %v1318
        %v1563 = vpack.c.b16 %v1323, %v1319
        %v1564 = vpack.c.b16 %v1328, %v1324
        %v1565 = vpack.c.b16 %v1329, %v1325
        %v1566 = vpack.c.b16 %v1330, %v1326
        %v1567 = vpack.c.b16 %v1331, %v1327
        %v1568 = vpack.c.b16 %v1336, %v1332
        %v1569 = vpack.c.b16 %v1337, %v1333
        %v1570 = vpack.c.b16 %v1338, %v1334
        %v1571 = vpack.c.b16 %v1339, %v1335
        %v1572 = vpack.c.b16 %v1344, %v1340
        %v1573 = vpack.c.b16 %v1345, %v1341
        %v1574 = vpack.c.b16 %v1346, %v1342
        %v1575 = vpack.c.b16 %v1347, %v1343
        %v1576 = vpack.c.b16 %v1352, %v1348
        %v1577 = vpack.c.b16 %v1353, %v1349
        %v1578 = vpack.c.b16 %v1354, %v1350
        %v1579 = vpack.c.b16 %v1355, %v1351
        %v1580 = vpack.c.b16 %v1360, %v1356
        %v1581 = vpack.c.b16 %v1361, %v1357
        %v1582 = vpack.c.b16 %v1362, %v1358
        %v1583 = vpack.c.b16 %v1363, %v1359
        %v1584 = vpack.c.b16 %v1368, %v1364
        %v1585 = vpack.c.b16 %v1369, %v1365
        %v1586 = vpack.c.b16 %v1370, %v1366
        %v1587 = vpack.c.b16 %v1371, %v1367
        %v1588 = vpack.c.b16 %v1376, %v1372
        %v1589 = vpack.c.b16 %v1377, %v1373
        %v1590 = vpack.c.b16 %v1378, %v1374
        %v1591 = vpack.c.b16 %v1379, %v1375
        %v1592 = vpack.c.b16 %v1384, %v1380
        %v1593 = vpack.c.b16 %v1385, %v1381
        %v1594 = vpack.c.b16 %v1386, %v1382
        %v1595 = vpack.c.b16 %v1387, %v1383
        %v1596 = vpack.c.b16 %v1392, %v1388
        %v1597 = vpack.c.b16 %v1393, %v1389
        %v1598 = vpack.c.b16 %v1394, %v1390
        %v1599 = vpack.c.b16 %v1395, %v1391
        %v1600 = vpack.c.b16 %v1400, %v1396
        %v1601 = vpack.c.b16 %v1401, %v1397
        %v1602 = vpack.c.b16 %v1402, %v1398
        %v1603 = vpack.c.b16 %v1403, %v1399
        %v1604 = vpack.c.b16 %v1408, %v1404
        %v1605 = vpack.c.b16 %v1409, %v1405
        %v1606 = vpack.c.b16 %v1410, %v1406
        %v1607 = vpack.c.b16 %v1411, %v1407
        %vm1804 = vcmask 130048
        %v1806 = vsel %vm1804, %v594, 0
        %1808 = vmatprep.subr.bf16.mxu0 %v1441
        %1809 = vmatpush1.bf16.msra.mxu0 %v1440
        %1810 = vmatprep.subr.bf16.mxu0 %v1437
        %1811 = vmatpush1.bf16.msra.mxu0 %v1436
        %1812 = vmatprep.subr.bf16.mxu0 %v1433
        %1813 = vmatpush1.bf16.msra.mxu0 %v1432
        %1814 = vmatprep.subr.bf16.mxu0 %v1429
        %1815 = vmatpush1.bf16.msra.mxu0 %v1428
        %1816 = vmatprep.subr.bf16.mxu0 %v1425
        %1817 = vmatpush1.bf16.msra.mxu0 %v1424
        %1818 = vmatprep.subr.bf16.mxu0 %v1421
        %1819 = vmatpush1.bf16.msra.mxu0 %v1420
        %1820 = vmatprep.subr.bf16.mxu0 %v1417
        %1821 = vmatpush1.bf16.msra.mxu0 %v1416
        %1822 = vmatprep.subr.bf16.mxu0 %v1413
        %1823 = vmatpush1.bf16.msra.mxu0 %v1412
        %1824 = vmatprep.subr.bf16.mxu0 %v1473
        %1825 = vmatpush2.bf16.msra.mxu0 %v1472
        %1826 = vmatprep.subr.bf16.mxu0 %v1469
        %1827 = vmatpush2.bf16.msra.mxu0 %v1468
        %1828 = vmatprep.subr.bf16.mxu0 %v1465
        %1829 = vmatpush2.bf16.msra.mxu0 %v1464
        %1830 = vmatprep.subr.bf16.mxu0 %v1461
        %1831 = vmatpush2.bf16.msra.mxu0 %v1460
        %1832 = vmatprep.subr.bf16.mxu0 %v1457
        %1833 = vmatpush2.bf16.msra.mxu0 %v1456
        %1834 = vmatprep.subr.bf16.mxu0 %v1453
        %1835 = vmatpush2.bf16.msra.mxu0 %v1452
        %1836 = vmatprep.subr.bf16.mxu0 %v1449
        %1837 = vmatpush2.bf16.msra.mxu0 %v1448
        %1838 = vmatprep.subr.bf16.mxu0 %v1445
        %1839 = vmatpush2.bf16.msra.mxu0 %v1444
        %1840 = vmatprep.mubr.bf16.mxu0 %v589
        %1841 = vmatmul.mubr.bf16.gmra.mxu0 %v588
        %v1842 = vpop.f32.mrf.mxu0
        %v1843 = vadd.f32 %v820, %v1842
        %v1844 = vpop.f32.mrf.mxu0
        %v1845 = vadd.f32 %v821, %v1844
        %v1846 = vpop.f32.mrf.mxu0
        %v1847 = vpop.f32.mrf.mxu0
        %1848 = vdwg.mxu0
        %1849 = vmatprep.subr.bf16.mxu0 %v1505
        %1850 = vmatpush1.bf16.msra.mxu0 %v1504
        %1851 = vmatprep.subr.bf16.mxu0 %v1501
        %1852 = vmatpush1.bf16.msra.mxu0 %v1500
        %1853 = vmatprep.subr.bf16.mxu0 %v1497
        %1854 = vmatpush1.bf16.msra.mxu0 %v1496
        %1855 = vmatprep.subr.bf16.mxu0 %v1493
        %1856 = vmatpush1.bf16.msra.mxu0 %v1492
        %1857 = vmatprep.subr.bf16.mxu0 %v1489
        %1858 = vmatpush1.bf16.msra.mxu0 %v1488
        %1859 = vmatprep.subr.bf16.mxu0 %v1485
        %1860 = vmatpush1.bf16.msra.mxu0 %v1484
        %1861 = vmatprep.subr.bf16.mxu0 %v1481
        %1862 = vmatpush1.bf16.msra.mxu0 %v1480
        %1863 = vmatprep.subr.bf16.mxu0 %v1477
        %1864 = vmatpush1.bf16.msra.mxu0 %v1476
        %1865 = vmatprep.subr.bf16.mxu0 %v1537
        %1866 = vmatpush2.bf16.msra.mxu0 %v1536
        %1867 = vmatprep.subr.bf16.mxu0 %v1533
        %1868 = vmatpush2.bf16.msra.mxu0 %v1532
        %1869 = vmatprep.subr.bf16.mxu0 %v1529
        %1870 = vmatpush2.bf16.msra.mxu0 %v1528
        %1871 = vmatprep.subr.bf16.mxu0 %v1525
        %1872 = vmatpush2.bf16.msra.mxu0 %v1524
        %1873 = vmatprep.subr.bf16.mxu0 %v1521
        %1874 = vmatpush2.bf16.msra.mxu0 %v1520
        %1875 = vmatprep.subr.bf16.mxu0 %v1517
        %1876 = vmatpush2.bf16.msra.mxu0 %v1516
        %1877 = vmatprep.subr.bf16.mxu0 %v1513
        %1878 = vmatpush2.bf16.msra.mxu0 %v1512
        %1879 = vmatprep.subr.bf16.mxu0 %v1509
        %1880 = vmatpush2.bf16.msra.mxu0 %v1508
        %1881 = vmatprep.mubr.bf16.mxu0 %v591
        %1882 = vmatmul.mubr.bf16.gmra.mxu0 %v590
        %v1883 = vpop.f32.mrf.mxu0
        %v1884 = vadd.f32 %v1843, %v1883
        %v1885 = vpop.f32.mrf.mxu0
        %v1886 = vadd.f32 %v1845, %v1885
        %v1887 = vpop.f32.mrf.mxu0
        %v1888 = vpop.f32.mrf.mxu0
        %1889 = vdwg.mxu0
        %1890 = vmatprep.subr.bf16.mxu0 %v1569
        %1891 = vmatpush1.bf16.msra.mxu0 %v1568
        %1892 = vmatprep.subr.bf16.mxu0 %v1565
        %1893 = vmatpush1.bf16.msra.mxu0 %v1564
        %1894 = vmatprep.subr.bf16.mxu0 %v1561
        %1895 = vmatpush1.bf16.msra.mxu0 %v1560
        %1896 = vmatprep.subr.bf16.mxu0 %v1557
        %1897 = vmatpush1.bf16.msra.mxu0 %v1556
        %1898 = vmatprep.subr.bf16.mxu0 %v1553
        %1899 = vmatpush1.bf16.msra.mxu0 %v1552
        %1900 = vmatprep.subr.bf16.mxu0 %v1549
        %1901 = vmatpush1.bf16.msra.mxu0 %v1548
        %1902 = vmatprep.subr.bf16.mxu0 %v1545
        %1903 = vmatpush1.bf16.msra.mxu0 %v1544
        %1904 = vmatprep.subr.bf16.mxu0 %v1541
        %1905 = vmatpush1.bf16.msra.mxu0 %v1540
        %1906 = vmatprep.subr.bf16.mxu0 %v1601
        %1907 = vmatpush2.bf16.msra.mxu0 %v1600
        %1908 = vmatprep.subr.bf16.mxu0 %v1597
        %1909 = vmatpush2.bf16.msra.mxu0 %v1596
        %1910 = vmatprep.subr.bf16.mxu0 %v1593
        %1911 = vmatpush2.bf16.msra.mxu0 %v1592
        %1912 = vmatprep.subr.bf16.mxu0 %v1589
        %1913 = vmatpush2.bf16.msra.mxu0 %v1588
        %1914 = vmatprep.subr.bf16.mxu0 %v1585
        %1915 = vmatpush2.bf16.msra.mxu0 %v1584
        %1916 = vmatprep.subr.bf16.mxu0 %v1581
        %1917 = vmatpush2.bf16.msra.mxu0 %v1580
        %1918 = vmatprep.subr.bf16.mxu0 %v1577
        %1919 = vmatpush2.bf16.msra.mxu0 %v1576
        %1920 = vmatprep.subr.bf16.mxu0 %v1573
        %1921 = vmatpush2.bf16.msra.mxu0 %v1572
        %1922 = vmatprep.mubr.bf16.mxu0 %v593
        %1923 = vmatmul.mubr.bf16.gmra.mxu0 %v592
        %v1924 = vpop.f32.mrf.mxu0
        %v1925 = vadd.f32 %v1884, %v1924
        %v1926 = vpop.f32.mrf.mxu0
        %v1927 = vadd.f32 %v1886, %v1926
        %v1928 = vpop.f32.mrf.mxu0
        %v1929 = vpop.f32.mrf.mxu0
        %1930 = vdwg.mxu0
        %1931 = vmatprep.subr.bf16.mxu0 0
        %1932 = vmatpush1.bf16.msra.mxu0 0
        %1933 = vmatprep.subr.bf16.mxu0 0
        %1934 = vmatpush1.bf16.msra.mxu0 0
        %1935 = vmatprep.subr.bf16.mxu0 0
        %1936 = vmatpush1.bf16.msra.mxu0 0
        %1937 = vmatprep.subr.bf16.mxu0 0
        %1938 = vmatpush1.bf16.msra.mxu0 0
        %1939 = vmatprep.subr.bf16.mxu0 0
        %1940 = vmatpush1.bf16.msra.mxu0 0
        %1941 = vmatprep.subr.bf16.mxu0 0
        %1942 = vmatpush1.bf16.msra.mxu0 0
        %1943 = vmatprep.subr.bf16.mxu0 0
        %1944 = vmatpush1.bf16.msra.mxu0 0
        %1945 = vmatprep.subr.bf16.mxu0 %v1605
        %1946 = vmatpush1.bf16.msra.mxu0 %v1604
        %1947 = vmatprep.subr.bf16.mxu0 0
        %1948 = vmatpush2.bf16.msra.mxu0 0
        %1949 = vmatprep.subr.bf16.mxu0 0
        %1950 = vmatpush2.bf16.msra.mxu0 0
        %1951 = vmatprep.subr.bf16.mxu0 0
        %1952 = vmatpush2.bf16.msra.mxu0 0
        %1953 = vmatprep.subr.bf16.mxu0 0
        %1954 = vmatpush2.bf16.msra.mxu0 0
        %1955 = vmatprep.subr.bf16.mxu0 0
        %1956 = vmatpush2.bf16.msra.mxu0 0
        %1957 = vmatprep.subr.bf16.mxu0 0
        %1958 = vmatpush2.bf16.msra.mxu0 0
        %1959 = vmatprep.subr.bf16.mxu0 0
        %1960 = vmatpush2.bf16.msra.mxu0 0
        %1961 = vmatprep.subr.bf16.mxu0 0
        %1962 = vmatpush2.bf16.msra.mxu0 0
        %1963 = vmatprep.mubr.bf16.mxu0 0
        %1964 = vmatmul.mubr.bf16.gmra.mxu0 %v1806
        %v1965 = vpop.f32.mrf.mxu0
        %v1966 = vadd.f32 %v1925, %v1965
        %v1967 = vpop.f32.mrf.mxu0
        %v1968 = vadd.f32 %v1927, %v1967
        %v1969 = vpop.f32.mrf.mxu0
        %v1970 = vpop.f32.mrf.mxu0
        %1971 = vdwg.mxu0
        %1972 = vmatprep.subr.bf16.mxu0 %v1443
        %1973 = vmatpush1.bf16.msra.mxu0 %v1442
        %1974 = vmatprep.subr.bf16.mxu0 %v1439
        %1975 = vmatpush1.bf16.msra.mxu0 %v1438
        %1976 = vmatprep.subr.bf16.mxu0 %v1435
        %1977 = vmatpush1.bf16.msra.mxu0 %v1434
        %1978 = vmatprep.subr.bf16.mxu0 %v1431
        %1979 = vmatpush1.bf16.msra.mxu0 %v1430
        %1980 = vmatprep.subr.bf16.mxu0 %v1427
        %1981 = vmatpush1.bf16.msra.mxu0 %v1426
        %1982 = vmatprep.subr.bf16.mxu0 %v1423
        %1983 = vmatpush1.bf16.msra.mxu0 %v1422
        %1984 = vmatprep.subr.bf16.mxu0 %v1419
        %1985 = vmatpush1.bf16.msra.mxu0 %v1418
        %1986 = vmatprep.subr.bf16.mxu0 %v1415
        %1987 = vmatpush1.bf16.msra.mxu0 %v1414
        %1988 = vmatprep.subr.bf16.mxu0 %v1475
        %1989 = vmatpush2.bf16.msra.mxu0 %v1474
        %1990 = vmatprep.subr.bf16.mxu0 %v1471
        %1991 = vmatpush2.bf16.msra.mxu0 %v1470
        %1992 = vmatprep.subr.bf16.mxu0 %v1467
        %1993 = vmatpush2.bf16.msra.mxu0 %v1466
        %1994 = vmatprep.subr.bf16.mxu0 %v1463
        %1995 = vmatpush2.bf16.msra.mxu0 %v1462
        %1996 = vmatprep.subr.bf16.mxu0 %v1459
        %1997 = vmatpush2.bf16.msra.mxu0 %v1458
        %1998 = vmatprep.subr.bf16.mxu0 %v1455
        %1999 = vmatpush2.bf16.msra.mxu0 %v1454
        %2000 = vmatprep.subr.bf16.mxu0 %v1451
        %2001 = vmatpush2.bf16.msra.mxu0 %v1450
        %2002 = vmatprep.subr.bf16.mxu0 %v1447
        %2003 = vmatpush2.bf16.msra.mxu0 %v1446
        %2004 = vmatprep.mubr.bf16.mxu0 %v589
        %2005 = vmatmul.mubr.bf16.gmra.mxu0 %v588
        %v2006 = vpop.f32.mrf.mxu0
        %v2007 = vadd.f32 %v822, %v2006
        %v2008 = vpop.f32.mrf.mxu0
        %v2009 = vadd.f32 %v823, %v2008
        %v2010 = vpop.f32.mrf.mxu0
        %v2011 = vpop.f32.mrf.mxu0
        %2012 = vdwg.mxu0
        %2013 = vmatprep.subr.bf16.mxu0 %v1507
        %2014 = vmatpush1.bf16.msra.mxu0 %v1506
        %2015 = vmatprep.subr.bf16.mxu0 %v1503
        %2016 = vmatpush1.bf16.msra.mxu0 %v1502
        %2017 = vmatprep.subr.bf16.mxu0 %v1499
        %2018 = vmatpush1.bf16.msra.mxu0 %v1498
        %2019 = vmatprep.subr.bf16.mxu0 %v1495
        %2020 = vmatpush1.bf16.msra.mxu0 %v1494
        %2021 = vmatprep.subr.bf16.mxu0 %v1491
        %2022 = vmatpush1.bf16.msra.mxu0 %v1490
        %2023 = vmatprep.subr.bf16.mxu0 %v1487
        %2024 = vmatpush1.bf16.msra.mxu0 %v1486
        %2025 = vmatprep.subr.bf16.mxu0 %v1483
        %2026 = vmatpush1.bf16.msra.mxu0 %v1482
        %2027 = vmatprep.subr.bf16.mxu0 %v1479
        %2028 = vmatpush1.bf16.msra.mxu0 %v1478
        %2029 = vmatprep.subr.bf16.mxu0 %v1539
        %2030 = vmatpush2.bf16.msra.mxu0 %v1538
        %2031 = vmatprep.subr.bf16.mxu0 %v1535
        %2032 = vmatpush2.bf16.msra.mxu0 %v1534
        %2033 = vmatprep.subr.bf16.mxu0 %v1531
        %2034 = vmatpush2.bf16.msra.mxu0 %v1530
        %2035 = vmatprep.subr.bf16.mxu0 %v1527
        %2036 = vmatpush2.bf16.msra.mxu0 %v1526
        %2037 = vmatprep.subr.bf16.mxu0 %v1523
        %2038 = vmatpush2.bf16.msra.mxu0 %v1522
        %2039 = vmatprep.subr.bf16.mxu0 %v1519
        %2040 = vmatpush2.bf16.msra.mxu0 %v1518
        %2041 = vmatprep.subr.bf16.mxu0 %v1515
        %2042 = vmatpush2.bf16.msra.mxu0 %v1514
        %2043 = vmatprep.subr.bf16.mxu0 %v1511
        %2044 = vmatpush2.bf16.msra.mxu0 %v1510
        %2045 = vmatprep.mubr.bf16.mxu0 %v591
        %2046 = vmatmul.mubr.bf16.gmra.mxu0 %v590
        %v2047 = vpop.f32.mrf.mxu0
        %v2048 = vadd.f32 %v2007, %v2047
        %v2049 = vpop.f32.mrf.mxu0
        %v2050 = vadd.f32 %v2009, %v2049
        %v2051 = vpop.f32.mrf.mxu0
        %v2052 = vpop.f32.mrf.mxu0
        %2053 = vdwg.mxu0
        %2054 = vmatprep.subr.bf16.mxu0 %v1571
        %2055 = vmatpush1.bf16.msra.mxu0 %v1570
        %2056 = vmatprep.subr.bf16.mxu0 %v1567
        %2057 = vmatpush1.bf16.msra.mxu0 %v1566
        %2058 = vmatprep.subr.bf16.mxu0 %v1563
        %2059 = vmatpush1.bf16.msra.mxu0 %v1562
        %2060 = vmatprep.subr.bf16.mxu0 %v1559
        %2061 = vmatpush1.bf16.msra.mxu0 %v1558
        %2062 = vmatprep.subr.bf16.mxu0 %v1555
        %2063 = vmatpush1.bf16.msra.mxu0 %v1554
        %2064 = vmatprep.subr.bf16.mxu0 %v1551
        %2065 = vmatpush1.bf16.msra.mxu0 %v1550
        %2066 = vmatprep.subr.bf16.mxu0 %v1547
        %2067 = vmatpush1.bf16.msra.mxu0 %v1546
        %2068 = vmatprep.subr.bf16.mxu0 %v1543
        %2069 = vmatpush1.bf16.msra.mxu0 %v1542
        %2070 = vmatprep.subr.bf16.mxu0 %v1603
        %2071 = vmatpush2.bf16.msra.mxu0 %v1602
        %2072 = vmatprep.subr.bf16.mxu0 %v1599
        %2073 = vmatpush2.bf16.msra.mxu0 %v1598
        %2074 = vmatprep.subr.bf16.mxu0 %v1595
        %2075 = vmatpush2.bf16.msra.mxu0 %v1594
        %2076 = vmatprep.subr.bf16.mxu0 %v1591
        %2077 = vmatpush2.bf16.msra.mxu0 %v1590
        %2078 = vmatprep.subr.bf16.mxu0 %v1587
        %2079 = vmatpush2.bf16.msra.mxu0 %v1586
        %2080 = vmatprep.subr.bf16.mxu0 %v1583
        %2081 = vmatpush2.bf16.msra.mxu0 %v1582
        %2082 = vmatprep.subr.bf16.mxu0 %v1579
        %2083 = vmatpush2.bf16.msra.mxu0 %v1578
        %2084 = vmatprep.subr.bf16.mxu0 %v1575
        %2085 = vmatpush2.bf16.msra.mxu0 %v1574
        %2086 = vmatprep.mubr.bf16.mxu0 %v593
        %2087 = vmatmul.mubr.bf16.gmra.mxu0 %v592
        %v2088 = vpop.f32.mrf.mxu0
        %v2089 = vadd.f32 %v2048, %v2088
        %v2090 = vpop.f32.mrf.mxu0
        %v2091 = vadd.f32 %v2050, %v2090
        %v2092 = vpop.f32.mrf.mxu0
        %v2093 = vpop.f32.mrf.mxu0
        %2094 = vdwg.mxu0
        %2095 = vmatprep.subr.bf16.mxu0 0
        %2096 = vmatpush1.bf16.msra.mxu0 0
        %2097 = vmatprep.subr.bf16.mxu0 0
        %2098 = vmatpush1.bf16.msra.mxu0 0
        %2099 = vmatprep.subr.bf16.mxu0 0
        %2100 = vmatpush1.bf16.msra.mxu0 0
        %2101 = vmatprep.subr.bf16.mxu0 0
        %2102 = vmatpush1.bf16.msra.mxu0 0
        %2103 = vmatprep.subr.bf16.mxu0 0
        %2104 = vmatpush1.bf16.msra.mxu0 0
        %2105 = vmatprep.subr.bf16.mxu0 0
        %2106 = vmatpush1.bf16.msra.mxu0 0
        %2107 = vmatprep.subr.bf16.mxu0 0
        %2108 = vmatpush1.bf16.msra.mxu0 0
        %2109 = vmatprep.subr.bf16.mxu0 %v1607
        %2110 = vmatpush1.bf16.msra.mxu0 %v1606
        %2111 = vmatprep.subr.bf16.mxu0 0
        %2112 = vmatpush2.bf16.msra.mxu0 0
        %2113 = vmatprep.subr.bf16.mxu0 0
        %2114 = vmatpush2.bf16.msra.mxu0 0
        %2115 = vmatprep.subr.bf16.mxu0 0
        %2116 = vmatpush2.bf16.msra.mxu0 0
        %2117 = vmatprep.subr.bf16.mxu0 0
        %2118 = vmatpush2.bf16.msra.mxu0 0
        %2119 = vmatprep.subr.bf16.mxu0 0
        %2120 = vmatpush2.bf16.msra.mxu0 0
        %2121 = vmatprep.subr.bf16.mxu0 0
        %2122 = vmatpush2.bf16.msra.mxu0 0
        %2123 = vmatprep.subr.bf16.mxu0 0
        %2124 = vmatpush2.bf16.msra.mxu0 0
        %2125 = vmatprep.subr.bf16.mxu0 0
        %2126 = vmatpush2.bf16.msra.mxu0 0
        %2127 = vmatprep.mubr.bf16.mxu0 0
        %2128 = vmatmul.mubr.bf16.gmra.mxu0 %v1806
        %v2129 = vpop.f32.mrf.mxu0
        %v2130 = vadd.f32 %v2089, %v2129
        %v2131 = vpop.f32.mrf.mxu0
        %v2132 = vadd.f32 %v2091, %v2131
        %v2133 = vpop.f32.mrf.mxu0
        %v2134 = vpop.f32.mrf.mxu0
        %2135 = vdwg.mxu0
        %2136 = vset.pattern.permute.xlu0 1
        %2137 = vperm.xlu0 %2136, %v586
        %v2138 = vpop.permute.xlu0 %2137
        %v2140 = vlaneseq
        %v2141 = vshrl.u32 %v2140, 7
        %v2142 = vsub.s32 1, %v2141
        %v2143 = vrot.slane %v791, %v2142
        %v2144 = vlaneseq
        %v2145 = vshrl.u32 %v2144, 7
        %v2146 = vsub.s32 1, %v2145
        %v2147 = vrot.slane %v792, %v2146
        %v2148 = vlaneseq
        %v2149 = vshrl.u32 %v2148, 7
        %v2150 = vsub.s32 1, %v2149
        %v2151 = vrot.slane %v793, %v2150
        %v2152 = vlaneseq
        %v2153 = vshrl.u32 %v2152, 7
        %v2154 = vsub.s32 1, %v2153
        %v2155 = vrot.slane %v794, %v2154
        %v2156 = vmul.f32 %v2138, %v2143
        %v2157 = vmul.f32 %v2138, %v2147
        %v2158 = vmul.f32 %v2138, %v2151
        %v2159 = vmul.f32 %v2138, %v2155
        %v2160 = vadd.f32 %v1966, %v2156
        %v2161 = vadd.f32 %v1968, %v2157
        %v2162 = vadd.f32 %v2130, %v2158
        %v2163 = vadd.f32 %v2132, %v2159
        %2164 = vset.pattern.permute.xlu0 2
        %2165 = vperm.xlu0 %2164, %v586
        %v2166 = vpop.permute.xlu0 %2165
        %v2168 = vlaneseq
        %v2169 = vshrl.u32 %v2168, 7
        %v2170 = vsub.s32 2, %v2169
        %v2171 = vrot.slane %v791, %v2170
        %v2172 = vlaneseq
        %v2173 = vshrl.u32 %v2172, 7
        %v2174 = vsub.s32 2, %v2173
        %v2175 = vrot.slane %v792, %v2174
        %v2176 = vlaneseq
        %v2177 = vshrl.u32 %v2176, 7
        %v2178 = vsub.s32 2, %v2177
        %v2179 = vrot.slane %v793, %v2178
        %v2180 = vlaneseq
        %v2181 = vshrl.u32 %v2180, 7
        %v2182 = vsub.s32 2, %v2181
        %v2183 = vrot.slane %v794, %v2182
        %v2184 = vmul.f32 %v2166, %v2171
        %v2185 = vmul.f32 %v2166, %v2175
        %v2186 = vmul.f32 %v2166, %v2179
        %v2187 = vmul.f32 %v2166, %v2183
        %v2188 = vadd.f32 %v2160, %v2184
        %v2189 = vadd.f32 %v2161, %v2185
        %v2190 = vadd.f32 %v2162, %v2186
        %v2191 = vadd.f32 %v2163, %v2187
        %2192 = vset.pattern.permute.xlu0 3
        %2193 = vperm.xlu0 %2192, %v586
        %v2194 = vpop.permute.xlu0 %2193
        %v2196 = vlaneseq
        %v2197 = vshrl.u32 %v2196, 7
        %v2198 = vsub.s32 3, %v2197
        %v2199 = vrot.slane %v791, %v2198
        %v2200 = vlaneseq
        %v2201 = vshrl.u32 %v2200, 7
        %v2202 = vsub.s32 3, %v2201
        %v2203 = vrot.slane %v792, %v2202
        %v2204 = vlaneseq
        %v2205 = vshrl.u32 %v2204, 7
        %v2206 = vsub.s32 3, %v2205
        %v2207 = vrot.slane %v793, %v2206
        %v2208 = vlaneseq
        %v2209 = vshrl.u32 %v2208, 7
        %v2210 = vsub.s32 3, %v2209
        %v2211 = vrot.slane %v794, %v2210
        %v2212 = vmul.f32 %v2194, %v2199
        %v2213 = vmul.f32 %v2194, %v2203
        %v2214 = vmul.f32 %v2194, %v2207
        %v2215 = vmul.f32 %v2194, %v2211
        %v2216 = vadd.f32 %v2188, %v2212
        %v2217 = vadd.f32 %v2189, %v2213
        %v2218 = vadd.f32 %v2190, %v2214
        %v2219 = vadd.f32 %v2191, %v2215
        %2220 = vset.pattern.permute.xlu0 4
        %2221 = vperm.xlu0 %2220, %v586
        %v2222 = vpop.permute.xlu0 %2221
        %v2224 = vlaneseq
        %v2225 = vshrl.u32 %v2224, 7
        %v2226 = vsub.s32 4, %v2225
        %v2227 = vrot.slane %v791, %v2226
        %v2228 = vlaneseq
        %v2229 = vshrl.u32 %v2228, 7
        %v2230 = vsub.s32 4, %v2229
        %v2231 = vrot.slane %v792, %v2230
        %v2232 = vlaneseq
        %v2233 = vshrl.u32 %v2232, 7
        %v2234 = vsub.s32 4, %v2233
        %v2235 = vrot.slane %v793, %v2234
        %v2236 = vlaneseq
        %v2237 = vshrl.u32 %v2236, 7
        %v2238 = vsub.s32 4, %v2237
        %v2239 = vrot.slane %v794, %v2238
        %v2240 = vmul.f32 %v2222, %v2227
        %v2241 = vmul.f32 %v2222, %v2231
        %v2242 = vmul.f32 %v2222, %v2235
        %v2243 = vmul.f32 %v2222, %v2239
        %v2244 = vadd.f32 %v2216, %v2240
        %v2245 = vadd.f32 %v2217, %v2241
        %v2246 = vadd.f32 %v2218, %v2242
        %v2247 = vadd.f32 %v2219, %v2243
        %2248 = vset.pattern.permute.xlu0 5
        %2249 = vperm.xlu0 %2248, %v586
        %v2250 = vpop.permute.xlu0 %2249
        %v2252 = vlaneseq
        %v2253 = vshrl.u32 %v2252, 7
        %v2254 = vsub.s32 5, %v2253
        %v2255 = vrot.slane %v791, %v2254
        %v2256 = vlaneseq
        %v2257 = vshrl.u32 %v2256, 7
        %v2258 = vsub.s32 5, %v2257
        %v2259 = vrot.slane %v792, %v2258
        %v2260 = vlaneseq
        %v2261 = vshrl.u32 %v2260, 7
        %v2262 = vsub.s32 5, %v2261
        %v2263 = vrot.slane %v793, %v2262
        %v2264 = vlaneseq
        %v2265 = vshrl.u32 %v2264, 7
        %v2266 = vsub.s32 5, %v2265
        %v2267 = vrot.slane %v794, %v2266
        %v2268 = vmul.f32 %v2250, %v2255
        %v2269 = vmul.f32 %v2250, %v2259
        %v2270 = vmul.f32 %v2250, %v2263
        %v2271 = vmul.f32 %v2250, %v2267
        %v2272 = vadd.f32 %v2244, %v2268
        %v2273 = vadd.f32 %v2245, %v2269
        %v2274 = vadd.f32 %v2246, %v2270
        %v2275 = vadd.f32 %v2247, %v2271
        %2276 = vset.pattern.permute.xlu0 6
        %2277 = vperm.xlu0 %2276, %v586
        %v2278 = vpop.permute.xlu0 %2277
        %v2280 = vlaneseq
        %v2281 = vshrl.u32 %v2280, 7
        %v2282 = vsub.s32 6, %v2281
        %v2283 = vrot.slane %v791, %v2282
        %v2284 = vlaneseq
        %v2285 = vshrl.u32 %v2284, 7
        %v2286 = vsub.s32 6, %v2285
        %v2287 = vrot.slane %v792, %v2286
        %v2288 = vlaneseq
        %v2289 = vshrl.u32 %v2288, 7
        %v2290 = vsub.s32 6, %v2289
        %v2291 = vrot.slane %v793, %v2290
        %v2292 = vlaneseq
        %v2293 = vshrl.u32 %v2292, 7
        %v2294 = vsub.s32 6, %v2293
        %v2295 = vrot.slane %v794, %v2294
        %v2296 = vmul.f32 %v2278, %v2283
        %v2297 = vmul.f32 %v2278, %v2287
        %v2298 = vmul.f32 %v2278, %v2291
        %v2299 = vmul.f32 %v2278, %v2295
        %v2300 = vadd.f32 %v2272, %v2296
        %v2301 = vadd.f32 %v2273, %v2297
        %v2302 = vadd.f32 %v2274, %v2298
        %v2303 = vadd.f32 %v2275, %v2299
        %2304 = vset.pattern.permute.xlu0 7
        %2305 = vperm.xlu0 %2304, %v586
        %v2306 = vpop.permute.xlu0 %2305
        %v2308 = vlaneseq
        %v2309 = vshrl.u32 %v2308, 7
        %v2310 = vsub.s32 7, %v2309
        %v2311 = vrot.slane %v791, %v2310
        %v2312 = vlaneseq
        %v2313 = vshrl.u32 %v2312, 7
        %v2314 = vsub.s32 7, %v2313
        %v2315 = vrot.slane %v792, %v2314
        %v2316 = vlaneseq
        %v2317 = vshrl.u32 %v2316, 7
        %v2318 = vsub.s32 7, %v2317
        %v2319 = vrot.slane %v793, %v2318
        %v2320 = vlaneseq
        %v2321 = vshrl.u32 %v2320, 7
        %v2322 = vsub.s32 7, %v2321
        %v2323 = vrot.slane %v794, %v2322
        %v2324 = vmul.f32 %v2306, %v2311
        %v2325 = vmul.f32 %v2306, %v2315
        %v2326 = vmul.f32 %v2306, %v2319
        %v2327 = vmul.f32 %v2306, %v2323
        %v2328 = vadd.f32 %v2300, %v2324
        %v2329 = vadd.f32 %v2301, %v2325
        %v2330 = vadd.f32 %v2302, %v2326
        %v2331 = vadd.f32 %v2303, %v2327
        %2332 = vset.pattern.permute.xlu0 8
        %2333 = vperm.xlu0 %2332, %v586
        %v2334 = vpop.permute.xlu0 %2333
        %v2336 = vlaneseq
        %v2337 = vshrl.u32 %v2336, 7
        %v2338 = vsub.s32 0, %v2337
        %v2339 = vrot.slane %v795, %v2338
        %v2340 = vlaneseq
        %v2341 = vshrl.u32 %v2340, 7
        %v2342 = vsub.s32 0, %v2341
        %v2343 = vrot.slane %v796, %v2342
        %v2344 = vlaneseq
        %v2345 = vshrl.u32 %v2344, 7
        %v2346 = vsub.s32 0, %v2345
        %v2347 = vrot.slane %v797, %v2346
        %v2348 = vlaneseq
        %v2349 = vshrl.u32 %v2348, 7
        %v2350 = vsub.s32 0, %v2349
        %v2351 = vrot.slane %v798, %v2350
        %v2352 = vmul.f32 %v2334, %v2339
        %v2353 = vmul.f32 %v2334, %v2343
        %v2354 = vmul.f32 %v2334, %v2347
        %v2355 = vmul.f32 %v2334, %v2351
        %v2356 = vadd.f32 %v2328, %v2352
        %v2357 = vadd.f32 %v2329, %v2353
        %v2358 = vadd.f32 %v2330, %v2354
        %v2359 = vadd.f32 %v2331, %v2355
        %2360 = vset.pattern.permute.xlu0 9
        %2361 = vperm.xlu0 %2360, %v586
        %v2362 = vpop.permute.xlu0 %2361
        %v2364 = vlaneseq
        %v2365 = vshrl.u32 %v2364, 7
        %v2366 = vsub.s32 1, %v2365
        %v2367 = vrot.slane %v795, %v2366
        %v2368 = vlaneseq
        %v2369 = vshrl.u32 %v2368, 7
        %v2370 = vsub.s32 1, %v2369
        %v2371 = vrot.slane %v796, %v2370
        %v2372 = vlaneseq
        %v2373 = vshrl.u32 %v2372, 7
        %v2374 = vsub.s32 1, %v2373
        %v2375 = vrot.slane %v797, %v2374
        %v2376 = vlaneseq
        %v2377 = vshrl.u32 %v2376, 7
        %v2378 = vsub.s32 1, %v2377
        %v2379 = vrot.slane %v798, %v2378
        %v2380 = vmul.f32 %v2362, %v2367
        %v2381 = vmul.f32 %v2362, %v2371
        %v2382 = vmul.f32 %v2362, %v2375
        %v2383 = vmul.f32 %v2362, %v2379
        %v2384 = vadd.f32 %v2356, %v2380
        %v2385 = vadd.f32 %v2357, %v2381
        %v2386 = vadd.f32 %v2358, %v2382
        %v2387 = vadd.f32 %v2359, %v2383
        %v2388 = vld [vmem:[%s5] sm:$0xf]
        %v2390 = vlaneseq
        %v2391 = vshrl.u32 %v2390, 7
        %v2392 = vsub.s32 0, %v2391
        %v2393 = vrot.slane %v2388, %v2392
        %v2394 = vlaneseq
        %v2395 = vshrl.u32 %v2394, 7
        %v2396 = vsub.s32 1, %v2395
        %v2397 = vrot.slane %v2388, %v2396
        %v2398 = vlaneseq
        %v2399 = vshrl.u32 %v2398, 7
        %v2400 = vsub.s32 2, %v2399
        %v2401 = vrot.slane %v2388, %v2400
        %v2402 = vlaneseq
        %v2403 = vshrl.u32 %v2402, 7
        %v2404 = vsub.s32 3, %v2403
        %v2405 = vrot.slane %v2388, %v2404
        %v2410 = vadd.f32 %v2384, %v2393
        %v2411 = vadd.f32 %v2385, %v2397
        %v2412 = vadd.f32 %v2386, %v2401
        %v2413 = vadd.f32 %v2387, %v2405
        %v2414 = vmax.f32 %v2410, 0.0
        %v2415 = vmax.f32 %v2411, 0.0
        %v2416 = vmax.f32 %v2412, 0.0
        %v2417 = vmax.f32 %v2413, 0.0
        %v2418 = vld [vmem:[%s6] sm:$0xff]
        %v2419 = vld [vmem:[%s6 + $0x8] sm:$0xff]
        %v2420 = vld [vmem:[%s6 + $0x10] sm:$0xff]
        %v2421 = vld [vmem:[%s6 + $0x18] sm:$0xff]
        %v2422 = vld [vmem:[%s6 + $0x20] sm:$0xff]
        %v2423 = vld [vmem:[%s6 + $0x28] sm:$0xff]
        %v2424 = vld [vmem:[%s6 + $0x30] sm:$0xff]
        %v2425 = vld [vmem:[%s6 + $0x38] sm:$0xff]
        %v2426 = vld [vmem:[%s6 + $0x40] sm:$0xff]
        %v2427 = vld [vmem:[%s6 + $0x48] sm:$0xff]
        %v2428 = vld [vmem:[%s6 + $0x50] sm:$0xff]
        %v2429 = vld [vmem:[%s6 + $0x58] sm:$0xff]
        %v2430 = vld [vmem:[%s6 + $0x60] sm:$0xff]
        %v2431 = vld [vmem:[%s6 + $0x68] sm:$0xff]
        %v2432 = vld [vmem:[%s6 + $0x70] sm:$0xff]
        %v2433 = vld [vmem:[%s6 + $0x78] sm:$0xff]
        %v2434 = vld [vmem:[%s6 + $0x80] sm:$0xff]
        %v2435 = vld [vmem:[%s6 + $0x88] sm:$0xff]
        %v2436 = vld [vmem:[%s6 + $0x90] sm:$0xff]
        %v2437 = vld [vmem:[%s6 + $0x98] sm:$0xff]
        %v2438 = vld [vmem:[%s6 + $0xa0] sm:$0xff]
        %v2439 = vld [vmem:[%s6 + $0xa8] sm:$0xff]
        %v2440 = vld [vmem:[%s6 + $0xb0] sm:$0xff]
        %v2441 = vld [vmem:[%s6 + $0xb8] sm:$0xff]
        %v2442 = vld [vmem:[%s6 + $0xc0] sm:$0xff]
        %v2443 = vld [vmem:[%s6 + $0xc8] sm:$0xff]
        %v2444 = vld [vmem:[%s6 + $0xd0] sm:$0xff]
        %v2445 = vld [vmem:[%s6 + $0xd8] sm:$0xff]
        %v2446 = vld [vmem:[%s6 + $0xe0] sm:$0xff]
        %v2447 = vld [vmem:[%s6 + $0xe8] sm:$0xff]
        %v2448 = vld [vmem:[%s6 + $0xf0] sm:$0xff]
        %v2449 = vld [vmem:[%s6 + $0xf8] sm:$0xff]
        %v2450 = vld [vmem:[%s6 + $0x100] sm:$0xff]
        %v2451 = vld [vmem:[%s6 + $0x108] sm:$0xff]
        %v2452 = vld [vmem:[%s6 + $0x110] sm:$0xff]
        %v2453 = vld [vmem:[%s6 + $0x118] sm:$0xff]
        %v2454 = vld [vmem:[%s6 + $0x120] sm:$0xff]
        %v2455 = vld [vmem:[%s6 + $0x128] sm:$0xff]
        %v2456 = vld [vmem:[%s6 + $0x130] sm:$0xff]
        %v2457 = vld [vmem:[%s6 + $0x138] sm:$0xff]
        %v2458 = vld [vmem:[%s6 + $0x140] sm:$0xff]
        %v2459 = vld [vmem:[%s6 + $0x148] sm:$0xff]
        %v2460 = vld [vmem:[%s6 + $0x150] sm:$0xff]
        %v2461 = vld [vmem:[%s6 + $0x158] sm:$0xff]
        %v2462 = vld [vmem:[%s6 + $0x160] sm:$0xff]
        %v2463 = vld [vmem:[%s6 + $0x168] sm:$0xff]
        %v2464 = vld [vmem:[%s6 + $0x170] sm:$0xff]
        %v2465 = vld [vmem:[%s6 + $0x178] sm:$0xff]
        %v2466 = vld [vmem:[%s6 + $0x180] sm:$0xff]
        %v2467 = vld [vmem:[%s6 + $0x188] sm:$0xff]
        %v2468 = vld [vmem:[%s6 + $0x190] sm:$0xff]
        %v2469 = vld [vmem:[%s6 + $0x198] sm:$0xff]
        %v2470 = vld [vmem:[%s6 + $0x1a0] sm:$0xff]
        %v2471 = vld [vmem:[%s6 + $0x1a8] sm:$0xff]
        %v2472 = vld [vmem:[%s6 + $0x1b0] sm:$0xff]
        %v2473 = vld [vmem:[%s6 + $0x1b8] sm:$0xff]
        %v2474 = vld [vmem:[%s6 + $0x1c0] sm:$0xff]
        %v2475 = vld [vmem:[%s6 + $0x1c8] sm:$0xff]
        %v2476 = vld [vmem:[%s6 + $0x1d0] sm:$0xff]
        %v2477 = vld [vmem:[%s6 + $0x1d8] sm:$0xff]
        %v2478 = vld [vmem:[%s6 + $0x1e0] sm:$0xff]
        %v2479 = vld [vmem:[%s6 + $0x1e8] sm:$0xff]
        %v2480 = vld [vmem:[%s6 + $0x1f0] sm:$0xff]
        %v2481 = vld [vmem:[%s6 + $0x1f8] sm:$0xff]
        %v2482 = vld [vmem:[%s7] sm:$0x1]
        %v2484 = vlaneseq
        %v2485 = vshrl.u32 %v2484, 7
        %v2486 = vsub.s32 0, %v2485
        %v2487 = vrot.slane %v2482, %v2486
        %2489 = vmatprep.subr.mxu0 0.0
        %2490 = vmatpush1.msra.mxu0 %v2433
        %2491 = vmatprep.subr.mxu0 0.0
        %2492 = vmatpush1.msra.mxu0 %v2432
        %2493 = vmatprep.subr.mxu0 0.0
        %2494 = vmatpush1.msra.mxu0 %v2431
        %2495 = vmatprep.subr.mxu0 0.0
        %2496 = vmatpush1.msra.mxu0 %v2430
        %2497 = vmatprep.subr.mxu0 0.0
        %2498 = vmatpush1.msra.mxu0 %v2429
        %2499 = vmatprep.subr.mxu0 0.0
        %2500 = vmatpush1.msra.mxu0 %v2428
        %2501 = vmatprep.subr.mxu0 0.0
        %2502 = vmatpush1.msra.mxu0 %v2427
        %2503 = vmatprep.subr.mxu0 0.0
        %2504 = vmatpush1.msra.mxu0 %v2426
        %2505 = vmatprep.subr.mxu0 0.0
        %2506 = vmatpush1.msra.mxu0 %v2425
        %2507 = vmatprep.subr.mxu0 0.0
        %2508 = vmatpush1.msra.mxu0 %v2424
        %2509 = vmatprep.subr.mxu0 0.0
        %2510 = vmatpush1.msra.mxu0 %v2423
        %2511 = vmatprep.subr.mxu0 0.0
        %2512 = vmatpush1.msra.mxu0 %v2422
        %2513 = vmatprep.subr.mxu0 0.0
        %2514 = vmatpush1.msra.mxu0 %v2421
        %2515 = vmatprep.subr.mxu0 0.0
        %2516 = vmatpush1.msra.mxu0 %v2420
        %2517 = vmatprep.subr.mxu0 0.0
        %2518 = vmatpush1.msra.mxu0 %v2419
        %2519 = vmatprep.subr.mxu0 0.0
        %2520 = vmatpush1.msra.mxu0 %v2418
        %2521 = vmatprep.subr.mxu0 0.0
        %2522 = vmatpush2.msra.mxu0 %v2449
        %2523 = vmatprep.subr.mxu0 0.0
        %2524 = vmatpush2.msra.mxu0 %v2448
        %2525 = vmatprep.subr.mxu0 0.0
        %2526 = vmatpush2.msra.mxu0 %v2447
        %2527 = vmatprep.subr.mxu0 0.0
        %2528 = vmatpush2.msra.mxu0 %v2446
        %2529 = vmatprep.subr.mxu0 0.0
        %2530 = vmatpush2.msra.mxu0 %v2445
        %2531 = vmatprep.subr.mxu0 0.0
        %2532 = vmatpush2.msra.mxu0 %v2444
        %2533 = vmatprep.subr.mxu0 0.0
        %2534 = vmatpush2.msra.mxu0 %v2443
        %2535 = vmatprep.subr.mxu0 0.0
        %2536 = vmatpush2.msra.mxu0 %v2442
        %2537 = vmatprep.subr.mxu0 0.0
        %2538 = vmatpush2.msra.mxu0 %v2441
        %2539 = vmatprep.subr.mxu0 0.0
        %2540 = vmatpush2.msra.mxu0 %v2440
        %2541 = vmatprep.subr.mxu0 0.0
        %2542 = vmatpush2.msra.mxu0 %v2439
        %2543 = vmatprep.subr.mxu0 0.0
        %2544 = vmatpush2.msra.mxu0 %v2438
        %2545 = vmatprep.subr.mxu0 0.0
        %2546 = vmatpush2.msra.mxu0 %v2437
        %2547 = vmatprep.subr.mxu0 0.0
        %2548 = vmatpush2.msra.mxu0 %v2436
        %2549 = vmatprep.subr.mxu0 0.0
        %2550 = vmatpush2.msra.mxu0 %v2435
        %2551 = vmatprep.subr.mxu0 0.0
        %2552 = vmatpush2.msra.mxu0 %v2434
        %2553 = vmatprep.mubr.f32.mxu0 %v2415
        %2554 = vmatmul.mubr.f32.gmra.mxu0 %v2414
        %v2555 = vpop.f32.mrf.mxu0
        %v2556 = vadd.f32 %v2487, %v2555
        %v2557 = vpop.f32.mrf.mxu0
        %2558 = vdwg.mxu0
        %2559 = vmatprep.subr.mxu0 0.0
        %2560 = vmatpush1.msra.mxu0 %v2465
        %2561 = vmatprep.subr.mxu0 0.0
        %2562 = vmatpush1.msra.mxu0 %v2464
        %2563 = vmatprep.subr.mxu0 0.0
        %2564 = vmatpush1.msra.mxu0 %v2463
        %2565 = vmatprep.subr.mxu0 0.0
        %2566 = vmatpush1.msra.mxu0 %v2462
        %2567 = vmatprep.subr.mxu0 0.0
        %2568 = vmatpush1.msra.mxu0 %v2461
        %2569 = vmatprep.subr.mxu0 0.0
        %2570 = vmatpush1.msra.mxu0 %v2460
        %2571 = vmatprep.subr.mxu0 0.0
        %2572 = vmatpush1.msra.mxu0 %v2459
        %2573 = vmatprep.subr.mxu0 0.0
        %2574 = vmatpush1.msra.mxu0 %v2458
        %2575 = vmatprep.subr.mxu0 0.0
        %2576 = vmatpush1.msra.mxu0 %v2457
        %2577 = vmatprep.subr.mxu0 0.0
        %2578 = vmatpush1.msra.mxu0 %v2456
        %2579 = vmatprep.subr.mxu0 0.0
        %2580 = vmatpush1.msra.mxu0 %v2455
        %2581 = vmatprep.subr.mxu0 0.0
        %2582 = vmatpush1.msra.mxu0 %v2454
        %2583 = vmatprep.subr.mxu0 0.0
        %2584 = vmatpush1.msra.mxu0 %v2453
        %2585 = vmatprep.subr.mxu0 0.0
        %2586 = vmatpush1.msra.mxu0 %v2452
        %2587 = vmatprep.subr.mxu0 0.0
        %2588 = vmatpush1.msra.mxu0 %v2451
        %2589 = vmatprep.subr.mxu0 0.0
        %2590 = vmatpush1.msra.mxu0 %v2450
        %2591 = vmatprep.subr.mxu0 0.0
        %2592 = vmatpush2.msra.mxu0 %v2481
        %2593 = vmatprep.subr.mxu0 0.0
        %2594 = vmatpush2.msra.mxu0 %v2480
        %2595 = vmatprep.subr.mxu0 0.0
        %2596 = vmatpush2.msra.mxu0 %v2479
        %2597 = vmatprep.subr.mxu0 0.0
        %2598 = vmatpush2.msra.mxu0 %v2478
        %2599 = vmatprep.subr.mxu0 0.0
        %2600 = vmatpush2.msra.mxu0 %v2477
        %2601 = vmatprep.subr.mxu0 0.0
        %2602 = vmatpush2.msra.mxu0 %v2476
        %2603 = vmatprep.subr.mxu0 0.0
        %2604 = vmatpush2.msra.mxu0 %v2475
        %2605 = vmatprep.subr.mxu0 0.0
        %2606 = vmatpush2.msra.mxu0 %v2474
        %2607 = vmatprep.subr.mxu0 0.0
        %2608 = vmatpush2.msra.mxu0 %v2473
        %2609 = vmatprep.subr.mxu0 0.0
        %2610 = vmatpush2.msra.mxu0 %v2472
        %2611 = vmatprep.subr.mxu0 0.0
        %2612 = vmatpush2.msra.mxu0 %v2471
        %2613 = vmatprep.subr.mxu0 0.0
        %2614 = vmatpush2.msra.mxu0 %v2470
        %2615 = vmatprep.subr.mxu0 0.0
        %2616 = vmatpush2.msra.mxu0 %v2469
        %2617 = vmatprep.subr.mxu0 0.0
        %2618 = vmatpush2.msra.mxu0 %v2468
        %2619 = vmatprep.subr.mxu0 0.0
        %2620 = vmatpush2.msra.mxu0 %v2467
        %2621 = vmatprep.subr.mxu0 0.0
        %2622 = vmatpush2.msra.mxu0 %v2466
        %2623 = vmatprep.mubr.f32.mxu0 %v2417
        %2624 = vmatmul.mubr.f32.gmra.mxu0 %v2416
        %v2625 = vpop.f32.mrf.mxu0
        %v2626 = vadd.f32 %v2556, %v2625
        %v2627 = vpop.f32.mrf.mxu0
        %2628 = vdwg.mxu0
        %v2629 = vmax.f32 %v2626, 0.0
        %v2630 = vmul.f32 %v2629, 0.5
        %v2631 = vmul.f32 %v2630, 1.442695
        %v2632 = vpow.pop %v2631
        %2634 = vrot.lane.b32.xlu0 %v587, 2
        %v2635 = vpop.permute.xlu0 %2634
        %v2637 = vmul.f32 %v2632, %v2635
        %2639 = vrot.lane.b32.xlu0 %v2637, 126
        %v2640 = vpop.permute.xlu0 %2639
        %v2642 = vadd.f32 %v2629, %v2640
        %v2643 = vld [vmem:[%s8] sm:$0xff]
        %v2644 = vld [vmem:[%s9] sm:$0xff]
        %v2645 = vld [vmem:[%s9 + $0x8] sm:$0xff]
        %v2646 = vld [vmem:[%s9 + $0x10] sm:$0xff]
        %v2647 = vld [vmem:[%s9 + $0x18] sm:$0xff]
        %v2648 = vld [vmem:[%s9 + $0x20] sm:$0x3]
        %v2649 = vld [vmem:[%s9 + $0x28] sm:$0x3]
        %v2650 = vld [vmem:[%s9 + $0x30] sm:$0x3]
        %v2651 = vld [vmem:[%s9 + $0x38] sm:$0x3]
        %2653 = vset.pattern.permute.xlu0 0
        %2654 = vperm.xlu0 %2653, %v2642
        %v2655 = vpop.permute.xlu0 %2654
        %v2658 = vlaneseq
        %v2659 = vshrl.u32 %v2658, 7
        %v2660 = vsub.s32 0, %v2659
        %v2661 = vrot.slane %v2643, %v2660
        %v2662 = vlaneseq
        %v2663 = vshrl.u32 %v2662, 7
        %v2664 = vsub.s32 2, %v2663
        %v2665 = vrot.slane %v2643, %v2664
        %v2666 = vlaneseq
        %v2667 = vshrl.u32 %v2666, 7
        %v2668 = vsub.s32 4, %v2667
        %v2669 = vrot.slane %v2643, %v2668
        %v2670 = vlaneseq
        %v2671 = vshrl.u32 %v2670, 7
        %v2672 = vsub.s32 6, %v2671
        %v2673 = vrot.slane %v2643, %v2672
        %v2678 = vlaneseq
        %v2679 = vshrl.u32 %v2678, 7
        %v2680 = vsub.s32 0, %v2679
        %v2681 = vrot.slane %v2661, %v2680
        %v2682 = vlaneseq
        %v2683 = vshrl.u32 %v2682, 7
        %v2684 = vsub.s32 0, %v2683
        %v2685 = vrot.slane %v2665, %v2684
        %v2686 = vlaneseq
        %v2687 = vshrl.u32 %v2686, 7
        %v2688 = vsub.s32 0, %v2687
        %v2689 = vrot.slane %v2669, %v2688
        %v2690 = vlaneseq
        %v2691 = vshrl.u32 %v2690, 7
        %v2692 = vsub.s32 0, %v2691
        %v2693 = vrot.slane %v2673, %v2692
        %v2694 = vmul.f32 %v2655, %v2681
        %v2695 = vmul.f32 %v2655, %v2685
        %v2696 = vmul.f32 %v2655, %v2689
        %v2697 = vmul.f32 %v2655, %v2693
        %2698 = vset.pattern.permute.xlu0 1
        %2699 = vperm.xlu0 %2698, %v2642
        %v2700 = vpop.permute.xlu0 %2699
        %v2702 = vlaneseq
        %v2703 = vshrl.u32 %v2702, 7
        %v2704 = vsub.s32 1, %v2703
        %v2705 = vrot.slane %v2643, %v2704
        %v2706 = vlaneseq
        %v2707 = vshrl.u32 %v2706, 7
        %v2708 = vsub.s32 3, %v2707
        %v2709 = vrot.slane %v2643, %v2708
        %v2710 = vlaneseq
        %v2711 = vshrl.u32 %v2710, 7
        %v2712 = vsub.s32 5, %v2711
        %v2713 = vrot.slane %v2643, %v2712
        %v2714 = vlaneseq
        %v2715 = vshrl.u32 %v2714, 7
        %v2716 = vsub.s32 7, %v2715
        %v2717 = vrot.slane %v2643, %v2716
        %v2722 = vlaneseq
        %v2723 = vshrl.u32 %v2722, 7
        %v2724 = vsub.s32 1, %v2723
        %v2725 = vrot.slane %v2705, %v2724
        %v2726 = vlaneseq
        %v2727 = vshrl.u32 %v2726, 7
        %v2728 = vsub.s32 1, %v2727
        %v2729 = vrot.slane %v2709, %v2728
        %v2730 = vlaneseq
        %v2731 = vshrl.u32 %v2730, 7
        %v2732 = vsub.s32 1, %v2731
        %v2733 = vrot.slane %v2713, %v2732
        %v2734 = vlaneseq
        %v2735 = vshrl.u32 %v2734, 7
        %v2736 = vsub.s32 1, %v2735
        %v2737 = vrot.slane %v2717, %v2736
        %v2738 = vmul.f32 %v2700, %v2725
        %v2739 = vmul.f32 %v2700, %v2729
        %v2740 = vmul.f32 %v2700, %v2733
        %v2741 = vmul.f32 %v2700, %v2737
        %v2742 = vadd.f32 %v2694, %v2738
        %v2743 = vadd.f32 %v2695, %v2739
        %v2744 = vadd.f32 %v2696, %v2740
        %v2745 = vadd.f32 %v2697, %v2741
        %v2746 = vlaneseq
        %v2747 = vshrl.u32 %v2746, 7
        %v2748 = vsub.s32 0, %v2747
        %v2749 = vrot.slane %v2644, %v2748
        %v2750 = vlaneseq
        %v2751 = vshrl.u32 %v2750, 7
        %v2752 = vsub.s32 0, %v2751
        %v2753 = vrot.slane %v2645, %v2752
        %v2754 = vlaneseq
        %v2755 = vshrl.u32 %v2754, 7
        %v2756 = vsub.s32 0, %v2755
        %v2757 = vrot.slane %v2646, %v2756
        %v2758 = vlaneseq
        %v2759 = vshrl.u32 %v2758, 7
        %v2760 = vsub.s32 0, %v2759
        %v2761 = vrot.slane %v2647, %v2760
        %v2762 = vmul.f32 %v802, %v2749
        %v2763 = vmul.f32 %v802, %v2753
        %v2764 = vmul.f32 %v802, %v2757
        %v2765 = vmul.f32 %v802, %v2761
        %v2766 = vadd.f32 %v2742, %v2762
        %v2767 = vadd.f32 %v2743, %v2763
        %v2768 = vadd.f32 %v2744, %v2764
        %v2769 = vadd.f32 %v2745, %v2765
        %v2770 = vlaneseq
        %v2771 = vshrl.u32 %v2770, 7
        %v2772 = vsub.s32 1, %v2771
        %v2773 = vrot.slane %v2644, %v2772
        %v2774 = vlaneseq
        %v2775 = vshrl.u32 %v2774, 7
        %v2776 = vsub.s32 1, %v2775
        %v2777 = vrot.slane %v2645, %v2776
        %v2778 = vlaneseq
        %v2779 = vshrl.u32 %v2778, 7
        %v2780 = vsub.s32 1, %v2779
        %v2781 = vrot.slane %v2646, %v2780
        %v2782 = vlaneseq
        %v2783 = vshrl.u32 %v2782, 7
        %v2784 = vsub.s32 1, %v2783
        %v2785 = vrot.slane %v2647, %v2784
        %v2786 = vmul.f32 %v2138, %v2773
        %v2787 = vmul.f32 %v2138, %v2777
        %v2788 = vmul.f32 %v2138, %v2781
        %v2789 = vmul.f32 %v2138, %v2785
        %v2790 = vadd.f32 %v2766, %v2786
        %v2791 = vadd.f32 %v2767, %v2787
        %v2792 = vadd.f32 %v2768, %v2788
        %v2793 = vadd.f32 %v2769, %v2789
        %v2794 = vlaneseq
        %v2795 = vshrl.u32 %v2794, 7
        %v2796 = vsub.s32 2, %v2795
        %v2797 = vrot.slane %v2644, %v2796
        %v2798 = vlaneseq
        %v2799 = vshrl.u32 %v2798, 7
        %v2800 = vsub.s32 2, %v2799
        %v2801 = vrot.slane %v2645, %v2800
        %v2802 = vlaneseq
        %v2803 = vshrl.u32 %v2802, 7
        %v2804 = vsub.s32 2, %v2803
        %v2805 = vrot.slane %v2646, %v2804
        %v2806 = vlaneseq
        %v2807 = vshrl.u32 %v2806, 7
        %v2808 = vsub.s32 2, %v2807
        %v2809 = vrot.slane %v2647, %v2808
        %v2810 = vmul.f32 %v2166, %v2797
        %v2811 = vmul.f32 %v2166, %v2801
        %v2812 = vmul.f32 %v2166, %v2805
        %v2813 = vmul.f32 %v2166, %v2809
        %v2814 = vadd.f32 %v2790, %v2810
        %v2815 = vadd.f32 %v2791, %v2811
        %v2816 = vadd.f32 %v2792, %v2812
        %v2817 = vadd.f32 %v2793, %v2813
        %v2818 = vlaneseq
        %v2819 = vshrl.u32 %v2818, 7
        %v2820 = vsub.s32 3, %v2819
        %v2821 = vrot.slane %v2644, %v2820
        %v2822 = vlaneseq
        %v2823 = vshrl.u32 %v2822, 7
        %v2824 = vsub.s32 3, %v2823
        %v2825 = vrot.slane %v2645, %v2824
        %v2826 = vlaneseq
        %v2827 = vshrl.u32 %v2826, 7
        %v2828 = vsub.s32 3, %v2827
        %v2829 = vrot.slane %v2646, %v2828
        %v2830 = vlaneseq
        %v2831 = vshrl.u32 %v2830, 7
        %v2832 = vsub.s32 3, %v2831
        %v2833 = vrot.slane %v2647, %v2832
        %v2834 = vmul.f32 %v2194, %v2821
        %v2835 = vmul.f32 %v2194, %v2825
        %v2836 = vmul.f32 %v2194, %v2829
        %v2837 = vmul.f32 %v2194, %v2833
        %v2838 = vadd.f32 %v2814, %v2834
        %v2839 = vadd.f32 %v2815, %v2835
        %v2840 = vadd.f32 %v2816, %v2836
        %v2841 = vadd.f32 %v2817, %v2837
        %v2842 = vlaneseq
        %v2843 = vshrl.u32 %v2842, 7
        %v2844 = vsub.s32 4, %v2843
        %v2845 = vrot.slane %v2644, %v2844
        %v2846 = vlaneseq
        %v2847 = vshrl.u32 %v2846, 7
        %v2848 = vsub.s32 4, %v2847
        %v2849 = vrot.slane %v2645, %v2848
        %v2850 = vlaneseq
        %v2851 = vshrl.u32 %v2850, 7
        %v2852 = vsub.s32 4, %v2851
        %v2853 = vrot.slane %v2646, %v2852
        %v2854 = vlaneseq
        %v2855 = vshrl.u32 %v2854, 7
        %v2856 = vsub.s32 4, %v2855
        %v2857 = vrot.slane %v2647, %v2856
        %v2858 = vmul.f32 %v2222, %v2845
        %v2859 = vmul.f32 %v2222, %v2849
        %v2860 = vmul.f32 %v2222, %v2853
        %v2861 = vmul.f32 %v2222, %v2857
        %v2862 = vadd.f32 %v2838, %v2858
        %v2863 = vadd.f32 %v2839, %v2859
        %v2864 = vadd.f32 %v2840, %v2860
        %v2865 = vadd.f32 %v2841, %v2861
        %v2866 = vlaneseq
        %v2867 = vshrl.u32 %v2866, 7
        %v2868 = vsub.s32 5, %v2867
        %v2869 = vrot.slane %v2644, %v2868
        %v2870 = vlaneseq
        %v2871 = vshrl.u32 %v2870, 7
        %v2872 = vsub.s32 5, %v2871
        %v2873 = vrot.slane %v2645, %v2872
        %v2874 = vlaneseq
        %v2875 = vshrl.u32 %v2874, 7
        %v2876 = vsub.s32 5, %v2875
        %v2877 = vrot.slane %v2646, %v2876
        %v2878 = vlaneseq
        %v2879 = vshrl.u32 %v2878, 7
        %v2880 = vsub.s32 5, %v2879
        %v2881 = vrot.slane %v2647, %v2880
        %v2882 = vmul.f32 %v2250, %v2869
        %v2883 = vmul.f32 %v2250, %v2873
        %v2884 = vmul.f32 %v2250, %v2877
        %v2885 = vmul.f32 %v2250, %v2881
        %v2886 = vadd.f32 %v2862, %v2882
        %v2887 = vadd.f32 %v2863, %v2883
        %v2888 = vadd.f32 %v2864, %v2884
        %v2889 = vadd.f32 %v2865, %v2885
        %v2890 = vlaneseq
        %v2891 = vshrl.u32 %v2890, 7
        %v2892 = vsub.s32 6, %v2891
        %v2893 = vrot.slane %v2644, %v2892
        %v2894 = vlaneseq
        %v2895 = vshrl.u32 %v2894, 7
        %v2896 = vsub.s32 6, %v2895
        %v2897 = vrot.slane %v2645, %v2896
        %v2898 = vlaneseq
        %v2899 = vshrl.u32 %v2898, 7
        %v2900 = vsub.s32 6, %v2899
        %v2901 = vrot.slane %v2646, %v2900
        %v2902 = vlaneseq
        %v2903 = vshrl.u32 %v2902, 7
        %v2904 = vsub.s32 6, %v2903
        %v2905 = vrot.slane %v2647, %v2904
        %v2906 = vmul.f32 %v2278, %v2893
        %v2907 = vmul.f32 %v2278, %v2897
        %v2908 = vmul.f32 %v2278, %v2901
        %v2909 = vmul.f32 %v2278, %v2905
        %v2910 = vadd.f32 %v2886, %v2906
        %v2911 = vadd.f32 %v2887, %v2907
        %v2912 = vadd.f32 %v2888, %v2908
        %v2913 = vadd.f32 %v2889, %v2909
        %v2914 = vlaneseq
        %v2915 = vshrl.u32 %v2914, 7
        %v2916 = vsub.s32 7, %v2915
        %v2917 = vrot.slane %v2644, %v2916
        %v2918 = vlaneseq
        %v2919 = vshrl.u32 %v2918, 7
        %v2920 = vsub.s32 7, %v2919
        %v2921 = vrot.slane %v2645, %v2920
        %v2922 = vlaneseq
        %v2923 = vshrl.u32 %v2922, 7
        %v2924 = vsub.s32 7, %v2923
        %v2925 = vrot.slane %v2646, %v2924
        %v2926 = vlaneseq
        %v2927 = vshrl.u32 %v2926, 7
        %v2928 = vsub.s32 7, %v2927
        %v2929 = vrot.slane %v2647, %v2928
        %v2930 = vmul.f32 %v2306, %v2917
        %v2931 = vmul.f32 %v2306, %v2921
        %v2932 = vmul.f32 %v2306, %v2925
        %v2933 = vmul.f32 %v2306, %v2929
        %v2934 = vadd.f32 %v2910, %v2930
        %v2935 = vadd.f32 %v2911, %v2931
        %v2936 = vadd.f32 %v2912, %v2932
        %v2937 = vadd.f32 %v2913, %v2933
        %v2938 = vlaneseq
        %v2939 = vshrl.u32 %v2938, 7
        %v2940 = vsub.s32 0, %v2939
        %v2941 = vrot.slane %v2648, %v2940
        %v2942 = vlaneseq
        %v2943 = vshrl.u32 %v2942, 7
        %v2944 = vsub.s32 0, %v2943
        %v2945 = vrot.slane %v2649, %v2944
        %v2946 = vlaneseq
        %v2947 = vshrl.u32 %v2946, 7
        %v2948 = vsub.s32 0, %v2947
        %v2949 = vrot.slane %v2650, %v2948
        %v2950 = vlaneseq
        %v2951 = vshrl.u32 %v2950, 7
        %v2952 = vsub.s32 0, %v2951
        %v2953 = vrot.slane %v2651, %v2952
        %v2954 = vmul.f32 %v2334, %v2941
        %v2955 = vmul.f32 %v2334, %v2945
        %v2956 = vmul.f32 %v2334, %v2949
        %v2957 = vmul.f32 %v2334, %v2953
        %v2958 = vadd.f32 %v2934, %v2954
        %v2959 = vadd.f32 %v2935, %v2955
        %v2960 = vadd.f32 %v2936, %v2956
        %v2961 = vadd.f32 %v2937, %v2957
        %v2962 = vlaneseq
        %v2963 = vshrl.u32 %v2962, 7
        %v2964 = vsub.s32 1, %v2963
        %v2965 = vrot.slane %v2648, %v2964
        %v2966 = vlaneseq
        %v2967 = vshrl.u32 %v2966, 7
        %v2968 = vsub.s32 1, %v2967
        %v2969 = vrot.slane %v2649, %v2968
        %v2970 = vlaneseq
        %v2971 = vshrl.u32 %v2970, 7
        %v2972 = vsub.s32 1, %v2971
        %v2973 = vrot.slane %v2650, %v2972
        %v2974 = vlaneseq
        %v2975 = vshrl.u32 %v2974, 7
        %v2976 = vsub.s32 1, %v2975
        %v2977 = vrot.slane %v2651, %v2976
        %v2978 = vmul.f32 %v2362, %v2965
        %v2979 = vmul.f32 %v2362, %v2969
        %v2980 = vmul.f32 %v2362, %v2973
        %v2981 = vmul.f32 %v2362, %v2977
        %v2982 = vadd.f32 %v2958, %v2978
        %v2983 = vadd.f32 %v2959, %v2979
        %v2984 = vadd.f32 %v2960, %v2980
        %v2985 = vadd.f32 %v2961, %v2981
        %v2986 = vld [vmem:[%s10] sm:$0xf]
        %v2988 = vlaneseq
        %v2989 = vshrl.u32 %v2988, 7
        %v2990 = vsub.s32 0, %v2989
        %v2991 = vrot.slane %v2986, %v2990
        %v2992 = vlaneseq
        %v2993 = vshrl.u32 %v2992, 7
        %v2994 = vsub.s32 1, %v2993
        %v2995 = vrot.slane %v2986, %v2994
        %v2996 = vlaneseq
        %v2997 = vshrl.u32 %v2996, 7
        %v2998 = vsub.s32 2, %v2997
        %v2999 = vrot.slane %v2986, %v2998
        %v3000 = vlaneseq
        %v3001 = vshrl.u32 %v3000, 7
        %v3002 = vsub.s32 3, %v3001
        %v3003 = vrot.slane %v2986, %v3002
        %v3008 = vadd.f32 %v2982, %v2991
        %v3009 = vadd.f32 %v2983, %v2995
        %v3010 = vadd.f32 %v2984, %v2999
        %v3011 = vadd.f32 %v2985, %v3003
        %v3012 = vmax.f32 %v3008, 0.0
        %v3013 = vmax.f32 %v3009, 0.0
        %v3014 = vmax.f32 %v3010, 0.0
        %v3015 = vmax.f32 %v3011, 0.0
        %v3016 = vpack.c.bf16 %v3012, %v3012
        %v3017 = vpack.c.bf16 %v3013, %v3013
        %v3018 = vpack.c.bf16 %v3014, %v3014
        %v3019 = vpack.c.bf16 %v3015, %v3015
        %v3020 = vld [vmem:[#allocation5] sm:$0xff]
        %v3021 = vld [vmem:[#allocation5 + $0x8] sm:$0xff]
        %v3022 = vld [vmem:[#allocation5 + $0x10] sm:$0xff]
        %v3023 = vld [vmem:[#allocation5 + $0x18] sm:$0xf]
        %v3024 = vld [vmem:[#allocation5 + $0x1c] sm:$0xff]
        %v3025 = vld [vmem:[#allocation5 + $0x24] sm:$0xff]
        %v3026 = vld [vmem:[#allocation5 + $0x2c] sm:$0xff]
        %v3027 = vld [vmem:[#allocation5 + $0x34] sm:$0xf]
        %v3028 = vld [vmem:[#allocation5 + $0x38] sm:$0xff]
        %v3029 = vld [vmem:[#allocation5 + $0x40] sm:$0xff]
        %v3030 = vld [vmem:[#allocation5 + $0x48] sm:$0xff]
        %v3031 = vld [vmem:[#allocation5 + $0x50] sm:$0xf]
        %v3032 = vld [vmem:[#allocation5 + $0x54] sm:$0xff]
        %v3033 = vld [vmem:[#allocation5 + $0x5c] sm:$0xff]
        %v3034 = vld [vmem:[#allocation5 + $0x64] sm:$0xff]
        %v3035 = vld [vmem:[#allocation5 + $0x6c] sm:$0xf]
        %v3036 = vld [vmem:[#allocation5 + $0x70] sm:$0xff]
        %v3037 = vld [vmem:[#allocation5 + $0x78] sm:$0xff]
        %v3038 = vld [vmem:[#allocation5 + $0x80] sm:$0xff]
        %v3039 = vld [vmem:[#allocation5 + $0x88] sm:$0xf]
        %v3040 = vld [vmem:[#allocation5 + $0x8c] sm:$0xff]
        %v3041 = vld [vmem:[#allocation5 + $0x94] sm:$0xff]
        %v3042 = vld [vmem:[#allocation5 + $0x9c] sm:$0xff]
        %v3043 = vld [vmem:[#allocation5 + $0xa4] sm:$0xf]
        %v3044 = vld [vmem:[#allocation5 + $0xa8] sm:$0xff]
        %v3045 = vld [vmem:[#allocation5 + $0xb0] sm:$0xff]
        %v3046 = vld [vmem:[#allocation5 + $0xb8] sm:$0xff]
        %v3047 = vld [vmem:[#allocation5 + $0xc0] sm:$0xf]
        %v3048 = vld [vmem:[#allocation5 + $0xc4] sm:$0xff]
        %v3049 = vld [vmem:[#allocation5 + $0xcc] sm:$0xff]
        %v3050 = vld [vmem:[#allocation5 + $0xd4] sm:$0xff]
        %v3051 = vld [vmem:[#allocation5 + $0xdc] sm:$0xf]
        %v3052 = vld [vmem:[#allocation5 + $0xe0] sm:$0xff]
        %v3053 = vld [vmem:[#allocation5 + $0xe8] sm:$0xff]
        %v3054 = vld [vmem:[#allocation5 + $0xf0] sm:$0xff]
        %v3055 = vld [vmem:[#allocation5 + $0xf8] sm:$0xf]
        %v3056 = vld [vmem:[#allocation5 + $0xfc] sm:$0xff]
        %v3057 = vld [vmem:[#allocation5 + $0x104] sm:$0xff]
        %v3058 = vld [vmem:[#allocation5 + $0x10c] sm:$0xff]
        %v3059 = vld [vmem:[#allocation5 + $0x114] sm:$0xf]
        %v3060 = vld [vmem:[#allocation5 + $0x118] sm:$0xff]
        %v3061 = vld [vmem:[#allocation5 + $0x120] sm:$0xff]
        %v3062 = vld [vmem:[#allocation5 + $0x128] sm:$0xff]
        %v3063 = vld [vmem:[#allocation5 + $0x130] sm:$0xf]
        %v3064 = vld [vmem:[#allocation5 + $0x134] sm:$0xff]
        %v3065 = vld [vmem:[#allocation5 + $0x13c] sm:$0xff]
        %v3066 = vld [vmem:[#allocation5 + $0x144] sm:$0xff]
        %v3067 = vld [vmem:[#allocation5 + $0x14c] sm:$0xf]
        %v3068 = vld [vmem:[#allocation5 + $0x150] sm:$0xff]
        %v3069 = vld [vmem:[#allocation5 + $0x158] sm:$0xff]
        %v3070 = vld [vmem:[#allocation5 + $0x160] sm:$0xff]
        %v3071 = vld [vmem:[#allocation5 + $0x168] sm:$0xf]
        %v3072 = vld [vmem:[#allocation5 + $0x16c] sm:$0xff]
        %v3073 = vld [vmem:[#allocation5 + $0x174] sm:$0xff]
        %v3074 = vld [vmem:[#allocation5 + $0x17c] sm:$0xff]
        %v3075 = vld [vmem:[#allocation5 + $0x184] sm:$0xf]
        %v3076 = vld [vmem:[#allocation5 + $0x188] sm:$0xff]
        %v3077 = vld [vmem:[#allocation5 + $0x190] sm:$0xff]
        %v3078 = vld [vmem:[#allocation5 + $0x198] sm:$0xff]
        %v3079 = vld [vmem:[#allocation5 + $0x1a0] sm:$0xf]
        %v3080 = vld [vmem:[#allocation5 + $0x1a4] sm:$0xff]
        %v3081 = vld [vmem:[#allocation5 + $0x1ac] sm:$0xff]
        %v3082 = vld [vmem:[#allocation5 + $0x1b4] sm:$0xff]
        %v3083 = vld [vmem:[#allocation5 + $0x1bc] sm:$0xf]
        %v3084 = vld [vmem:[#allocation5 + $0x1c0] sm:$0xff]
        %v3085 = vld [vmem:[#allocation5 + $0x1c8] sm:$0xff]
        %v3086 = vld [vmem:[#allocation5 + $0x1d0] sm:$0xff]
        %v3087 = vld [vmem:[#allocation5 + $0x1d8] sm:$0xf]
        %v3088 = vld [vmem:[#allocation5 + $0x1dc] sm:$0xff]
        %v3089 = vld [vmem:[#allocation5 + $0x1e4] sm:$0xff]
        %v3090 = vld [vmem:[#allocation5 + $0x1ec] sm:$0xff]
        %v3091 = vld [vmem:[#allocation5 + $0x1f4] sm:$0xf]
        %v3092 = vld [vmem:[#allocation5 + $0x1f8] sm:$0xff]
        %v3093 = vld [vmem:[#allocation5 + $0x200] sm:$0xff]
        %v3094 = vld [vmem:[#allocation5 + $0x208] sm:$0xff]
        %v3095 = vld [vmem:[#allocation5 + $0x210] sm:$0xf]
        %v3096 = vld [vmem:[#allocation5 + $0x214] sm:$0xff]
        %v3097 = vld [vmem:[#allocation5 + $0x21c] sm:$0xff]
        %v3098 = vld [vmem:[#allocation5 + $0x224] sm:$0xff]
        %v3099 = vld [vmem:[#allocation5 + $0x22c] sm:$0xf]
        %v3100 = vld [vmem:[#allocation5 + $0x230] sm:$0xff]
        %v3101 = vld [vmem:[#allocation5 + $0x238] sm:$0xff]
        %v3102 = vld [vmem:[#allocation5 + $0x240] sm:$0xff]
        %v3103 = vld [vmem:[#allocation5 + $0x248] sm:$0xf]
        %v3104 = vld [vmem:[#allocation5 + $0x24c] sm:$0xff]
        %v3105 = vld [vmem:[#allocation5 + $0x254] sm:$0xff]
        %v3106 = vld [vmem:[#allocation5 + $0x25c] sm:$0xff]
        %v3107 = vld [vmem:[#allocation5 + $0x264] sm:$0xf]
        %v3108 = vld [vmem:[#allocation5 + $0x268] sm:$0xff]
        %v3109 = vld [vmem:[#allocation5 + $0x270] sm:$0xff]
        %v3110 = vld [vmem:[#allocation5 + $0x278] sm:$0xff]
        %v3111 = vld [vmem:[#allocation5 + $0x280] sm:$0xf]
        %v3112 = vld [vmem:[#allocation5 + $0x284] sm:$0xff]
        %v3113 = vld [vmem:[#allocation5 + $0x28c] sm:$0xff]
        %v3114 = vld [vmem:[#allocation5 + $0x294] sm:$0xff]
        %v3115 = vld [vmem:[#allocation5 + $0x29c] sm:$0xf]
        %v3116 = vld [vmem:[#allocation5 + $0x2a0] sm:$0xff]
        %v3117 = vld [vmem:[#allocation5 + $0x2a8] sm:$0xff]
        %v3118 = vld [vmem:[#allocation5 + $0x2b0] sm:$0xff]
        %v3119 = vld [vmem:[#allocation5 + $0x2b8] sm:$0xf]
        %v3120 = vld [vmem:[#allocation5 + $0x2bc] sm:$0xff]
        %v3121 = vld [vmem:[#allocation5 + $0x2c4] sm:$0xff]
        %v3122 = vld [vmem:[#allocation5 + $0x2cc] sm:$0xff]
        %v3123 = vld [vmem:[#allocation5 + $0x2d4] sm:$0xf]
        %v3124 = vld [vmem:[#allocation5 + $0x2d8] sm:$0xff]
        %v3125 = vld [vmem:[#allocation5 + $0x2e0] sm:$0xff]
        %v3126 = vld [vmem:[#allocation5 + $0x2e8] sm:$0xff]
        %v3127 = vld [vmem:[#allocation5 + $0x2f0] sm:$0xf]
        %v3128 = vld [vmem:[#allocation5 + $0x2f4] sm:$0xff]
        %v3129 = vld [vmem:[#allocation5 + $0x2fc] sm:$0xff]
        %v3130 = vld [vmem:[#allocation5 + $0x304] sm:$0xff]
        %v3131 = vld [vmem:[#allocation5 + $0x30c] sm:$0xf]
        %v3132 = vld [vmem:[#allocation5 + $0x310] sm:$0xff]
        %v3133 = vld [vmem:[#allocation5 + $0x318] sm:$0xff]
        %v3134 = vld [vmem:[#allocation5 + $0x320] sm:$0xff]
        %v3135 = vld [vmem:[#allocation5 + $0x328] sm:$0xf]
        %v3136 = vld [vmem:[#allocation5 + $0x32c] sm:$0xff]
        %v3137 = vld [vmem:[#allocation5 + $0x334] sm:$0xff]
        %v3138 = vld [vmem:[#allocation5 + $0x33c] sm:$0xff]
        %v3139 = vld [vmem:[#allocation5 + $0x344] sm:$0xf]
        %v3140 = vld [vmem:[#allocation5 + $0x348] sm:$0xff]
        %v3141 = vld [vmem:[#allocation5 + $0x350] sm:$0xff]
        %v3142 = vld [vmem:[#allocation5 + $0x358] sm:$0xff]
        %v3143 = vld [vmem:[#allocation5 + $0x360] sm:$0xf]
        %v3144 = vld [vmem:[#allocation5 + $0x364] sm:$0xff]
        %v3145 = vld [vmem:[#allocation5 + $0x36c] sm:$0xff]
        %v3146 = vld [vmem:[#allocation5 + $0x374] sm:$0xff]
        %v3147 = vld [vmem:[#allocation5 + $0x37c] sm:$0xf]
        %v3148 = vld [vmem:[#allocation5 + $0x380] sm:$0xff]
        %v3149 = vld [vmem:[#allocation5 + $0x388] sm:$0xff]
        %v3150 = vld [vmem:[#allocation5 + $0x390] sm:$0xff]
        %v3151 = vld [vmem:[#allocation5 + $0x398] sm:$0xf]
        %v3152 = vld [vmem:[#allocation5 + $0x39c] sm:$0xff]
        %v3153 = vld [vmem:[#allocation5 + $0x3a4] sm:$0xff]
        %v3154 = vld [vmem:[#allocation5 + $0x3ac] sm:$0xff]
        %v3155 = vld [vmem:[#allocation5 + $0x3b4] sm:$0xf]
        %v3156 = vld [vmem:[#allocation5 + $0x3b8] sm:$0xff]
        %v3157 = vld [vmem:[#allocation5 + $0x3c0] sm:$0xff]
        %v3158 = vld [vmem:[#allocation5 + $0x3c8] sm:$0xff]
        %v3159 = vld [vmem:[#allocation5 + $0x3d0] sm:$0xf]
        %v3160 = vld [vmem:[#allocation5 + $0x3d4] sm:$0xff]
        %v3161 = vld [vmem:[#allocation5 + $0x3dc] sm:$0xff]
        %v3162 = vld [vmem:[#allocation5 + $0x3e4] sm:$0xff]
        %v3163 = vld [vmem:[#allocation5 + $0x3ec] sm:$0xf]
        %v3164 = vld [vmem:[#allocation5 + $0x3f0] sm:$0xff]
        %v3165 = vld [vmem:[#allocation5 + $0x3f8] sm:$0xff]
        %v3166 = vld [vmem:[#allocation5 + $0x400] sm:$0xff]
        %v3167 = vld [vmem:[#allocation5 + $0x408] sm:$0xf]
        %v3168 = vld [vmem:[#allocation5 + $0x40c] sm:$0xff]
        %v3169 = vld [vmem:[#allocation5 + $0x414] sm:$0xff]
        %v3170 = vld [vmem:[#allocation5 + $0x41c] sm:$0xff]
        %v3171 = vld [vmem:[#allocation5 + $0x424] sm:$0xf]
        %v3172 = vld [vmem:[#allocation5 + $0x428] sm:$0xff]
        %v3173 = vld [vmem:[#allocation5 + $0x430] sm:$0xff]
        %v3174 = vld [vmem:[#allocation5 + $0x438] sm:$0xff]
        %v3175 = vld [vmem:[#allocation5 + $0x440] sm:$0xf]
        %v3176 = vld [vmem:[#allocation5 + $0x444] sm:$0xff]
        %v3177 = vld [vmem:[#allocation5 + $0x44c] sm:$0xff]
        %v3178 = vld [vmem:[#allocation5 + $0x454] sm:$0xff]
        %v3179 = vld [vmem:[#allocation5 + $0x45c] sm:$0xf]
        %v3180 = vld [vmem:[#allocation5 + $0x460] sm:$0xff]
        %v3181 = vld [vmem:[#allocation5 + $0x468] sm:$0xff]
        %v3182 = vld [vmem:[#allocation5 + $0x470] sm:$0xff]
        %v3183 = vld [vmem:[#allocation5 + $0x478] sm:$0xf]
        %v3184 = vld [vmem:[#allocation5 + $0x47c] sm:$0xff]
        %v3185 = vld [vmem:[#allocation5 + $0x484] sm:$0xff]
        %v3186 = vld [vmem:[#allocation5 + $0x48c] sm:$0xff]
        %v3187 = vld [vmem:[#allocation5 + $0x494] sm:$0xf]
        %v3188 = vld [vmem:[#allocation5 + $0x498] sm:$0xff]
        %v3189 = vld [vmem:[#allocation5 + $0x4a0] sm:$0xff]
        %v3190 = vld [vmem:[#allocation5 + $0x4a8] sm:$0xff]
        %v3191 = vld [vmem:[#allocation5 + $0x4b0] sm:$0xf]
        %v3192 = vld [vmem:[#allocation5 + $0x4b4] sm:$0xff]
        %v3193 = vld [vmem:[#allocation5 + $0x4bc] sm:$0xff]
        %v3194 = vld [vmem:[#allocation5 + $0x4c4] sm:$0xff]
        %v3195 = vld [vmem:[#allocation5 + $0x4cc] sm:$0xf]
        %v3196 = vld [vmem:[#allocation5 + $0x4d0] sm:$0xff]
        %v3197 = vld [vmem:[#allocation5 + $0x4d8] sm:$0xff]
        %v3198 = vld [vmem:[#allocation5 + $0x4e0] sm:$0xff]
        %v3199 = vld [vmem:[#allocation5 + $0x4e8] sm:$0xf]
        %v3200 = vld [vmem:[#allocation5 + $0x4ec] sm:$0xff]
        %v3201 = vld [vmem:[#allocation5 + $0x4f4] sm:$0xff]
        %v3202 = vld [vmem:[#allocation5 + $0x4fc] sm:$0xff]
        %v3203 = vld [vmem:[#allocation5 + $0x504] sm:$0xf]
        %v3204 = vld [vmem:[#allocation5 + $0x508] sm:$0xff]
        %v3205 = vld [vmem:[#allocation5 + $0x510] sm:$0xff]
        %v3206 = vld [vmem:[#allocation5 + $0x518] sm:$0xff]
        %v3207 = vld [vmem:[#allocation5 + $0x520] sm:$0xf]
        %v3208 = vld [vmem:[#allocation5 + $0x524] sm:$0xff]
        %v3209 = vld [vmem:[#allocation5 + $0x52c] sm:$0xff]
        %v3210 = vld [vmem:[#allocation5 + $0x534] sm:$0xff]
        %v3211 = vld [vmem:[#allocation5 + $0x53c] sm:$0xf]
        %v3212 = vld [vmem:[#allocation5 + $0x540] sm:$0xff]
        %v3213 = vld [vmem:[#allocation5 + $0x548] sm:$0xff]
        %v3214 = vld [vmem:[#allocation5 + $0x550] sm:$0xff]
        %v3215 = vld [vmem:[#allocation5 + $0x558] sm:$0xf]
        %v3216 = vld [vmem:[#allocation5 + $0x55c] sm:$0xff]
        %v3217 = vld [vmem:[#allocation5 + $0x564] sm:$0xff]
        %v3218 = vld [vmem:[#allocation5 + $0x56c] sm:$0xff]
        %v3219 = vld [vmem:[#allocation5 + $0x574] sm:$0xf]
        %v3220 = vld [vmem:[#allocation5 + $0x578] sm:$0xff]
        %v3221 = vld [vmem:[#allocation5 + $0x580] sm:$0xff]
        %v3222 = vld [vmem:[#allocation5 + $0x588] sm:$0xff]
        %v3223 = vld [vmem:[#allocation5 + $0x590] sm:$0xf]
        %v3224 = vld [vmem:[#allocation5 + $0x594] sm:$0xff]
        %v3225 = vld [vmem:[#allocation5 + $0x59c] sm:$0xff]
        %v3226 = vld [vmem:[#allocation5 + $0x5a4] sm:$0xff]
        %v3227 = vld [vmem:[#allocation5 + $0x5ac] sm:$0xf]
        %v3228 = vld [vmem:[#allocation5 + $0x5b0] sm:$0xff]
        %v3229 = vld [vmem:[#allocation5 + $0x5b8] sm:$0xff]
        %v3230 = vld [vmem:[#allocation5 + $0x5c0] sm:$0xff]
        %v3231 = vld [vmem:[#allocation5 + $0x5c8] sm:$0xf]
        %v3232 = vld [vmem:[#allocation5 + $0x5cc] sm:$0xff]
        %v3233 = vld [vmem:[#allocation5 + $0x5d4] sm:$0xff]
        %v3234 = vld [vmem:[#allocation5 + $0x5dc] sm:$0xff]
        %v3235 = vld [vmem:[#allocation5 + $0x5e4] sm:$0xf]
        %v3236 = vld [vmem:[#allocation5 + $0x5e8] sm:$0xff]
        %v3237 = vld [vmem:[#allocation5 + $0x5f0] sm:$0xff]
        %v3238 = vld [vmem:[#allocation5 + $0x5f8] sm:$0xff]
        %v3239 = vld [vmem:[#allocation5 + $0x600] sm:$0xf]
        %v3240 = vld [vmem:[#allocation5 + $0x604] sm:$0xff]
        %v3241 = vld [vmem:[#allocation5 + $0x60c] sm:$0xff]
        %v3242 = vld [vmem:[#allocation5 + $0x614] sm:$0xff]
        %v3243 = vld [vmem:[#allocation5 + $0x61c] sm:$0xf]
        %v3244 = vld [vmem:[#allocation5 + $0x620] sm:$0xff]
        %v3245 = vld [vmem:[#allocation5 + $0x628] sm:$0xff]
        %v3246 = vld [vmem:[#allocation5 + $0x630] sm:$0xff]
        %v3247 = vld [vmem:[#allocation5 + $0x638] sm:$0xf]
        %v3248 = vld [vmem:[#allocation5 + $0x63c] sm:$0xff]
        %v3249 = vld [vmem:[#allocation5 + $0x644] sm:$0xff]
        %v3250 = vld [vmem:[#allocation5 + $0x64c] sm:$0xff]
        %v3251 = vld [vmem:[#allocation5 + $0x654] sm:$0xf]
        %v3252 = vld [vmem:[#allocation5 + $0x658] sm:$0xff]
        %v3253 = vld [vmem:[#allocation5 + $0x660] sm:$0xff]
        %v3254 = vld [vmem:[#allocation5 + $0x668] sm:$0xff]
        %v3255 = vld [vmem:[#allocation5 + $0x670] sm:$0xf]
        %v3256 = vld [vmem:[#allocation5 + $0x674] sm:$0xff]
        %v3257 = vld [vmem:[#allocation5 + $0x67c] sm:$0xff]
        %v3258 = vld [vmem:[#allocation5 + $0x684] sm:$0xff]
        %v3259 = vld [vmem:[#allocation5 + $0x68c] sm:$0xf]
        %v3260 = vld [vmem:[#allocation5 + $0x690] sm:$0xff]
        %v3261 = vld [vmem:[#allocation5 + $0x698] sm:$0xff]
        %v3262 = vld [vmem:[#allocation5 + $0x6a0] sm:$0xff]
        %v3263 = vld [vmem:[#allocation5 + $0x6a8] sm:$0xf]
        %v3264 = vld [vmem:[#allocation5 + $0x6ac] sm:$0xff]
        %v3265 = vld [vmem:[#allocation5 + $0x6b4] sm:$0xff]
        %v3266 = vld [vmem:[#allocation5 + $0x6bc] sm:$0xff]
        %v3267 = vld [vmem:[#allocation5 + $0x6c4] sm:$0xf]
        %v3268 = vld [vmem:[#allocation5 + $0x6c8] sm:$0xff]
        %v3269 = vld [vmem:[#allocation5 + $0x6d0] sm:$0xff]
        %v3270 = vld [vmem:[#allocation5 + $0x6d8] sm:$0xff]
        %v3271 = vld [vmem:[#allocation5 + $0x6e0] sm:$0xf]
        %v3272 = vld [vmem:[#allocation5 + $0x6e4] sm:$0xff]
        %v3273 = vld [vmem:[#allocation5 + $0x6ec] sm:$0xff]
        %v3274 = vld [vmem:[#allocation5 + $0x6f4] sm:$0xff]
        %v3275 = vld [vmem:[#allocation5 + $0x6fc] sm:$0xf]
        %v3276 = vld [vmem:[%s12] sm:$0xff]
        %v3278 = vlaneseq
        %v3279 = vshrl.u32 %v3278, 7
        %v3280 = vsub.s32 0, %v3279
        %v3281 = vrot.slane %v3276, %v3280
        %v3282 = vlaneseq
        %v3283 = vshrl.u32 %v3282, 7
        %v3284 = vsub.s32 1, %v3283
        %v3285 = vrot.slane %v3276, %v3284
        %v3286 = vlaneseq
        %v3287 = vshrl.u32 %v3286, 7
        %v3288 = vsub.s32 2, %v3287
        %v3289 = vrot.slane %v3276, %v3288
        %v3290 = vlaneseq
        %v3291 = vshrl.u32 %v3290, 7
        %v3292 = vsub.s32 3, %v3291
        %v3293 = vrot.slane %v3276, %v3292
        %v3294 = vlaneseq
        %v3295 = vshrl.u32 %v3294, 7
        %v3296 = vsub.s32 4, %v3295
        %v3297 = vrot.slane %v3276, %v3296
        %v3298 = vlaneseq
        %v3299 = vshrl.u32 %v3298, 7
        %v3300 = vsub.s32 5, %v3299
        %v3301 = vrot.slane %v3276, %v3300
        %v3302 = vlaneseq
        %v3303 = vshrl.u32 %v3302, 7
        %v3304 = vsub.s32 6, %v3303
        %v3305 = vrot.slane %v3276, %v3304
        %v3569 = vunpack.c.l.b16 %v3020
        %v3570 = vunpack.c.h.b16 %v3020
        %v3571 = vunpack.c.l.b16 %v3021
        %v3572 = vunpack.c.h.b16 %v3021
        %v3573 = vunpack.c.l.b16 %v3022
        %v3574 = vunpack.c.h.b16 %v3022
        %v3575 = vunpack.c.l.b16 %v3023
        %v3576 = vunpack.c.l.b16 %v3024
        %v3577 = vunpack.c.h.b16 %v3024
        %v3578 = vunpack.c.l.b16 %v3025
        %v3579 = vunpack.c.h.b16 %v3025
        %v3580 = vunpack.c.l.b16 %v3026
        %v3581 = vunpack.c.h.b16 %v3026
        %v3582 = vunpack.c.l.b16 %v3027
        %v3583 = vunpack.c.l.b16 %v3028
        %v3584 = vunpack.c.h.b16 %v3028
        %v3585 = vunpack.c.l.b16 %v3029
        %v3586 = vunpack.c.h.b16 %v3029
        %v3587 = vunpack.c.l.b16 %v3030
        %v3588 = vunpack.c.h.b16 %v3030
        %v3589 = vunpack.c.l.b16 %v3031
        %v3590 = vunpack.c.l.b16 %v3032
        %v3591 = vunpack.c.h.b16 %v3032
        %v3592 = vunpack.c.l.b16 %v3033
        %v3593 = vunpack.c.h.b16 %v3033
        %v3594 = vunpack.c.l.b16 %v3034
        %v3595 = vunpack.c.h.b16 %v3034
        %v3596 = vunpack.c.l.b16 %v3035
        %v3597 = vunpack.c.l.b16 %v3036
        %v3598 = vunpack.c.h.b16 %v3036
        %v3599 = vunpack.c.l.b16 %v3037
        %v3600 = vunpack.c.h.b16 %v3037
        %v3601 = vunpack.c.l.b16 %v3038
        %v3602 = vunpack.c.h.b16 %v3038
        %v3603 = vunpack.c.l.b16 %v3039
        %v3604 = vunpack.c.l.b16 %v3040
        %v3605 = vunpack.c.h.b16 %v3040
        %v3606 = vunpack.c.l.b16 %v3041
        %v3607 = vunpack.c.h.b16 %v3041
        %v3608 = vunpack.c.l.b16 %v3042
        %v3609 = vunpack.c.h.b16 %v3042
        %v3610 = vunpack.c.l.b16 %v3043
        %v3611 = vunpack.c.l.b16 %v3044
        %v3612 = vunpack.c.h.b16 %v3044
        %v3613 = vunpack.c.l.b16 %v3045
        %v3614 = vunpack.c.h.b16 %v3045
        %v3615 = vunpack.c.l.b16 %v3046
        %v3616 = vunpack.c.h.b16 %v3046
        %v3617 = vunpack.c.l.b16 %v3047
        %v3618 = vunpack.c.l.b16 %v3048
        %v3619 = vunpack.c.h.b16 %v3048
        %v3620 = vunpack.c.l.b16 %v3049
        %v3621 = vunpack.c.h.b16 %v3049
        %v3622 = vunpack.c.l.b16 %v3050
        %v3623 = vunpack.c.h.b16 %v3050
        %v3624 = vunpack.c.l.b16 %v3051
        %v3625 = vunpack.c.l.b16 %v3052
        %v3626 = vunpack.c.h.b16 %v3052
        %v3627 = vunpack.c.l.b16 %v3053
        %v3628 = vunpack.c.h.b16 %v3053
        %v3629 = vunpack.c.l.b16 %v3054
        %v3630 = vunpack.c.h.b16 %v3054
        %v3631 = vunpack.c.l.b16 %v3055
        %v3632 = vunpack.c.l.b16 %v3056
        %v3633 = vunpack.c.h.b16 %v3056
        %v3634 = vunpack.c.l.b16 %v3057
        %v3635 = vunpack.c.h.b16 %v3057
        %v3636 = vunpack.c.l.b16 %v3058
        %v3637 = vunpack.c.h.b16 %v3058
        %v3638 = vunpack.c.l.b16 %v3059
        %v3639 = vunpack.c.l.b16 %v3060
        %v3640 = vunpack.c.h.b16 %v3060
        %v3641 = vunpack.c.l.b16 %v3061
        %v3642 = vunpack.c.h.b16 %v3061
        %v3643 = vunpack.c.l.b16 %v3062
        %v3644 = vunpack.c.h.b16 %v3062
        %v3645 = vunpack.c.l.b16 %v3063
        %v3646 = vunpack.c.l.b16 %v3064
        %v3647 = vunpack.c.h.b16 %v3064
        %v3648 = vunpack.c.l.b16 %v3065
        %v3649 = vunpack.c.h.b16 %v3065
        %v3650 = vunpack.c.l.b16 %v3066
        %v3651 = vunpack.c.h.b16 %v3066
        %v3652 = vunpack.c.l.b16 %v3067
        %v3653 = vunpack.c.l.b16 %v3068
        %v3654 = vunpack.c.h.b16 %v3068
        %v3655 = vunpack.c.l.b16 %v3069
        %v3656 = vunpack.c.h.b16 %v3069
        %v3657 = vunpack.c.l.b16 %v3070
        %v3658 = vunpack.c.h.b16 %v3070
        %v3659 = vunpack.c.l.b16 %v3071
        %v3660 = vunpack.c.l.b16 %v3072
        %v3661 = vunpack.c.h.b16 %v3072
        %v3662 = vunpack.c.l.b16 %v3073
        %v3663 = vunpack.c.h.b16 %v3073
        %v3664 = vunpack.c.l.b16 %v3074
        %v3665 = vunpack.c.h.b16 %v3074
        %v3666 = vunpack.c.l.b16 %v3075
        %v3667 = vunpack.c.l.b16 %v3076
        %v3668 = vunpack.c.h.b16 %v3076
        %v3669 = vunpack.c.l.b16 %v3077
        %v3670 = vunpack.c.h.b16 %v3077
        %v3671 = vunpack.c.l.b16 %v3078
        %v3672 = vunpack.c.h.b16 %v3078
        %v3673 = vunpack.c.l.b16 %v3079
        %v3674 = vunpack.c.l.b16 %v3080
        %v3675 = vunpack.c.h.b16 %v3080
        %v3676 = vunpack.c.l.b16 %v3081
        %v3677 = vunpack.c.h.b16 %v3081
        %v3678 = vunpack.c.l.b16 %v3082
        %v3679 = vunpack.c.h.b16 %v3082
        %v3680 = vunpack.c.l.b16 %v3083
        %v3681 = vunpack.c.l.b16 %v3084
        %v3682 = vunpack.c.h.b16 %v3084
        %v3683 = vunpack.c.l.b16 %v3085
        %v3684 = vunpack.c.h.b16 %v3085
        %v3685 = vunpack.c.l.b16 %v3086
        %v3686 = vunpack.c.h.b16 %v3086
        %v3687 = vunpack.c.l.b16 %v3087
        %v3688 = vunpack.c.l.b16 %v3088
        %v3689 = vunpack.c.h.b16 %v3088
        %v3690 = vunpack.c.l.b16 %v3089
        %v3691 = vunpack.c.h.b16 %v3089
        %v3692 = vunpack.c.l.b16 %v3090
        %v3693 = vunpack.c.h.b16 %v3090
        %v3694 = vunpack.c.l.b16 %v3091
        %v3695 = vunpack.c.l.b16 %v3092
        %v3696 = vunpack.c.h.b16 %v3092
        %v3697 = vunpack.c.l.b16 %v3093
        %v3698 = vunpack.c.h.b16 %v3093
        %v3699 = vunpack.c.l.b16 %v3094
        %v3700 = vunpack.c.h.b16 %v3094
        %v3701 = vunpack.c.l.b16 %v3095
        %v3702 = vunpack.c.l.b16 %v3096
        %v3703 = vunpack.c.h.b16 %v3096
        %v3704 = vunpack.c.l.b16 %v3097
        %v3705 = vunpack.c.h.b16 %v3097
        %v3706 = vunpack.c.l.b16 %v3098
        %v3707 = vunpack.c.h.b16 %v3098
        %v3708 = vunpack.c.l.b16 %v3099
        %v3709 = vunpack.c.l.b16 %v3100
        %v3710 = vunpack.c.h.b16 %v3100
        %v3711 = vunpack.c.l.b16 %v3101
        %v3712 = vunpack.c.h.b16 %v3101
        %v3713 = vunpack.c.l.b16 %v3102
        %v3714 = vunpack.c.h.b16 %v3102
        %v3715 = vunpack.c.l.b16 %v3103
        %v3716 = vunpack.c.l.b16 %v3104
        %v3717 = vunpack.c.h.b16 %v3104
        %v3718 = vunpack.c.l.b16 %v3105
        %v3719 = vunpack.c.h.b16 %v3105
        %v3720 = vunpack.c.l.b16 %v3106
        %v3721 = vunpack.c.h.b16 %v3106
        %v3722 = vunpack.c.l.b16 %v3107
        %v3723 = vunpack.c.l.b16 %v3108
        %v3724 = vunpack.c.h.b16 %v3108
        %v3725 = vunpack.c.l.b16 %v3109
        %v3726 = vunpack.c.h.b16 %v3109
        %v3727 = vunpack.c.l.b16 %v3110
        %v3728 = vunpack.c.h.b16 %v3110
        %v3729 = vunpack.c.l.b16 %v3111
        %v3730 = vunpack.c.l.b16 %v3112
        %v3731 = vunpack.c.h.b16 %v3112
        %v3732 = vunpack.c.l.b16 %v3113
        %v3733 = vunpack.c.h.b16 %v3113
        %v3734 = vunpack.c.l.b16 %v3114
        %v3735 = vunpack.c.h.b16 %v3114
        %v3736 = vunpack.c.l.b16 %v3115
        %v3737 = vunpack.c.l.b16 %v3116
        %v3738 = vunpack.c.h.b16 %v3116
        %v3739 = vunpack.c.l.b16 %v3117
        %v3740 = vunpack.c.h.b16 %v3117
        %v3741 = vunpack.c.l.b16 %v3118
        %v3742 = vunpack.c.h.b16 %v3118
        %v3743 = vunpack.c.l.b16 %v3119
        %v3744 = vunpack.c.l.b16 %v3120
        %v3745 = vunpack.c.h.b16 %v3120
        %v3746 = vunpack.c.l.b16 %v3121
        %v3747 = vunpack.c.h.b16 %v3121
        %v3748 = vunpack.c.l.b16 %v3122
        %v3749 = vunpack.c.h.b16 %v3122
        %v3750 = vunpack.c.l.b16 %v3123
        %v3751 = vunpack.c.l.b16 %v3124
        %v3752 = vunpack.c.h.b16 %v3124
        %v3753 = vunpack.c.l.b16 %v3125
        %v3754 = vunpack.c.h.b16 %v3125
        %v3755 = vunpack.c.l.b16 %v3126
        %v3756 = vunpack.c.h.b16 %v3126
        %v3757 = vunpack.c.l.b16 %v3127
        %v3758 = vunpack.c.l.b16 %v3128
        %v3759 = vunpack.c.h.b16 %v3128
        %v3760 = vunpack.c.l.b16 %v3129
        %v3761 = vunpack.c.h.b16 %v3129
        %v3762 = vunpack.c.l.b16 %v3130
        %v3763 = vunpack.c.h.b16 %v3130
        %v3764 = vunpack.c.l.b16 %v3131
        %v3765 = vunpack.c.l.b16 %v3132
        %v3766 = vunpack.c.h.b16 %v3132
        %v3767 = vunpack.c.l.b16 %v3133
        %v3768 = vunpack.c.h.b16 %v3133
        %v3769 = vunpack.c.l.b16 %v3134
        %v3770 = vunpack.c.h.b16 %v3134
        %v3771 = vunpack.c.l.b16 %v3135
        %v3772 = vunpack.c.l.b16 %v3136
        %v3773 = vunpack.c.h.b16 %v3136
        %v3774 = vunpack.c.l.b16 %v3137
        %v3775 = vunpack.c.h.b16 %v3137
        %v3776 = vunpack.c.l.b16 %v3138
        %v3777 = vunpack.c.h.b16 %v3138
        %v3778 = vunpack.c.l.b16 %v3139
        %v3779 = vunpack.c.l.b16 %v3140
        %v3780 = vunpack.c.h.b16 %v3140
        %v3781 = vunpack.c.l.b16 %v3141
        %v3782 = vunpack.c.h.b16 %v3141
        %v3783 = vunpack.c.l.b16 %v3142
        %v3784 = vunpack.c.h.b16 %v3142
        %v3785 = vunpack.c.l.b16 %v3143
        %v3786 = vunpack.c.l.b16 %v3144
        %v3787 = vunpack.c.h.b16 %v3144
        %v3788 = vunpack.c.l.b16 %v3145
        %v3789 = vunpack.c.h.b16 %v3145
        %v3790 = vunpack.c.l.b16 %v3146
        %v3791 = vunpack.c.h.b16 %v3146
        %v3792 = vunpack.c.l.b16 %v3147
        %v3793 = vunpack.c.l.b16 %v3148
        %v3794 = vunpack.c.h.b16 %v3148
        %v3795 = vunpack.c.l.b16 %v3149
        %v3796 = vunpack.c.h.b16 %v3149
        %v3797 = vunpack.c.l.b16 %v3150
        %v3798 = vunpack.c.h.b16 %v3150
        %v3799 = vunpack.c.l.b16 %v3151
        %v3800 = vunpack.c.l.b16 %v3152
        %v3801 = vunpack.c.h.b16 %v3152
        %v3802 = vunpack.c.l.b16 %v3153
        %v3803 = vunpack.c.h.b16 %v3153
        %v3804 = vunpack.c.l.b16 %v3154
        %v3805 = vunpack.c.h.b16 %v3154
        %v3806 = vunpack.c.l.b16 %v3155
        %v3807 = vunpack.c.l.b16 %v3156
        %v3808 = vunpack.c.h.b16 %v3156
        %v3809 = vunpack.c.l.b16 %v3157
        %v3810 = vunpack.c.h.b16 %v3157
        %v3811 = vunpack.c.l.b16 %v3158
        %v3812 = vunpack.c.h.b16 %v3158
        %v3813 = vunpack.c.l.b16 %v3159
        %v3814 = vunpack.c.l.b16 %v3160
        %v3815 = vunpack.c.h.b16 %v3160
        %v3816 = vunpack.c.l.b16 %v3161
        %v3817 = vunpack.c.h.b16 %v3161
        %v3818 = vunpack.c.l.b16 %v3162
        %v3819 = vunpack.c.h.b16 %v3162
        %v3820 = vunpack.c.l.b16 %v3163
        %v3821 = vunpack.c.l.b16 %v3164
        %v3822 = vunpack.c.h.b16 %v3164
        %v3823 = vunpack.c.l.b16 %v3165
        %v3824 = vunpack.c.h.b16 %v3165
        %v3825 = vunpack.c.l.b16 %v3166
        %v3826 = vunpack.c.h.b16 %v3166
        %v3827 = vunpack.c.l.b16 %v3167
        %v3828 = vunpack.c.l.b16 %v3168
        %v3829 = vunpack.c.h.b16 %v3168
        %v3830 = vunpack.c.l.b16 %v3169
        %v3831 = vunpack.c.h.b16 %v3169
        %v3832 = vunpack.c.l.b16 %v3170
        %v3833 = vunpack.c.h.b16 %v3170
        %v3834 = vunpack.c.l.b16 %v3171
        %v3835 = vunpack.c.l.b16 %v3172
        %v3836 = vunpack.c.h.b16 %v3172
        %v3837 = vunpack.c.l.b16 %v3173
        %v3838 = vunpack.c.h.b16 %v3173
        %v3839 = vunpack.c.l.b16 %v3174
        %v3840 = vunpack.c.h.b16 %v3174
        %v3841 = vunpack.c.l.b16 %v3175
        %v3842 = vunpack.c.l.b16 %v3176
        %v3843 = vunpack.c.h.b16 %v3176
        %v3844 = vunpack.c.l.b16 %v3177
        %v3845 = vunpack.c.h.b16 %v3177
        %v3846 = vunpack.c.l.b16 %v3178
        %v3847 = vunpack.c.h.b16 %v3178
        %v3848 = vunpack.c.l.b16 %v3179
        %v3849 = vunpack.c.l.b16 %v3180
        %v3850 = vunpack.c.h.b16 %v3180
        %v3851 = vunpack.c.l.b16 %v3181
        %v3852 = vunpack.c.h.b16 %v3181
        %v3853 = vunpack.c.l.b16 %v3182
        %v3854 = vunpack.c.h.b16 %v3182
        %v3855 = vunpack.c.l.b16 %v3183
        %v3856 = vunpack.c.l.b16 %v3184
        %v3857 = vunpack.c.h.b16 %v3184
        %v3858 = vunpack.c.l.b16 %v3185
        %v3859 = vunpack.c.h.b16 %v3185
        %v3860 = vunpack.c.l.b16 %v3186
        %v3861 = vunpack.c.h.b16 %v3186
        %v3862 = vunpack.c.l.b16 %v3187
        %v3863 = vunpack.c.l.b16 %v3188
        %v3864 = vunpack.c.h.b16 %v3188
        %v3865 = vunpack.c.l.b16 %v3189
        %v3866 = vunpack.c.h.b16 %v3189
        %v3867 = vunpack.c.l.b16 %v3190
        %v3868 = vunpack.c.h.b16 %v3190
        %v3869 = vunpack.c.l.b16 %v3191
        %v3870 = vunpack.c.l.b16 %v3192
        %v3871 = vunpack.c.h.b16 %v3192
        %v3872 = vunpack.c.l.b16 %v3193
        %v3873 = vunpack.c.h.b16 %v3193
        %v3874 = vunpack.c.l.b16 %v3194
        %v3875 = vunpack.c.h.b16 %v3194
        %v3876 = vunpack.c.l.b16 %v3195
        %v3877 = vunpack.c.l.b16 %v3196
        %v3878 = vunpack.c.h.b16 %v3196
        %v3879 = vunpack.c.l.b16 %v3197
        %v3880 = vunpack.c.h.b16 %v3197
        %v3881 = vunpack.c.l.b16 %v3198
        %v3882 = vunpack.c.h.b16 %v3198
        %v3883 = vunpack.c.l.b16 %v3199
        %v3884 = vunpack.c.l.b16 %v3200
        %v3885 = vunpack.c.h.b16 %v3200
        %v3886 = vunpack.c.l.b16 %v3201
        %v3887 = vunpack.c.h.b16 %v3201
        %v3888 = vunpack.c.l.b16 %v3202
        %v3889 = vunpack.c.h.b16 %v3202
        %v3890 = vunpack.c.l.b16 %v3203
        %v3891 = vunpack.c.l.b16 %v3204
        %v3892 = vunpack.c.h.b16 %v3204
        %v3893 = vunpack.c.l.b16 %v3205
        %v3894 = vunpack.c.h.b16 %v3205
        %v3895 = vunpack.c.l.b16 %v3206
        %v3896 = vunpack.c.h.b16 %v3206
        %v3897 = vunpack.c.l.b16 %v3207
        %v3898 = vunpack.c.l.b16 %v3208
        %v3899 = vunpack.c.h.b16 %v3208
        %v3900 = vunpack.c.l.b16 %v3209
        %v3901 = vunpack.c.h.b16 %v3209
        %v3902 = vunpack.c.l.b16 %v3210
        %v3903 = vunpack.c.h.b16 %v3210
        %v3904 = vunpack.c.l.b16 %v3211
        %v3905 = vunpack.c.l.b16 %v3212
        %v3906 = vunpack.c.h.b16 %v3212
        %v3907 = vunpack.c.l.b16 %v3213
        %v3908 = vunpack.c.h.b16 %v3213
        %v3909 = vunpack.c.l.b16 %v3214
        %v3910 = vunpack.c.h.b16 %v3214
        %v3911 = vunpack.c.l.b16 %v3215
        %v3912 = vunpack.c.l.b16 %v3216
        %v3913 = vunpack.c.h.b16 %v3216
        %v3914 = vunpack.c.l.b16 %v3217
        %v3915 = vunpack.c.h.b16 %v3217
        %v3916 = vunpack.c.l.b16 %v3218
        %v3917 = vunpack.c.h.b16 %v3218
        %v3918 = vunpack.c.l.b16 %v3219
        %v3919 = vunpack.c.l.b16 %v3220
        %v3920 = vunpack.c.h.b16 %v3220
        %v3921 = vunpack.c.l.b16 %v3221
        %v3922 = vunpack.c.h.b16 %v3221
        %v3923 = vunpack.c.l.b16 %v3222
        %v3924 = vunpack.c.h.b16 %v3222
        %v3925 = vunpack.c.l.b16 %v3223
        %v3926 = vunpack.c.l.b16 %v3224
        %v3927 = vunpack.c.h.b16 %v3224
        %v3928 = vunpack.c.l.b16 %v3225
        %v3929 = vunpack.c.h.b16 %v3225
        %v3930 = vunpack.c.l.b16 %v3226
        %v3931 = vunpack.c.h.b16 %v3226
        %v3932 = vunpack.c.l.b16 %v3227
        %v3933 = vunpack.c.l.b16 %v3228
        %v3934 = vunpack.c.h.b16 %v3228
        %v3935 = vunpack.c.l.b16 %v3229
        %v3936 = vunpack.c.h.b16 %v3229
        %v3937 = vunpack.c.l.b16 %v3230
        %v3938 = vunpack.c.h.b16 %v3230
        %v3939 = vunpack.c.l.b16 %v3231
        %v3940 = vunpack.c.l.b16 %v3232
        %v3941 = vunpack.c.h.b16 %v3232
        %v3942 = vunpack.c.l.b16 %v3233
        %v3943 = vunpack.c.h.b16 %v3233
        %v3944 = vunpack.c.l.b16 %v3234
        %v3945 = vunpack.c.h.b16 %v3234
        %v3946 = vunpack.c.l.b16 %v3235
        %v3947 = vunpack.c.l.b16 %v3236
        %v3948 = vunpack.c.h.b16 %v3236
        %v3949 = vunpack.c.l.b16 %v3237
        %v3950 = vunpack.c.h.b16 %v3237
        %v3951 = vunpack.c.l.b16 %v3238
        %v3952 = vunpack.c.h.b16 %v3238
        %v3953 = vunpack.c.l.b16 %v3239
        %v3954 = vunpack.c.l.b16 %v3240
        %v3955 = vunpack.c.h.b16 %v3240
        %v3956 = vunpack.c.l.b16 %v3241
        %v3957 = vunpack.c.h.b16 %v3241
        %v3958 = vunpack.c.l.b16 %v3242
        %v3959 = vunpack.c.h.b16 %v3242
        %v3960 = vunpack.c.l.b16 %v3243
        %v3961 = vunpack.c.l.b16 %v3244
        %v3962 = vunpack.c.h.b16 %v3244
        %v3963 = vunpack.c.l.b16 %v3245
        %v3964 = vunpack.c.h.b16 %v3245
        %v3965 = vunpack.c.l.b16 %v3246
        %v3966 = vunpack.c.h.b16 %v3246
        %v3967 = vunpack.c.l.b16 %v3247
        %v3968 = vunpack.c.l.b16 %v3248
        %v3969 = vunpack.c.h.b16 %v3248
        %v3970 = vunpack.c.l.b16 %v3249
        %v3971 = vunpack.c.h.b16 %v3249
        %v3972 = vunpack.c.l.b16 %v3250
        %v3973 = vunpack.c.h.b16 %v3250
        %v3974 = vunpack.c.l.b16 %v3251
        %v3975 = vunpack.c.l.b16 %v3252
        %v3976 = vunpack.c.h.b16 %v3252
        %v3977 = vunpack.c.l.b16 %v3253
        %v3978 = vunpack.c.h.b16 %v3253
        %v3979 = vunpack.c.l.b16 %v3254
        %v3980 = vunpack.c.h.b16 %v3254
        %v3981 = vunpack.c.l.b16 %v3255
        %v3982 = vunpack.c.l.b16 %v3256
        %v3983 = vunpack.c.h.b16 %v3256
        %v3984 = vunpack.c.l.b16 %v3257
        %v3985 = vunpack.c.h.b16 %v3257
        %v3986 = vunpack.c.l.b16 %v3258
        %v3987 = vunpack.c.h.b16 %v3258
        %v3988 = vunpack.c.l.b16 %v3259
        %v3989 = vunpack.c.l.b16 %v3260
        %v3990 = vunpack.c.h.b16 %v3260
        %v3991 = vunpack.c.l.b16 %v3261
        %v3992 = vunpack.c.h.b16 %v3261
        %v3993 = vunpack.c.l.b16 %v3262
        %v3994 = vunpack.c.h.b16 %v3262
        %v3995 = vunpack.c.l.b16 %v3263
        %v3996 = vunpack.c.l.b16 %v3264
        %v3997 = vunpack.c.h.b16 %v3264
        %v3998 = vunpack.c.l.b16 %v3265
        %v3999 = vunpack.c.h.b16 %v3265
        %v4000 = vunpack.c.l.b16 %v3266
        %v4001 = vunpack.c.h.b16 %v3266
        %v4002 = vunpack.c.l.b16 %v3267
        %v4003 = vunpack.c.l.b16 %v3268
        %v4004 = vunpack.c.h.b16 %v3268
        %v4005 = vunpack.c.l.b16 %v3269
        %v4006 = vunpack.c.h.b16 %v3269
        %v4007 = vunpack.c.l.b16 %v3270
        %v4008 = vunpack.c.h.b16 %v3270
        %v4009 = vunpack.c.l.b16 %v3271
        %v4010 = vunpack.c.l.b16 %v3272
        %v4011 = vunpack.c.h.b16 %v3272
        %v4012 = vunpack.c.l.b16 %v3273
        %v4013 = vunpack.c.h.b16 %v3273
        %v4014 = vunpack.c.l.b16 %v3274
        %v4015 = vunpack.c.h.b16 %v3274
        %v4016 = vunpack.c.l.b16 %v3275
        %v4017 = vpack.c.b16 %v3576, %v3569
        %v4018 = vpack.c.b16 %v3577, %v3570
        %v4019 = vpack.c.b16 %v3578, %v3571
        %v4020 = vpack.c.b16 %v3579, %v3572
        %v4021 = vpack.c.b16 %v3580, %v3573
        %v4022 = vpack.c.b16 %v3581, %v3574
        %v4023 = vpack.c.b16 %v3582, %v3575
        %v4024 = vpack.c.b16 %v3590, %v3583
        %v4025 = vpack.c.b16 %v3591, %v3584
        %v4026 = vpack.c.b16 %v3592, %v3585
        %v4027 = vpack.c.b16 %v3593, %v3586
        %v4028 = vpack.c.b16 %v3594, %v3587
        %v4029 = vpack.c.b16 %v3595, %v3588
        %v4030 = vpack.c.b16 %v3596, %v3589
        %v4031 = vpack.c.b16 %v3604, %v3597
        %v4032 = vpack.c.b16 %v3605, %v3598
        %v4033 = vpack.c.b16 %v3606, %v3599
        %v4034 = vpack.c.b16 %v3607, %v3600
        %v4035 = vpack.c.b16 %v3608, %v3601
        %v4036 = vpack.c.b16 %v3609, %v3602
        %v4037 = vpack.c.b16 %v3610, %v3603
        %v4038 = vpack.c.b16 %v3618, %v3611
        %v4039 = vpack.c.b16 %v3619, %v3612
        %v4040 = vpack.c.b16 %v3620, %v3613
        %v4041 = vpack.c.b16 %v3621, %v3614
        %v4042 = vpack.c.b16 %v3622, %v3615
        %v4043 = vpack.c.b16 %v3623, %v3616
        %v4044 = vpack.c.b16 %v3624, %v3617
        %v4045 = vpack.c.b16 %v3632, %v3625
        %v4046 = vpack.c.b16 %v3633, %v3626
        %v4047 = vpack.c.b16 %v3634, %v3627
        %v4048 = vpack.c.b16 %v3635, %v3628
        %v4049 = vpack.c.b16 %v3636, %v3629
        %v4050 = vpack.c.b16 %v3637, %v3630
        %v4051 = vpack.c.b16 %v3638, %v3631
        %v4052 = vpack.c.b16 %v3646, %v3639
        %v4053 = vpack.c.b16 %v3647, %v3640
        %v4054 = vpack.c.b16 %v3648, %v3641
        %v4055 = vpack.c.b16 %v3649, %v3642
        %v4056 = vpack.c.b16 %v3650, %v3643
        %v4057 = vpack.c.b16 %v3651, %v3644
        %v4058 = vpack.c.b16 %v3652, %v3645
        %v4059 = vpack.c.b16 %v3660, %v3653
        %v4060 = vpack.c.b16 %v3661, %v3654
        %v4061 = vpack.c.b16 %v3662, %v3655
        %v4062 = vpack.c.b16 %v3663, %v3656
        %v4063 = vpack.c.b16 %v3664, %v3657
        %v4064 = vpack.c.b16 %v3665, %v3658
        %v4065 = vpack.c.b16 %v3666, %v3659
        %v4066 = vpack.c.b16 %v3674, %v3667
        %v4067 = vpack.c.b16 %v3675, %v3668
        %v4068 = vpack.c.b16 %v3676, %v3669
        %v4069 = vpack.c.b16 %v3677, %v3670
        %v4070 = vpack.c.b16 %v3678, %v3671
        %v4071 = vpack.c.b16 %v3679, %v3672
        %v4072 = vpack.c.b16 %v3680, %v3673
        %v4073 = vpack.c.b16 %v3688, %v3681
        %v4074 = vpack.c.b16 %v3689, %v3682
        %v4075 = vpack.c.b16 %v3690, %v3683
        %v4076 = vpack.c.b16 %v3691, %v3684
        %v4077 = vpack.c.b16 %v3692, %v3685
        %v4078 = vpack.c.b16 %v3693, %v3686
        %v4079 = vpack.c.b16 %v3694, %v3687
        %v4080 = vpack.c.b16 %v3702, %v3695
        %v4081 = vpack.c.b16 %v3703, %v3696
        %v4082 = vpack.c.b16 %v3704, %v3697
        %v4083 = vpack.c.b16 %v3705, %v3698
        %v4084 = vpack.c.b16 %v3706, %v3699
        %v4085 = vpack.c.b16 %v3707, %v3700
        %v4086 = vpack.c.b16 %v3708, %v3701
        %v4087 = vpack.c.b16 %v3716, %v3709
        %v4088 = vpack.c.b16 %v3717, %v3710
        %v4089 = vpack.c.b16 %v3718, %v3711
        %v4090 = vpack.c.b16 %v3719, %v3712
        %v4091 = vpack.c.b16 %v3720, %v3713
        %v4092 = vpack.c.b16 %v3721, %v3714
        %v4093 = vpack.c.b16 %v3722, %v3715
        %v4094 = vpack.c.b16 %v3730, %v3723
        %v4095 = vpack.c.b16 %v3731, %v3724
        %v4096 = vpack.c.b16 %v3732, %v3725
        %v4097 = vpack.c.b16 %v3733, %v3726
        %v4098 = vpack.c.b16 %v3734, %v3727
        %v4099 = vpack.c.b16 %v3735, %v3728
        %v4100 = vpack.c.b16 %v3736, %v3729
        %v4101 = vpack.c.b16 %v3744, %v3737
        %v4102 = vpack.c.b16 %v3745, %v3738
        %v4103 = vpack.c.b16 %v3746, %v3739
        %v4104 = vpack.c.b16 %v3747, %v3740
        %v4105 = vpack.c.b16 %v3748, %v3741
        %v4106 = vpack.c.b16 %v3749, %v3742
        %v4107 = vpack.c.b16 %v3750, %v3743
        %v4108 = vpack.c.b16 %v3758, %v3751
        %v4109 = vpack.c.b16 %v3759, %v3752
        %v4110 = vpack.c.b16 %v3760, %v3753
        %v4111 = vpack.c.b16 %v3761, %v3754
        %v4112 = vpack.c.b16 %v3762, %v3755
        %v4113 = vpack.c.b16 %v3763, %v3756
        %v4114 = vpack.c.b16 %v3764, %v3757
        %v4115 = vpack.c.b16 %v3772, %v3765
        %v4116 = vpack.c.b16 %v3773, %v3766
        %v4117 = vpack.c.b16 %v3774, %v3767
        %v4118 = vpack.c.b16 %v3775, %v3768
        %v4119 = vpack.c.b16 %v3776, %v3769
        %v4120 = vpack.c.b16 %v3777, %v3770
        %v4121 = vpack.c.b16 %v3778, %v3771
        %v4122 = vpack.c.b16 %v3786, %v3779
        %v4123 = vpack.c.b16 %v3787, %v3780
        %v4124 = vpack.c.b16 %v3788, %v3781
        %v4125 = vpack.c.b16 %v3789, %v3782
        %v4126 = vpack.c.b16 %v3790, %v3783
        %v4127 = vpack.c.b16 %v3791, %v3784
        %v4128 = vpack.c.b16 %v3792, %v3785
        %v4129 = vpack.c.b16 %v3800, %v3793
        %v4130 = vpack.c.b16 %v3801, %v3794
        %v4131 = vpack.c.b16 %v3802, %v3795
        %v4132 = vpack.c.b16 %v3803, %v3796
        %v4133 = vpack.c.b16 %v3804, %v3797
        %v4134 = vpack.c.b16 %v3805, %v3798
        %v4135 = vpack.c.b16 %v3806, %v3799
        %v4136 = vpack.c.b16 %v3814, %v3807
        %v4137 = vpack.c.b16 %v3815, %v3808
        %v4138 = vpack.c.b16 %v3816, %v3809
        %v4139 = vpack.c.b16 %v3817, %v3810
        %v4140 = vpack.c.b16 %v3818, %v3811
        %v4141 = vpack.c.b16 %v3819, %v3812
        %v4142 = vpack.c.b16 %v3820, %v3813
        %v4143 = vpack.c.b16 %v3828, %v3821
        %v4144 = vpack.c.b16 %v3829, %v3822
        %v4145 = vpack.c.b16 %v3830, %v3823
        %v4146 = vpack.c.b16 %v3831, %v3824
        %v4147 = vpack.c.b16 %v3832, %v3825
        %v4148 = vpack.c.b16 %v3833, %v3826
        %v4149 = vpack.c.b16 %v3834, %v3827
        %v4150 = vpack.c.b16 %v3842, %v3835
        %v4151 = vpack.c.b16 %v3843, %v3836
        %v4152 = vpack.c.b16 %v3844, %v3837
        %v4153 = vpack.c.b16 %v3845, %v3838
        %v4154 = vpack.c.b16 %v3846, %v3839
        %v4155 = vpack.c.b16 %v3847, %v3840
        %v4156 = vpack.c.b16 %v3848, %v3841
        %v4157 = vpack.c.b16 %v3856, %v3849
        %v4158 = vpack.c.b16 %v3857, %v3850
        %v4159 = vpack.c.b16 %v3858, %v3851
        %v4160 = vpack.c.b16 %v3859, %v3852
        %v4161 = vpack.c.b16 %v3860, %v3853
        %v4162 = vpack.c.b16 %v3861, %v3854
        %v4163 = vpack.c.b16 %v3862, %v3855
        %v4164 = vpack.c.b16 %v3870, %v3863
        %v4165 = vpack.c.b16 %v3871, %v3864
        %v4166 = vpack.c.b16 %v3872, %v3865
        %v4167 = vpack.c.b16 %v3873, %v3866
        %v4168 = vpack.c.b16 %v3874, %v3867
        %v4169 = vpack.c.b16 %v3875, %v3868
        %v4170 = vpack.c.b16 %v3876, %v3869
        %v4171 = vpack.c.b16 %v3884, %v3877
        %v4172 = vpack.c.b16 %v3885, %v3878
        %v4173 = vpack.c.b16 %v3886, %v3879
        %v4174 = vpack.c.b16 %v3887, %v3880
        %v4175 = vpack.c.b16 %v3888, %v3881
        %v4176 = vpack.c.b16 %v3889, %v3882
        %v4177 = vpack.c.b16 %v3890, %v3883
        %v4178 = vpack.c.b16 %v3898, %v3891
        %v4179 = vpack.c.b16 %v3899, %v3892
        %v4180 = vpack.c.b16 %v3900, %v3893
        %v4181 = vpack.c.b16 %v3901, %v3894
        %v4182 = vpack.c.b16 %v3902, %v3895
        %v4183 = vpack.c.b16 %v3903, %v3896
        %v4184 = vpack.c.b16 %v3904, %v3897
        %v4185 = vpack.c.b16 %v3912, %v3905
        %v4186 = vpack.c.b16 %v3913, %v3906
        %v4187 = vpack.c.b16 %v3914, %v3907
        %v4188 = vpack.c.b16 %v3915, %v3908
        %v4189 = vpack.c.b16 %v3916, %v3909
        %v4190 = vpack.c.b16 %v3917, %v3910
        %v4191 = vpack.c.b16 %v3918, %v3911
        %v4192 = vpack.c.b16 %v3926, %v3919
        %v4193 = vpack.c.b16 %v3927, %v3920
        %v4194 = vpack.c.b16 %v3928, %v3921
        %v4195 = vpack.c.b16 %v3929, %v3922
        %v4196 = vpack.c.b16 %v3930, %v3923
        %v4197 = vpack.c.b16 %v3931, %v3924
        %v4198 = vpack.c.b16 %v3932, %v3925
        %v4199 = vpack.c.b16 %v3940, %v3933
        %v4200 = vpack.c.b16 %v3941, %v3934
        %v4201 = vpack.c.b16 %v3942, %v3935
        %v4202 = vpack.c.b16 %v3943, %v3936
        %v4203 = vpack.c.b16 %v3944, %v3937
        %v4204 = vpack.c.b16 %v3945, %v3938
        %v4205 = vpack.c.b16 %v3946, %v3939
        %v4206 = vpack.c.b16 %v3954, %v3947
        %v4207 = vpack.c.b16 %v3955, %v3948
        %v4208 = vpack.c.b16 %v3956, %v3949
        %v4209 = vpack.c.b16 %v3957, %v3950
        %v4210 = vpack.c.b16 %v3958, %v3951
        %v4211 = vpack.c.b16 %v3959, %v3952
        %v4212 = vpack.c.b16 %v3960, %v3953
        %v4213 = vpack.c.b16 %v3968, %v3961
        %v4214 = vpack.c.b16 %v3969, %v3962
        %v4215 = vpack.c.b16 %v3970, %v3963
        %v4216 = vpack.c.b16 %v3971, %v3964
        %v4217 = vpack.c.b16 %v3972, %v3965
        %v4218 = vpack.c.b16 %v3973, %v3966
        %v4219 = vpack.c.b16 %v3974, %v3967
        %v4220 = vpack.c.b16 %v3982, %v3975
        %v4221 = vpack.c.b16 %v3983, %v3976
        %v4222 = vpack.c.b16 %v3984, %v3977
        %v4223 = vpack.c.b16 %v3985, %v3978
        %v4224 = vpack.c.b16 %v3986, %v3979
        %v4225 = vpack.c.b16 %v3987, %v3980
        %v4226 = vpack.c.b16 %v3988, %v3981
        %v4227 = vpack.c.b16 %v3996, %v3989
        %v4228 = vpack.c.b16 %v3997, %v3990
        %v4229 = vpack.c.b16 %v3998, %v3991
        %v4230 = vpack.c.b16 %v3999, %v3992
        %v4231 = vpack.c.b16 %v4000, %v3993
        %v4232 = vpack.c.b16 %v4001, %v3994
        %v4233 = vpack.c.b16 %v4002, %v3995
        %v4234 = vpack.c.b16 %v4010, %v4003
        %v4235 = vpack.c.b16 %v4011, %v4004
        %v4236 = vpack.c.b16 %v4012, %v4005
        %v4237 = vpack.c.b16 %v4013, %v4006
        %v4238 = vpack.c.b16 %v4014, %v4007
        %v4239 = vpack.c.b16 %v4015, %v4008
        %v4240 = vpack.c.b16 %v4016, %v4009
        %4465 = vmatprep.subr.bf16.mxu0 %v4067
        %4466 = vmatpush1.bf16.msra.mxu0 %v4066
        %4467 = vmatprep.subr.bf16.mxu0 %v4060
        %4468 = vmatpush1.bf16.msra.mxu0 %v4059
        %4469 = vmatprep.subr.bf16.mxu0 %v4053
        %4470 = vmatpush1.bf16.msra.mxu0 %v4052
        %4471 = vmatprep.subr.bf16.mxu0 %v4046
        %4472 = vmatpush1.bf16.msra.mxu0 %v4045
        %4473 = vmatprep.subr.bf16.mxu0 %v4039
        %4474 = vmatpush1.bf16.msra.mxu0 %v4038
        %4475 = vmatprep.subr.bf16.mxu0 %v4032
        %4476 = vmatpush1.bf16.msra.mxu0 %v4031
        %4477 = vmatprep.subr.bf16.mxu0 %v4025
        %4478 = vmatpush1.bf16.msra.mxu0 %v4024
        %4479 = vmatprep.subr.bf16.mxu0 %v4018
        %4480 = vmatpush1.bf16.msra.mxu0 %v4017
        %4481 = vmatprep.subr.bf16.mxu0 %v4123
        %4482 = vmatpush2.bf16.msra.mxu0 %v4122
        %4483 = vmatprep.subr.bf16.mxu0 %v4116
        %4484 = vmatpush2.bf16.msra.mxu0 %v4115
        %4485 = vmatprep.subr.bf16.mxu0 %v4109
        %4486 = vmatpush2.bf16.msra.mxu0 %v4108
        %4487 = vmatprep.subr.bf16.mxu0 %v4102
        %4488 = vmatpush2.bf16.msra.mxu0 %v4101
        %4489 = vmatprep.subr.bf16.mxu0 %v4095
        %4490 = vmatpush2.bf16.msra.mxu0 %v4094
        %4491 = vmatprep.subr.bf16.mxu0 %v4088
        %4492 = vmatpush2.bf16.msra.mxu0 %v4087
        %4493 = vmatprep.subr.bf16.mxu0 %v4081
        %4494 = vmatpush2.bf16.msra.mxu0 %v4080
        %4495 = vmatprep.subr.bf16.mxu0 %v4074
        %4496 = vmatpush2.bf16.msra.mxu0 %v4073
        %4497 = vmatprep.mubr.bf16.mxu0 %v3017
        %4498 = vmatmul.mubr.bf16.gmra.mxu0 %v3016
        %v4499 = vpop.f32.mrf.mxu0
        %v4500 = vadd.f32 %v3281, %v4499
        %v4501 = vpop.f32.mrf.mxu0
        %v4502 = vadd.f32 %v3285, %v4501
        %v4503 = vpop.f32.mrf.mxu0
        %v4504 = vpop.f32.mrf.mxu0
        %4505 = vdwg.mxu0
        %4506 = vmatprep.subr.bf16.mxu0 %v4179
        %4507 = vmatpush1.bf16.msra.mxu0 %v4178
        %4508 = vmatprep.subr.bf16.mxu0 %v4172
        %4509 = vmatpush1.bf16.msra.mxu0 %v4171
        %4510 = vmatprep.subr.bf16.mxu0 %v4165
        %4511 = vmatpush1.bf16.msra.mxu0 %v4164
        %4512 = vmatprep.subr.bf16.mxu0 %v4158
        %4513 = vmatpush1.bf16.msra.mxu0 %v4157
        %4514 = vmatprep.subr.bf16.mxu0 %v4151
        %4515 = vmatpush1.bf16.msra.mxu0 %v4150
        %4516 = vmatprep.subr.bf16.mxu0 %v4144
        %4517 = vmatpush1.bf16.msra.mxu0 %v4143
        %4518 = vmatprep.subr.bf16.mxu0 %v4137
        %4519 = vmatpush1.bf16.msra.mxu0 %v4136
        %4520 = vmatprep.subr.bf16.mxu0 %v4130
        %4521 = vmatpush1.bf16.msra.mxu0 %v4129
        %4522 = vmatprep.subr.bf16.mxu0 %v4235
        %4523 = vmatpush2.bf16.msra.mxu0 %v4234
        %4524 = vmatprep.subr.bf16.mxu0 %v4228
        %4525 = vmatpush2.bf16.msra.mxu0 %v4227
        %4526 = vmatprep.subr.bf16.mxu0 %v4221
        %4527 = vmatpush2.bf16.msra.mxu0 %v4220
        %4528 = vmatprep.subr.bf16.mxu0 %v4214
        %4529 = vmatpush2.bf16.msra.mxu0 %v4213
        %4530 = vmatprep.subr.bf16.mxu0 %v4207
        %4531 = vmatpush2.bf16.msra.mxu0 %v4206
        %4532 = vmatprep.subr.bf16.mxu0 %v4200
        %4533 = vmatpush2.bf16.msra.mxu0 %v4199
        %4534 = vmatprep.subr.bf16.mxu0 %v4193
        %4535 = vmatpush2.bf16.msra.mxu0 %v4192
        %4536 = vmatprep.subr.bf16.mxu0 %v4186
        %4537 = vmatpush2.bf16.msra.mxu0 %v4185
        %4538 = vmatprep.mubr.bf16.mxu0 %v3019
        %4539 = vmatmul.mubr.bf16.gmra.mxu0 %v3018
        %v4540 = vpop.f32.mrf.mxu0
        %v4541 = vadd.f32 %v4500, %v4540
        %v4542 = vpop.f32.mrf.mxu0
        %v4543 = vadd.f32 %v4502, %v4542
        %v4544 = vpop.f32.mrf.mxu0
        %v4545 = vpop.f32.mrf.mxu0
        %4546 = vdwg.mxu0
        %4547 = vmatprep.subr.bf16.mxu0 %v4069
        %4548 = vmatpush1.bf16.msra.mxu0 %v4068
        %4549 = vmatprep.subr.bf16.mxu0 %v4062
        %4550 = vmatpush1.bf16.msra.mxu0 %v4061
        %4551 = vmatprep.subr.bf16.mxu0 %v4055
        %4552 = vmatpush1.bf16.msra.mxu0 %v4054
        %4553 = vmatprep.subr.bf16.mxu0 %v4048
        %4554 = vmatpush1.bf16.msra.mxu0 %v4047
        %4555 = vmatprep.subr.bf16.mxu0 %v4041
        %4556 = vmatpush1.bf16.msra.mxu0 %v4040
        %4557 = vmatprep.subr.bf16.mxu0 %v4034
        %4558 = vmatpush1.bf16.msra.mxu0 %v4033
        %4559 = vmatprep.subr.bf16.mxu0 %v4027
        %4560 = vmatpush1.bf16.msra.mxu0 %v4026
        %4561 = vmatprep.subr.bf16.mxu0 %v4020
        %4562 = vmatpush1.bf16.msra.mxu0 %v4019
        %4563 = vmatprep.subr.bf16.mxu0 %v4125
        %4564 = vmatpush2.bf16.msra.mxu0 %v4124
        %4565 = vmatprep.subr.bf16.mxu0 %v4118
        %4566 = vmatpush2.bf16.msra.mxu0 %v4117
        %4567 = vmatprep.subr.bf16.mxu0 %v4111
        %4568 = vmatpush2.bf16.msra.mxu0 %v4110
        %4569 = vmatprep.subr.bf16.mxu0 %v4104
        %4570 = vmatpush2.bf16.msra.mxu0 %v4103
        %4571 = vmatprep.subr.bf16.mxu0 %v4097
        %4572 = vmatpush2.bf16.msra.mxu0 %v4096
        %4573 = vmatprep.subr.bf16.mxu0 %v4090
        %4574 = vmatpush2.bf16.msra.mxu0 %v4089
        %4575 = vmatprep.subr.bf16.mxu0 %v4083
        %4576 = vmatpush2.bf16.msra.mxu0 %v4082
        %4577 = vmatprep.subr.bf16.mxu0 %v4076
        %4578 = vmatpush2.bf16.msra.mxu0 %v4075
        %4579 = vmatprep.mubr.bf16.mxu0 %v3017
        %4580 = vmatmul.mubr.bf16.gmra.mxu0 %v3016
        %v4581 = vpop.f32.mrf.mxu0
        %v4582 = vadd.f32 %v3289, %v4581
        %v4583 = vpop.f32.mrf.mxu0
        %v4584 = vadd.f32 %v3293, %v4583
        %v4585 = vpop.f32.mrf.mxu0
        %v4586 = vpop.f32.mrf.mxu0
        %4587 = vdwg.mxu0
        %4588 = vmatprep.subr.bf16.mxu0 %v4181
        %4589 = vmatpush1.bf16.msra.mxu0 %v4180
        %4590 = vmatprep.subr.bf16.mxu0 %v4174
        %4591 = vmatpush1.bf16.msra.mxu0 %v4173
        %4592 = vmatprep.subr.bf16.mxu0 %v4167
        %4593 = vmatpush1.bf16.msra.mxu0 %v4166
        %4594 = vmatprep.subr.bf16.mxu0 %v4160
        %4595 = vmatpush1.bf16.msra.mxu0 %v4159
        %4596 = vmatprep.subr.bf16.mxu0 %v4153
        %4597 = vmatpush1.bf16.msra.mxu0 %v4152
        %4598 = vmatprep.subr.bf16.mxu0 %v4146
        %4599 = vmatpush1.bf16.msra.mxu0 %v4145
        %4600 = vmatprep.subr.bf16.mxu0 %v4139
        %4601 = vmatpush1.bf16.msra.mxu0 %v4138
        %4602 = vmatprep.subr.bf16.mxu0 %v4132
        %4603 = vmatpush1.bf16.msra.mxu0 %v4131
        %4604 = vmatprep.subr.bf16.mxu0 %v4237
        %4605 = vmatpush2.bf16.msra.mxu0 %v4236
        %4606 = vmatprep.subr.bf16.mxu0 %v4230
        %4607 = vmatpush2.bf16.msra.mxu0 %v4229
        %4608 = vmatprep.subr.bf16.mxu0 %v4223
        %4609 = vmatpush2.bf16.msra.mxu0 %v4222
        %4610 = vmatprep.subr.bf16.mxu0 %v4216
        %4611 = vmatpush2.bf16.msra.mxu0 %v4215
        %4612 = vmatprep.subr.bf16.mxu0 %v4209
        %4613 = vmatpush2.bf16.msra.mxu0 %v4208
        %4614 = vmatprep.subr.bf16.mxu0 %v4202
        %4615 = vmatpush2.bf16.msra.mxu0 %v4201
        %4616 = vmatprep.subr.bf16.mxu0 %v4195
        %4617 = vmatpush2.bf16.msra.mxu0 %v4194
        %4618 = vmatprep.subr.bf16.mxu0 %v4188
        %4619 = vmatpush2.bf16.msra.mxu0 %v4187
        %4620 = vmatprep.mubr.bf16.mxu0 %v3019
        %4621 = vmatmul.mubr.bf16.gmra.mxu0 %v3018
        %v4622 = vpop.f32.mrf.mxu0
        %v4623 = vadd.f32 %v4582, %v4622
        %v4624 = vpop.f32.mrf.mxu0
        %v4625 = vadd.f32 %v4584, %v4624
        %v4626 = vpop.f32.mrf.mxu0
        %v4627 = vpop.f32.mrf.mxu0
        %4628 = vdwg.mxu0
        %4629 = vmatprep.subr.bf16.mxu0 %v4071
        %4630 = vmatpush1.bf16.msra.mxu0 %v4070
        %4631 = vmatprep.subr.bf16.mxu0 %v4064
        %4632 = vmatpush1.bf16.msra.mxu0 %v4063
        %4633 = vmatprep.subr.bf16.mxu0 %v4057
        %4634 = vmatpush1.bf16.msra.mxu0 %v4056
        %4635 = vmatprep.subr.bf16.mxu0 %v4050
        %4636 = vmatpush1.bf16.msra.mxu0 %v4049
        %4637 = vmatprep.subr.bf16.mxu0 %v4043
        %4638 = vmatpush1.bf16.msra.mxu0 %v4042
        %4639 = vmatprep.subr.bf16.mxu0 %v4036
        %4640 = vmatpush1.bf16.msra.mxu0 %v4035
        %4641 = vmatprep.subr.bf16.mxu0 %v4029
        %4642 = vmatpush1.bf16.msra.mxu0 %v4028
        %4643 = vmatprep.subr.bf16.mxu0 %v4022
        %4644 = vmatpush1.bf16.msra.mxu0 %v4021
        %4645 = vmatprep.subr.bf16.mxu0 %v4127
        %4646 = vmatpush2.bf16.msra.mxu0 %v4126
        %4647 = vmatprep.subr.bf16.mxu0 %v4120
        %4648 = vmatpush2.bf16.msra.mxu0 %v4119
        %4649 = vmatprep.subr.bf16.mxu0 %v4113
        %4650 = vmatpush2.bf16.msra.mxu0 %v4112
        %4651 = vmatprep.subr.bf16.mxu0 %v4106
        %4652 = vmatpush2.bf16.msra.mxu0 %v4105
        %4653 = vmatprep.subr.bf16.mxu0 %v4099
        %4654 = vmatpush2.bf16.msra.mxu0 %v4098
        %4655 = vmatprep.subr.bf16.mxu0 %v4092
        %4656 = vmatpush2.bf16.msra.mxu0 %v4091
        %4657 = vmatprep.subr.bf16.mxu0 %v4085
        %4658 = vmatpush2.bf16.msra.mxu0 %v4084
        %4659 = vmatprep.subr.bf16.mxu0 %v4078
        %4660 = vmatpush2.bf16.msra.mxu0 %v4077
        %4661 = vmatprep.mubr.bf16.mxu0 %v3017
        %4662 = vmatmul.mubr.bf16.gmra.mxu0 %v3016
        %v4663 = vpop.f32.mrf.mxu0
        %v4664 = vadd.f32 %v3297, %v4663
        %v4665 = vpop.f32.mrf.mxu0
        %v4666 = vadd.f32 %v3301, %v4665
        %v4667 = vpop.f32.mrf.mxu0
        %v4668 = vpop.f32.mrf.mxu0
        %4669 = vdwg.mxu0
        %4670 = vmatprep.subr.bf16.mxu0 %v4183
        %4671 = vmatpush1.bf16.msra.mxu0 %v4182
        %4672 = vmatprep.subr.bf16.mxu0 %v4176
        %4673 = vmatpush1.bf16.msra.mxu0 %v4175
        %4674 = vmatprep.subr.bf16.mxu0 %v4169
        %4675 = vmatpush1.bf16.msra.mxu0 %v4168
        %4676 = vmatprep.subr.bf16.mxu0 %v4162
        %4677 = vmatpush1.bf16.msra.mxu0 %v4161
        %4678 = vmatprep.subr.bf16.mxu0 %v4155
        %4679 = vmatpush1.bf16.msra.mxu0 %v4154
        %4680 = vmatprep.subr.bf16.mxu0 %v4148
        %4681 = vmatpush1.bf16.msra.mxu0 %v4147
        %4682 = vmatprep.subr.bf16.mxu0 %v4141
        %4683 = vmatpush1.bf16.msra.mxu0 %v4140
        %4684 = vmatprep.subr.bf16.mxu0 %v4134
        %4685 = vmatpush1.bf16.msra.mxu0 %v4133
        %4686 = vmatprep.subr.bf16.mxu0 %v4239
        %4687 = vmatpush2.bf16.msra.mxu0 %v4238
        %4688 = vmatprep.subr.bf16.mxu0 %v4232
        %4689 = vmatpush2.bf16.msra.mxu0 %v4231
        %4690 = vmatprep.subr.bf16.mxu0 %v4225
        %4691 = vmatpush2.bf16.msra.mxu0 %v4224
        %4692 = vmatprep.subr.bf16.mxu0 %v4218
        %4693 = vmatpush2.bf16.msra.mxu0 %v4217
        %4694 = vmatprep.subr.bf16.mxu0 %v4211
        %4695 = vmatpush2.bf16.msra.mxu0 %v4210
        %4696 = vmatprep.subr.bf16.mxu0 %v4204
        %4697 = vmatpush2.bf16.msra.mxu0 %v4203
        %4698 = vmatprep.subr.bf16.mxu0 %v4197
        %4699 = vmatpush2.bf16.msra.mxu0 %v4196
        %4700 = vmatprep.subr.bf16.mxu0 %v4190
        %4701 = vmatpush2.bf16.msra.mxu0 %v4189
        %4702 = vmatprep.mubr.bf16.mxu0 %v3019
        %4703 = vmatmul.mubr.bf16.gmra.mxu0 %v3018
        %v4704 = vpop.f32.mrf.mxu0
        %v4705 = vadd.f32 %v4664, %v4704
        %v4706 = vpop.f32.mrf.mxu0
        %v4707 = vadd.f32 %v4666, %v4706
        %v4708 = vpop.f32.mrf.mxu0
        %v4709 = vpop.f32.mrf.mxu0
        %4710 = vdwg.mxu0
        %4711 = vmatprep.subr.bf16.mxu0 0
        %4712 = vmatpush1.bf16.msra.mxu0 %v4072
        %4713 = vmatprep.subr.bf16.mxu0 0
        %4714 = vmatpush1.bf16.msra.mxu0 %v4065
        %4715 = vmatprep.subr.bf16.mxu0 0
        %4716 = vmatpush1.bf16.msra.mxu0 %v4058
        %4717 = vmatprep.subr.bf16.mxu0 0
        %4718 = vmatpush1.bf16.msra.mxu0 %v4051
        %4719 = vmatprep.subr.bf16.mxu0 0
        %4720 = vmatpush1.bf16.msra.mxu0 %v4044
        %4721 = vmatprep.subr.bf16.mxu0 0
        %4722 = vmatpush1.bf16.msra.mxu0 %v4037
        %4723 = vmatprep.subr.bf16.mxu0 0
        %4724 = vmatpush1.bf16.msra.mxu0 %v4030
        %4725 = vmatprep.subr.bf16.mxu0 0
        %4726 = vmatpush1.bf16.msra.mxu0 %v4023
        %4727 = vmatprep.subr.bf16.mxu0 0
        %4728 = vmatpush2.bf16.msra.mxu0 %v4128
        %4729 = vmatprep.subr.bf16.mxu0 0
        %4730 = vmatpush2.bf16.msra.mxu0 %v4121
        %4731 = vmatprep.subr.bf16.mxu0 0
        %4732 = vmatpush2.bf16.msra.mxu0 %v4114
        %4733 = vmatprep.subr.bf16.mxu0 0
        %4734 = vmatpush2.bf16.msra.mxu0 %v4107
        %4735 = vmatprep.subr.bf16.mxu0 0
        %4736 = vmatpush2.bf16.msra.mxu0 %v4100
        %4737 = vmatprep.subr.bf16.mxu0 0
        %4738 = vmatpush2.bf16.msra.mxu0 %v4093
        %4739 = vmatprep.subr.bf16.mxu0 0
        %4740 = vmatpush2.bf16.msra.mxu0 %v4086
        %4741 = vmatprep.subr.bf16.mxu0 0
        %4742 = vmatpush2.bf16.msra.mxu0 %v4079
        %4743 = vmatprep.mubr.bf16.mxu0 %v3017
        %4744 = vmatmul.mubr.bf16.gmra.mxu0 %v3016
        %v4745 = vpop.f32.mrf.mxu0
        %v4746 = vadd.f32 %v3305, %v4745
        %v4747 = vpop.f32.mrf.mxu0
        %v4748 = vpop.f32.mrf.mxu0
        %v4749 = vpop.f32.mrf.mxu0
        %4750 = vdwg.mxu0
        %4751 = vmatprep.subr.bf16.mxu0 0
        %4752 = vmatpush1.bf16.msra.mxu0 %v4184
        %4753 = vmatprep.subr.bf16.mxu0 0
        %4754 = vmatpush1.bf16.msra.mxu0 %v4177
        %4755 = vmatprep.subr.bf16.mxu0 0
        %4756 = vmatpush1.bf16.msra.mxu0 %v4170
        %4757 = vmatprep.subr.bf16.mxu0 0
        %4758 = vmatpush1.bf16.msra.mxu0 %v4163
        %4759 = vmatprep.subr.bf16.mxu0 0
        %4760 = vmatpush1.bf16.msra.mxu0 %v4156
        %4761 = vmatprep.subr.bf16.mxu0 0
        %4762 = vmatpush1.bf16.msra.mxu0 %v4149
        %4763 = vmatprep.subr.bf16.mxu0 0
        %4764 = vmatpush1.bf16.msra.mxu0 %v4142
        %4765 = vmatprep.subr.bf16.mxu0 0
        %4766 = vmatpush1.bf16.msra.mxu0 %v4135
        %4767 = vmatprep.subr.bf16.mxu0 0
        %4768 = vmatpush2.bf16.msra.mxu0 %v4240
        %4769 = vmatprep.subr.bf16.mxu0 0
        %4770 = vmatpush2.bf16.msra.mxu0 %v4233
        %4771 = vmatprep.subr.bf16.mxu0 0
        %4772 = vmatpush2.bf16.msra.mxu0 %v4226
        %4773 = vmatprep.subr.bf16.mxu0 0
        %4774 = vmatpush2.bf16.msra.mxu0 %v4219
        %4775 = vmatprep.subr.bf16.mxu0 0
        %4776 = vmatpush2.bf16.msra.mxu0 %v4212
        %4777 = vmatprep.subr.bf16.mxu0 0
        %4778 = vmatpush2.bf16.msra.mxu0 %v4205
        %4779 = vmatprep.subr.bf16.mxu0 0
        %4780 = vmatpush2.bf16.msra.mxu0 %v4198
        %4781 = vmatprep.subr.bf16.mxu0 0
        %4782 = vmatpush2.bf16.msra.mxu0 %v4191
        %4783 = vmatprep.mubr.bf16.mxu0 %v3019
        %4784 = vmatmul.mubr.bf16.gmra.mxu0 %v3018
        %v4785 = vpop.f32.mrf.mxu0
        %v4786 = vadd.f32 %v4746, %v4785
        %v4787 = vpop.f32.mrf.mxu0
        %v4788 = vpop.f32.mrf.mxu0
        %v4789 = vpop.f32.mrf.mxu0
        %4790 = vdwg.mxu0
        %v4791 = vsub.f32 0.0, %v4541
        %v4792 = vsub.f32 0.0, %v4543
        %v4793 = vsub.f32 0.0, %v4623
        %v4794 = vsub.f32 0.0, %v4625
        %v4795 = vsub.f32 0.0, %v4705
        %v4796 = vsub.f32 0.0, %v4707
        %v4797 = vsub.f32 0.0, %v4786
        %v4798 = vmul.f32 %v4791, 1.442695
        %v4799 = vpow.pop %v4798
        %v4800 = vmul.f32 %v4792, 1.442695
        %v4801 = vpow.pop %v4800
        %v4802 = vmul.f32 %v4793, 1.442695
        %v4803 = vpow.pop %v4802
        %v4804 = vmul.f32 %v4794, 1.442695
        %v4805 = vpow.pop %v4804
        %v4806 = vmul.f32 %v4795, 1.442695
        %v4807 = vpow.pop %v4806
        %v4808 = vmul.f32 %v4796, 1.442695
        %v4809 = vpow.pop %v4808
        %v4810 = vmul.f32 %v4797, 1.442695
        %v4811 = vpow.pop %v4810
        %v4812 = vadd.f32 %v4799, 1.0
        %v4813 = vadd.f32 %v4801, 1.0
        %v4814 = vadd.f32 %v4803, 1.0
        %v4815 = vadd.f32 %v4805, 1.0
        %v4816 = vadd.f32 %v4807, 1.0
        %v4817 = vadd.f32 %v4809, 1.0
        %v4818 = vadd.f32 %v4811, 1.0
        %v4819 = vrcp.pop %v4812
        %v4820 = vrcp.pop %v4813
        %v4821 = vrcp.pop %v4814
        %v4822 = vrcp.pop %v4815
        %v4823 = vrcp.pop %v4816
        %v4824 = vrcp.pop %v4817
        %v4825 = vrcp.pop %v4818
        %vm4826 = vcmask 15360
        %4827 = vst.msk [vmem:[%s573] sm:$0xff] %vm4826, %v2629
        %4829 = vrot.lane.b32.xlu0 %v2629, 126
        %v4830 = vpop.permute.xlu0 %4829
        %4832 = vst.msk [vmem:[%s577] sm:$0xff] %vm4826, %v4830
        %4833 = vst [vmem:[%s556] sm:$0xff] %v4819
        %4834 = vst [vmem:[%s556 + $0x8] sm:$0xff] %v4820
        %4835 = vst [vmem:[%s556 + $0x10] sm:$0xff] %v4821
        %4836 = vst [vmem:[%s556 + $0x18] sm:$0xff] %v4822
        %4837 = vst [vmem:[%s556 + $0x20] sm:$0xff] %v4823
        %4838 = vst [vmem:[%s556 + $0x28] sm:$0xff] %v4824
        %4839 = vst [vmem:[%s556 + $0x30] sm:$0xff] %v4825
        %p4840 = scmp.lt.s32.totalorder %s32, 1
        %s4841 = scalar_select %p4840, %s32, 1
        %s4842 = smul.addr %s4841, 8
        %s4843 = scalar_lea.vmem %s13, %s4842
        %p4844 = scmp.lt.s32.totalorder %s32, 1
        %s4845 = scalar_select %p4844, %s32, 1
        %s4846 = smul.addr %s4845, 8
        %s4847 = scalar_lea.vmem %s14, %s4846
        %s4848 = sand.u32 %s380, 1
        %s4849 = scalar_lea.sflag [#allocation4], %s4848
        %s4850 = sand.u32 %s380, 1
        %s4851 = smul.addr %s4850, 56
        %s4852 = scalar_lea.vmem [#allocation7], %s4851
        // Predicated region
        $region81: #{tpu_custom_call.1} parent=71 // pred_check
          %p4853 = pneg %p338
        $region82: #{tpu_custom_call.1} parent=71 // pred_check_branch
          %4855 = sbr.rel (%p4853) target = $region84
        $region83: #{tpu_custom_call.1} parent=71 // pred_region
          _
        $region84: #{tpu_custom_call.1} parent=71 // pred_fallthru
          _
        // Predicated region
        $region85: #{tpu_custom_call.1} parent=71 // pred_check
          %p4856 = pneg %p364
        $region86: #{tpu_custom_call.1} parent=71 // pred_check_branch
          %4858 = sbr.rel (%p4856) target = $region88
        $region87: #{tpu_custom_call.1} parent=71 // pred_region
          _
        $region88: #{tpu_custom_call.1} parent=71 // pred_fallthru
          _
        // Predicated region
        $region89: #{tpu_custom_call.1} parent=71 // pred_check
          %p4859 = pneg %p390
        $region90: #{tpu_custom_call.1} parent=71 // pred_check_branch
          %4861 = sbr.rel (%p4859) target = $region92
        $region91: #{tpu_custom_call.1} parent=71 // pred_region
          %s4863 = ssub.s32 896, 896
          %4864 = vsyncadd %s4849, %s4863
          %s4865 = smul.addr %s32, 7
          %s4866 = smul.addr %s4865, 128
          %s4867 = scalar_lea.hbm %s15, %s4866
          %s4869 = sshll.u32 %s4852, 4
          %s4870 = int_to_ptr.vmem [resolvable:$true] %s4869
          %4872 = dma.vmem_to_hbm [thread:$0]  %s4870, 896, %s4867, %s4849
        $region92: #{tpu_custom_call.1} parent=71 // pred_fallthru
          _
      $region72: #{tpu_custom_call.1} parent=5 // pred_fallthru
        _
      %p4873 = scmp.le.s32.totalorder 2, %s27
      // Predicated region
      $region93: #{tpu_custom_call.1} parent=5 // pred_check
        %p4874 = pneg %p4873
      $region94: #{tpu_custom_call.1} parent=5 // pred_check_branch
        %4876 = sbr.rel (%p4874) target = $region96
      $region95: #{tpu_custom_call.1} parent=5 // pred_region
        %s4877 = ssub.s32 %s27, 2
        // Predicated region
        $region97: #{tpu_custom_call.1} parent=95 // pred_check
          %p4878 = pneg %p344
        $region98: #{tpu_custom_call.1} parent=95 // pred_check_branch
          %4880 = sbr.rel (%p4878) target = $region100
        $region99: #{tpu_custom_call.1} parent=95 // pred_region
          %p4881 = scmp.lt.s32.totalorder %s33, 1
          %s4882 = scalar_select %p4881, %s33, 1
          %s4883 = smul.addr %s4882, 8
          %s4884 = scalar_lea.vmem %s13, %s4883
        $region100: #{tpu_custom_call.1} parent=95 // pred_fallthru
          _
        // Predicated region
        $region101: #{tpu_custom_call.1} parent=95 // pred_check
          %p4885 = pneg %p370
        $region102: #{tpu_custom_call.1} parent=95 // pred_check_branch
          %4887 = sbr.rel (%p4885) target = $region104
        $region103: #{tpu_custom_call.1} parent=95 // pred_region
          %p4888 = scmp.lt.s32.totalorder %s33, 1
          %s4889 = scalar_select %p4888, %s33, 1
          %s4890 = smul.addr %s4889, 8
          %s4891 = scalar_lea.vmem %s14, %s4890
        $region104: #{tpu_custom_call.1} parent=95 // pred_fallthru
          _
        // Predicated region
        $region105: #{tpu_custom_call.1} parent=95 // pred_check
          %p4892 = pneg %p396
        $region106: #{tpu_custom_call.1} parent=95 // pred_check_branch
          %4894 = sbr.rel (%p4892) target = $region108
        $region107: #{tpu_custom_call.1} parent=95 // pred_region
          %s4895 = sand.u32 %s381, 1
          %s4896 = scalar_lea.sflag [#allocation4], %s4895
          %s4897 = sand.u32 %s381, 1
          %s4898 = smul.addr %s4897, 56
          %s4899 = scalar_lea.vmem [#allocation7], %s4898
          %4900 = dma.done %s4896, 896
        $region108: #{tpu_custom_call.1} parent=95 // pred_fallthru
          _
      $region96: #{tpu_custom_call.1} parent=5 // pred_fallthru
        _
    $region6: #{tpu_custom_call.1} parent=1 // loop_footer
      %s31 = sadd.s32 1, %s27
    $region7: #{tpu_custom_call.1} parent=1 // loop_footer_branch
      %26 = sbr.rel target = $region3
    $region8: #{tpu_custom_call.1} parent=1 // loop_exit
      _
    %4901 = vsyncpa [#allocation3], 1
    %s4902 = scalar_lea.sflag [#allocation3], 1
    %4903 = vsyncpa %s4902, 1
    %4904 = vsyncpa [#allocation6], 1
    %4905 = vsyncpa [#allocation4], 1
    %s4906 = scalar_lea.sflag [#allocation4], 1
    %4907 = vsyncpa %s4906, 1

</llo_original>
